<compile_context>
chip_gen: v5e
topology: v5e:2x2
jax: 0.10.0
libtpu: 0.0.40
codegen_flags: <defaults>
</compile_context>

<pallas_src>
import functools

import jax
import jax.numpy as jnp
from jax.experimental import pallas as pl
from jax.experimental.pallas import tpu as pltpu

BN_EPS = 1e-5
LRELU_SLOPE = 0.1
LANE = 128


def _round_up(x, m):
    return ((x + m - 1) // m) * m


def _pick_tile(dim, candidates):
    for c in candidates:
        if dim % c == 0:
            return c
    return None


@functools.lru_cache(maxsize=1)
def _vmem_limit_bytes():
    """v5e/v6e have 128 MiB physical VMEM; stay conservative (48 MiB) on v7x/unknown."""
    try:
        kind = jax.devices()[0].device_kind.lower()
    except Exception:
        kind = ""
    if "v5" in kind or "v6" in kind:
        return 100 * 1024 * 1024
    return 48 * 1024 * 1024


# --------------------------- Pallas kernels ----------------------------------
def _mm_bias_lrelu_kernel(x_ref, w_ref, b_ref, o_ref):
    """One (tm, tn) tile of leaky_relu(x @ w + bias); full K resident (no k axis)."""
    y = jnp.dot(x_ref[...], w_ref[...], preferred_element_type=jnp.float32)
    y = y + b_ref[...]
    o_ref[...] = jnp.where(y >= 0.0, y, LRELU_SLOPE * y).astype(o_ref.dtype)


def _conv3x3_bias_lrelu_kernel(x_ref, w_ref, b_ref, o_ref, xim_ref, acc_ref,
                               *, H, W, W8):
    """3x3 / stride 1 / SAME conv + bias + leaky_relu for one (batch, cout-tile).

    x_ref:   (H+2, W8+2, Cin)      spatially padded input slab (bf16)
    w_ref:   (3, 3*Cin, tn)        folded weights, lanes ordered [dw, c] (bf16)
    b_ref:   (1, tn)               folded BN bias (f32)
    o_ref:   (H, W, tn)            output tile (bf16)
    xim_ref: (H+2, W8, 3*Cin)      width-only im2col scratch (bf16)
    acc_ref: (H*W8, tn)            f32 accumulator scratch
    """
    cin = x_ref.shape[-1]
    tn = o_ref.shape[-1]

    # Width-only im2col: 3 sublane-shifted copies into lane-concatenated slots.
    # These are the only relayouts in the kernel (vs 9 unaligned slice+reshape
    # copies before); dh slicing below is on an untiled leading axis -> free.
    for dw in range(3):
        xim_ref[:, :, dw * cin:(dw + 1) * cin] = x_ref[:, dw:dw + W8, :]

    # Init accumulator with the bias, then accumulate 3 matmuls (K = 3*Cin)
    # straight through the VMEM ref.  H*W8 is a multiple of 8 so the reshapes
    # never cross sublane tiles.
    acc_ref[...] = jnp.broadcast_to(b_ref[...], acc_ref.shape)
    for dh in range(3):
        acc_ref[...] += jnp.dot(
            xim_ref[dh:dh + H].reshape(H * W8, 3 * cin),
            w_ref[dh],
            preferred_element_type=jnp.float32)

    y = acc_ref[...].reshape(H, W8, tn)[:, :W, :]
    o_ref[...] = jnp.where(y >= 0.0, y, LRELU_SLOPE * y).astype(o_ref.dtype)


# --------------------------- kernel wrappers ----------------------------------
def matmul_bias_lrelu(x2d, w2d, bias, out_dtype=jnp.bfloat16):
    """Y = leaky_relu(x2d @ w2d + bias); x2d/w2d bf16, bias f32."""
    M, K = x2d.shape
    Kw, N = w2d.shape
    assert K == Kw and bias.shape == (1, N)

    tm = _pick_tile(M, (1024, 512, 256, 128))
    Mp = M
    if tm is None:                       # ragged M fallback
        Mp = _round_up(M, 256)
        tm = _pick_tile(Mp, (1024, 512, 256))
        x2d = jnp.pad(x2d, ((0, Mp - M), (0, 0)))
    tn = _pick_tile(N, (512, 256, 128)) or N

    # v7x has 2 TensorCores sharing the grid: make sure there are >= 2 steps.
    if (Mp // tm) * (N // tn) < 2:
        if tn % 256 == 0:
            tn //= 2
        elif tm >= 512 and Mp % (tm // 2) == 0:
            tm //= 2

    out = pl.pallas_call(
        _mm_bias_lrelu_kernel,
        out_shape=jax.ShapeDtypeStruct((Mp, N), out_dtype),
        # cout tiles outermost, M tiles innermost: the weight block index is
        # constant across consecutive steps -> Pallas skips re-fetching it.
        grid=(N // tn, Mp // tm),
        in_specs=[
            pl.BlockSpec((tm, K), lambda j, i: (i, 0)),
            pl.BlockSpec((K, tn), lambda j, i: (0, j)),
            pl.BlockSpec((1, tn), lambda j, i: (0, j)),
        ],
        out_specs=pl.BlockSpec((tm, tn), lambda j, i: (i, j)),
        compiler_params=pltpu.CompilerParams(
            dimension_semantics=("parallel", "parallel"),
            vmem_limit_bytes=_vmem_limit_bytes(),
        ),
    )(x2d, w2d, bias)
    return out[:M] if Mp != M else out


def _conv_step_vmem_bytes(hp, wp8, h, w, w8, cin_p, tn):
    x_in = 2 * hp * wp8 * cin_p * 2      # double-buffered bf16 input slab
    wgt = 2 * 3 * 3 * cin_p * tn * 2     # double-buffered bf16 weights
    bias = 2 * tn * 4
    xim = hp * w8 * 3 * cin_p * 2        # width-im2col scratch (bf16)
    acc = h * w8 * tn * 4                # f32 accumulator scratch
    out = 2 * h * w * tn * 2             # double-buffered bf16 output
    return x_in + wgt + bias + xim + acc + out


def conv3x3_bias_lrelu(x_nhwc, w3, bias, out_dtype=jnp.bfloat16):
    """3x3/s1/SAME conv + bias + leaky_relu. x bf16 NHWC, w3 (3, 3*Cin, Cout) bf16."""
    n, h, wd, cin_p = x_nhwc.shape
    three, k3cin, cout_p = w3.shape
    assert three == 3 and k3cin == 3 * cin_p and bias.shape == (1, cout_p)

    w8 = _round_up(wd, 8)
    hp, wp8 = h + 2, w8 + 2
    # One cheap spatial pad (no HBM im2col); right pad also rounds width to a
    # multiple of 8 so in-kernel reshapes stay sublane-tile aligned.
    xp = jnp.pad(x_nhwc, ((0, 0), (1, 1), (1, 1 + w8 - wd), (0, 0)))

    vmem_limit = _vmem_limit_bytes()
    budget = vmem_limit - 8 * 1024 * 1024

    cand = []
    for c in (cout_p, 512, 256, 128):
        if c <= cout_p and cout_p % c == 0 and c not in cand:
            cand.append(c)
    tn = cand[-1]
    for c in cand:
        if _conv_step_vmem_bytes(hp, wp8, h, wd, w8, cin_p, c) <= budget:
            tn = c
            break
    # Guarantee >= 2 grid steps where possible (keep both v7x TensorCores busy).
    if n * (cout_p // tn) < 2:
        for c in cand:
            if c <= cout_p // 2:
                tn = c
                break

    kernel = functools.partial(_conv3x3_bias_lrelu_kernel, H=h, W=wd, W8=w8)
    return pl.pallas_call(
        kernel,
        out_shape=jax.ShapeDtypeStruct((n, h, wd, cout_p), out_dtype),
        # cout tiles outermost, batch innermost: weight tile stays resident
        # across batch images instead of being re-streamed once per image.
        grid=(cout_p // tn, n),
        in_specs=[
            pl.BlockSpec((None, hp, wp8, cin_p), lambda j, b: (b, 0, 0, 0)),
            pl.BlockSpec((3, 3 * cin_p, tn), lambda j, b: (0, 0, j)),
            pl.BlockSpec((1, tn), lambda j, b: (0, j)),
        ],
        out_specs=pl.BlockSpec((None, h, wd, tn), lambda j, b: (b, 0, 0, j)),
        scratch_shapes=[
            pltpu.VMEM((hp, w8, 3 * cin_p), jnp.bfloat16),
            pltpu.VMEM((h * w8, tn), jnp.float32),
        ],
        compiler_params=pltpu.CompilerParams(
            dimension_semantics=("parallel", "parallel"),
            vmem_limit_bytes=vmem_limit,
        ),
    )(xp, w3, bias)


# ------------------------------- JAX glue -------------------------------------
def _fold_bn(p):
    scale = p["gamma"] / jnp.sqrt(p["var"] + BN_EPS)
    bias = p["beta"] - p["mean"] * scale
    return scale, bias


def prepare_params(params):
    """Fold BN into weights, pad channels to multiples of 128, cast to bf16.

    1x1 weights stored as (cin_p, cout_p); 3x3 weights stored as
    (3, 3*cin_p, cout_p) with lanes ordered [dw, c] to match the in-kernel
    width-im2col layout.
    """
    prepared = []
    for p in params:
        k = p["ksize"]
        w = p["w"]                                   # (k, k, cin, cout) f32
        cin, cout = w.shape[2], w.shape[3]
        scale, bias = _fold_bn(p)
        wf = w * scale                               # fold BN scale into weight columns
        cin_p, cout_p = _round_up(cin, LANE), _round_up(cout, LANE)
        wf = jnp.pad(wf, ((0, 0), (0, 0), (0, cin_p - cin), (0, cout_p - cout)))
        bias_p = jnp.pad(bias, (0, cout_p - cout))
        if k == 1:
            wk = wf.reshape(cin_p, cout_p)
        else:
            wk = wf.reshape(k, k * cin_p, cout_p)    # (3, 3*cin_p, cout_p)
        prepared.append(dict(
            ksize=k,
            w=wk.astype(jnp.bfloat16),
            b=bias_p.reshape(1, cout_p).astype(jnp.float32),
            cin=cin, cout=cout, cin_p=cin_p, cout_p=cout_p,
        ))
    return prepared


def conv_bn_lrelu_layer(x_nhwc, p):
    """One ConvolutionalLayer: Conv2d(bias=False) + BatchNorm2d(eval) + LeakyReLU(0.1)."""
    n, h, w, cin_p = x_nhwc.shape
    cout_p = p["cout_p"]
    if p["ksize"] == 1:
        y2d = matmul_bias_lrelu(x_nhwc.reshape(n * h * w, cin_p), p["w"], p["b"])
        return y2d.reshape(n, h, w, cout_p)
    return conv3x3_bias_lrelu(x_nhwc, p["w"], p["b"])


def convolutional_set_forward(x_nchw, prepared):
    """Matches ConvolutionalSet.forward (eval mode). NCHW in / NCHW out, f32."""
    x = jnp.transpose(x_nchw, (0, 2, 3, 1))                      # NCHW -> NHWC
    cin0, cin0_p = prepared[0]["cin"], prepared[0]["cin_p"]
    assert x.shape[-1] == cin0
    x = jnp.pad(x, ((0, 0), (0, 0), (0, 0), (0, cin0_p - cin0)))
    x = x.astype(jnp.bfloat16)                                   # bf16 intermediates
    for p in prepared:
        x = conv_bn_lrelu_layer(x, p)
    x = x[..., :prepared[-1]["cout"]].astype(jnp.float32)
    return jnp.transpose(x, (0, 3, 1, 2))                        # NHWC -> NCHW


# Pure-JAX reference (same bf16/f32 math, no Pallas) for a correctness check.
def _reference_forward(x_nchw, params):
    x = jnp.transpose(x_nchw, (0, 2, 3, 1)).astype(jnp.bfloat16)
    for p in params:
        scale, bias = _fold_bn(p)
        w = (p["w"] * scale).astype(jnp.bfloat16)                # (k, k, cin, cout)
        n, h, wd, cin = x.shape
        cout = w.shape[-1]
        if p["ksize"] == 1:
            y = jnp.dot(x.reshape(-1, cin), w.reshape(cin, cout),
                        preferred_element_type=jnp.float32).reshape(n, h, wd, cout)
        else:
            xp = jnp.pad(x, ((0, 0), (1, 1), (1, 1), (0, 0)))
            y = jnp.zeros((n, h, wd, cout), jnp.float32)
            for dh in range(3):
                for dw in range(3):
                    xs = xp[:, dh:dh + h, dw:dw + wd, :].reshape(-1, cin)
                    y = y + jnp.dot(xs, w[dh, dw],
                                    preferred_element_type=jnp.float32
                                    ).reshape(n, h, wd, cout)
        y = y + bias
        y = jnp.where(y >= 0.0, y, LRELU_SLOPE * y)
        x = y.astype(jnp.bfloat16)
    return jnp.transpose(x, (0, 3, 1, 2)).astype(jnp.float32)


# --------------------------- parameter init -----------------------------------
def init_convolutional_set_params(key, in_channels, out_channels):
    # (cin, cout, ksize) for the 5 ConvolutionalLayers in ConvolutionalSet.
    specs = [
        (in_channels, out_channels, 1),
        (out_channels, in_channels, 3),
        (in_channels, out_channels, 1),
        (out_channels, in_channels, 3),
        (in_channels, out_channels, 1),
    ]
    params = []
    for cin, cout, k in specs:
        key, kw, kg, kb, km, kv = jax.random.split(key, 6)
        fan_in = k * k * cin
        params.append(dict(
            ksize=k,
            w=jax.random.normal(kw, (k, k, cin, cout), jnp.float32) / jnp.sqrt(fan_in),
            gamma=1.0 + 0.1 * jax.random.normal(kg, (cout,), jnp.float32),
            beta=0.1 * jax.random.normal(kb, (cout,), jnp.float32),
            mean=0.1 * jax.random.normal(km, (cout,), jnp.float32),
            var=1.0 + 0.1 * jnp.abs(jax.random.normal(kv, (cout,), jnp.float32)),
        ))
    return params


# ----------------------------------- main --------------------------------------
if __name__ == "__main__":
    IN_CH, OUT_CH = 4, 8
    N, H, W = 2, 16, 16

    key = jax.random.PRNGKey(0)
    key, kx, kp = jax.random.split(key, 3)
    x = jax.random.normal(kx, (N, IN_CH, H, W), jnp.float32)   # NCHW like PyTorch
    params = init_convolutional_set_params(kp, IN_CH, OUT_CH)
    prepared = prepare_params(params)

    fwd = jax.jit(functools.partial(convolutional_set_forward, prepared=prepared))
    out = jax.block_until_ready(fwd(x))
    assert out.shape == (N, OUT_CH, H, W), out.shape

    ref = jax.block_until_ready(_reference_forward(x, params))
    max_err = float(jnp.max(jnp.abs(out - ref)))
    assert jnp.allclose(out, ref, atol=2e-2, rtol=2e-2), max_err

    print("KERNEL_OK")
</pallas_src>

<mosaic_0001>
module attributes {stable_mosaic.version = 11 : i64} {
  func.func @_mm_bias_lrelu_kernel(%arg0: i32, %arg1: i32, %arg2: memref<256x128xbf16, #tpu.memory_space<vmem>>, %arg3: memref<128x128xbf16, #tpu.memory_space<vmem>>, %arg4: memref<1x128xf32, #tpu.memory_space<vmem>>, %arg5: memref<256x128xbf16, #tpu.memory_space<vmem>>) attributes {dimension_semantics = [#tpu.dimension_semantics<parallel>, #tpu.dimension_semantics<parallel>], iteration_bounds = array<i64: 1, 2>, scalar_prefetch = 0 : i64, scratch_operands = 0 : i64, tpu.core_type = #tpu.core_type<tc>, window_params = [{transform_indices = @transform_0, window_bounds = array<i64: 256, 128>}, {transform_indices = @transform_1, window_bounds = array<i64: 128, 128>}, {transform_indices = @transform_2, window_bounds = array<i64: 1, 128>}, {transform_indices = @transform_3, window_bounds = array<i64: 256, 128>}]} {
    %c0 = arith.constant 0 : index
    %c0_0 = arith.constant 0 : index
    %0 = vector.load %arg2[%c0, %c0_0] : memref<256x128xbf16, #tpu.memory_space<vmem>>, vector<256x128xbf16>
    %c0_1 = arith.constant 0 : index
    %c0_2 = arith.constant 0 : index
    %1 = vector.load %arg3[%c0_1, %c0_2] : memref<128x128xbf16, #tpu.memory_space<vmem>>, vector<128x128xbf16>
    %cst = arith.constant dense<0.000000e+00> : vector<256x128xf32>
    %2 = tpu.matmul %0, %1, %cst {dimension_numbers = #tpu.dot_dimension_numbers<[1], [0], [0], [1], [0, 0, 1, 1], [], []>} : vector<256x128xbf16>, vector<128x128xbf16>, vector<256x128xf32> -> vector<256x128xf32>
    %c0_3 = arith.constant 0 : index
    %c0_4 = arith.constant 0 : index
    %3 = vector.load %arg4[%c0_3, %c0_4] : memref<1x128xf32, #tpu.memory_space<vmem>>, vector<1x128xf32>
    %4 = vector.broadcast %3 : vector<1x128xf32> to vector<256x128xf32>
    %5 = arith.addf %2, %4 : vector<256x128xf32>
    %cst_5 = arith.constant 0.000000e+00 : f32
    %6 = vector.broadcast %cst_5 : f32 to vector<256x128xf32>
    %7 = arith.cmpf oge, %5, %6 : vector<256x128xf32>
    %cst_6 = arith.constant 1.000000e-01 : f32
    %8 = vector.broadcast %cst_6 : f32 to vector<256x128xf32>
    %9 = arith.mulf %8, %5 : vector<256x128xf32>
    %10 = arith.select %7, %5, %9 : vector<256x128xi1>, vector<256x128xf32>
    %11 = arith.truncf %10 : vector<256x128xf32> to vector<256x128xbf16>
    %c0_7 = arith.constant 0 : index
    %c0_8 = arith.constant 0 : index
    %12 = vector.load %arg5[%c0_7, %c0_8] : memref<256x128xbf16, #tpu.memory_space<vmem>>, vector<256x128xbf16>
    tpu.vector_store %arg5[%c0_7, %c0_8], %11 {strides = array<i32>} : memref<256x128xbf16, #tpu.memory_space<vmem>>, vector<256x128xbf16>,
    return
  }
  func.func @transform_0(%arg0: i32, %arg1: i32) -> (i32, i32) {
    %c0_i32 = arith.constant 0 : i32
    %c0_i32_0 = arith.constant 0 : i32
    return %arg1, %c0_i32 : i32, i32
  }
  func.func @transform_1(%arg0: i32, %arg1: i32) -> (i32, i32) {
    %c0_i32 = arith.constant 0 : i32
    %c0_i32_0 = arith.constant 0 : i32
    return %c0_i32, %arg0 : i32, i32
  }
  func.func @transform_2(%arg0: i32, %arg1: i32) -> (i32, i32) {
    %c0_i32 = arith.constant 0 : i32
    %c0_i32_0 = arith.constant 0 : i32
    return %c0_i32, %arg0 : i32, i32
  }
  func.func @transform_3(%arg0: i32, %arg1: i32) -> (i32, i32) {
    %c0_i32 = arith.constant 0 : i32
    return %arg1, %arg0 : i32, i32
  }
}

module attributes {stable_mosaic.version = 11 : i64} {
  func.func @_conv3x3_bias_lrelu_kernel(%arg0: i32, %arg1: i32, %arg2: memref<1x18x18x128xbf16, #tpu.memory_space<vmem>>, %arg3: memref<3x384x128xbf16, #tpu.memory_space<vmem>>, %arg4: memref<1x128xf32, #tpu.memory_space<vmem>>, %arg5: memref<1x16x16x128xbf16, #tpu.memory_space<vmem>>, %arg6: memref<18x16x384xbf16, #tpu.memory_space<vmem>>, %arg7: memref<256x128xf32, #tpu.memory_space<vmem>>) attributes {dimension_semantics = [#tpu.dimension_semantics<parallel>, #tpu.dimension_semantics<parallel>], iteration_bounds = array<i64: 1, 2>, scalar_prefetch = 0 : i64, scratch_operands = 2 : i64, tpu.core_type = #tpu.core_type<tc>, window_params = [{transform_indices = @transform_0, window_bounds = array<i64: 1, 18, 18, 128>}, {transform_indices = @transform_1, window_bounds = array<i64: 3, 384, 128>}, {transform_indices = @transform_2, window_bounds = array<i64: 1, 128>}, {transform_indices = @transform_3, window_bounds = array<i64: 1, 16, 16, 128>}]} {
    %c0 = arith.constant 0 : index
    %c0_0 = arith.constant 0 : index
    %c0_1 = arith.constant 0 : index
    %c0_2 = arith.constant 0 : index
    %0 = vector.load %arg2[%c0, %c0_0, %c0_1, %c0_2] : memref<1x18x18x128xbf16, #tpu.memory_space<vmem>>, vector<1x18x16x128xbf16>
    %1 = vector.shape_cast %0 : vector<1x18x16x128xbf16> to vector<18x16x128xbf16>
    %c0_3 = arith.constant 0 : index
    %c0_4 = arith.constant 0 : index
    %c0_5 = arith.constant 0 : index
    %2 = vector.load %arg6[%c0_3, %c0_4, %c0_5] : memref<18x16x384xbf16, #tpu.memory_space<vmem>>, vector<18x16x128xbf16>
    tpu.vector_store %arg6[%c0_3, %c0_4, %c0_5], %1 {strides = array<i32>} : memref<18x16x384xbf16, #tpu.memory_space<vmem>>, vector<18x16x128xbf16>,
    %c0_6 = arith.constant 0 : index
    %c0_7 = arith.constant 0 : index
    %c1 = arith.constant 1 : index
    %c0_8 = arith.constant 0 : index
    %3 = vector.load %arg2[%c0_6, %c0_7, %c1, %c0_8] : memref<1x18x18x128xbf16, #tpu.memory_space<vmem>>, vector<1x18x16x128xbf16>
    %4 = vector.shape_cast %3 : vector<1x18x16x128xbf16> to vector<18x16x128xbf16>
    %c0_9 = arith.constant 0 : index
    %c0_10 = arith.constant 0 : index
    %c128 = arith.constant 128 : index
    %5 = vector.load %arg6[%c0_9, %c0_10, %c128] : memref<18x16x384xbf16, #tpu.memory_space<vmem>>, vector<18x16x128xbf16>
    tpu.vector_store %arg6[%c0_9, %c0_10, %c128], %4 {strides = array<i32>} : memref<18x16x384xbf16, #tpu.memory_space<vmem>>, vector<18x16x128xbf16>,
    %c0_11 = arith.constant 0 : index
    %c0_12 = arith.constant 0 : index
    %c2 = arith.constant 2 : index
    %c0_13 = arith.constant 0 : index
    %6 = vector.load %arg2[%c0_11, %c0_12, %c2, %c0_13] : memref<1x18x18x128xbf16, #tpu.memory_space<vmem>>, vector<1x18x16x128xbf16>
    %7 = vector.shape_cast %6 : vector<1x18x16x128xbf16> to vector<18x16x128xbf16>
    %c0_14 = arith.constant 0 : index
    %c0_15 = arith.constant 0 : index
    %c256 = arith.constant 256 : index
    %8 = vector.load %arg6[%c0_14, %c0_15, %c256] : memref<18x16x384xbf16, #tpu.memory_space<vmem>>, vector<18x16x128xbf16>
    tpu.vector_store %arg6[%c0_14, %c0_15, %c256], %7 {strides = array<i32>} : memref<18x16x384xbf16, #tpu.memory_space<vmem>>, vector<18x16x128xbf16>,
    %c0_16 = arith.constant 0 : index
    %c0_17 = arith.constant 0 : index
    %9 = vector.load %arg4[%c0_16, %c0_17] : memref<1x128xf32, #tpu.memory_space<vmem>>, vector<1x128xf32>
    %10 = vector.shape_cast %9 : vector<1x128xf32> to vector<1x128xf32>
    %11 = vector.broadcast %10 : vector<1x128xf32> to vector<256x128xf32>
    %c0_18 = arith.constant 0 : index
    %c0_19 = arith.constant 0 : index
    %12 = vector.load %arg7[%c0_18, %c0_19] : memref<256x128xf32, #tpu.memory_space<vmem>>, vector<256x128xf32>
    tpu.vector_store %arg7[%c0_18, %c0_19], %11 {strides = array<i32>} : memref<256x128xf32, #tpu.memory_space<vmem>>, vector<256x128xf32>,
    %c0_20 = arith.constant 0 : index
    %c0_21 = arith.constant 0 : index
    %13 = vector.load %arg7[%c0_20, %c0_21] : memref<256x128xf32, #tpu.memory_space<vmem>>, vector<256x128xf32>
    %c0_22 = arith.constant 0 : index
    %c0_23 = arith.constant 0 : index
    %c0_24 = arith.constant 0 : index
    %14 = vector.load %arg6[%c0_22, %c0_23, %c0_24] : memref<18x16x384xbf16, #tpu.memory_space<vmem>>, vector<16x16x384xbf16>
    %15 = vector.shape_cast %14 : vector<16x16x384xbf16> to vector<256x384xbf16>
    %c0_25 = arith.constant 0 : index
    %c0_26 = arith.constant 0 : index
    %c0_27 = arith.constant 0 : index
    %16 = vector.load %arg3[%c0_25, %c0_26, %c0_27] : memref<3x384x128xbf16, #tpu.memory_space<vmem>>, vector<1x384x128xbf16>
    %17 = vector.shape_cast %16 : vector<1x384x128xbf16> to vector<384x128xbf16>
    %cst = arith.constant dense<0.000000e+00> : vector<256x128xf32>
    %18 = tpu.matmul %15, %17, %cst {dimension_numbers = #tpu.dot_dimension_numbers<[1], [0], [0], [1], [0, 0, 1, 1], [], []>} : vector<256x384xbf16>, vector<384x128xbf16>, vector<256x128xf32> -> vector<256x128xf32>
    %19 = arith.addf %13, %18 : vector<256x128xf32>
    %c0_28 = arith.constant 0 : index
    %c0_29 = arith.constant 0 : index
    %20 = vector.load %arg7[%c0_28, %c0_29] : memref<256x128xf32, #tpu.memory_space<vmem>>, vector<256x128xf32>
    tpu.vector_store %arg7[%c0_28, %c0_29], %19 {strides = array<i32>} : memref<256x128xf32, #tpu.memory_space<vmem>>, vector<256x128xf32>,
    %c0_30 = arith.constant 0 : index
    %c0_31 = arith.constant 0 : index
    %21 = vector.load %arg7[%c0_30, %c0_31] : memref<256x128xf32, #tpu.memory_space<vmem>>, vector<256x128xf32>
    %c1_32 = arith.constant 1 : index
    %c0_33 = arith.constant 0 : index
    %c0_34 = arith.constant 0 : index
    %22 = vector.load %arg6[%c1_32, %c0_33, %c0_34] : memref<18x16x384xbf16, #tpu.memory_space<vmem>>, vector<16x16x384xbf16>
    %23 = vector.shape_cast %22 : vector<16x16x384xbf16> to vector<256x384xbf16>
    %c1_35 = arith.constant 1 : index
    %c0_36 = arith.constant 0 : index
    %c0_37 = arith.constant 0 : index
    %24 = vector.load %arg3[%c1_35, %c0_36, %c0_37] : memref<3x384x128xbf16, #tpu.memory_space<vmem>>, vector<1x384x128xbf16>
    %25 = vector.shape_cast %24 : vector<1x384x128xbf16> to vector<384x128xbf16>
    %cst_38 = arith.constant dense<0.000000e+00> : vector<256x128xf32>
    %26 = tpu.matmul %23, %25, %cst_38 {dimension_numbers = #tpu.dot_dimension_numbers<[1], [0], [0], [1], [0, 0, 1, 1], [], []>} : vector<256x384xbf16>, vector<384x128xbf16>, vector<256x128xf32> -> vector<256x128xf32>
    %27 = arith.addf %21, %26 : vector<256x128xf32>
    %c0_39 = arith.constant 0 : index
    %c0_40 = arith.constant 0 : index
    %28 = vector.load %arg7[%c0_39, %c0_40] : memref<256x128xf32, #tpu.memory_space<vmem>>, vector<256x128xf32>
    tpu.vector_store %arg7[%c0_39, %c0_40], %27 {strides = array<i32>} : memref<256x128xf32, #tpu.memory_space<vmem>>, vector<256x128xf32>,
    %c0_41 = arith.constant 0 : index
    %c0_42 = arith.constant 0 : index
    %29 = vector.load %arg7[%c0_41, %c0_42] : memref<256x128xf32, #tpu.memory_space<vmem>>, vector<256x128xf32>
    %c2_43 = arith.constant 2 : index
    %c0_44 = arith.constant 0 : index
    %c0_45 = arith.constant 0 : index
    %30 = vector.load %arg6[%c2_43, %c0_44, %c0_45] : memref<18x16x384xbf16, #tpu.memory_space<vmem>>, vector<16x16x384xbf16>
    %31 = vector.shape_cast %30 : vector<16x16x384xbf16> to vector<256x384xbf16>
    %c2_46 = arith.constant 2 : index
    %c0_47 = arith.constant 0 : index
    %c0_48 = arith.constant 0 : index
    %32 = vector.load %arg3[%c2_46, %c0_47, %c0_48] : memref<3x384x128xbf16, #tpu.memory_space<vmem>>, vector<1x384x128xbf16>
    %33 = vector.shape_cast %32 : vector<1x384x128xbf16> to vector<384x128xbf16>
    %cst_49 = arith.constant dense<0.000000e+00> : vector<256x128xf32>
    %34 = tpu.matmul %31, %33, %cst_49 {dimension_numbers = #tpu.dot_dimension_numbers<[1], [0], [0], [1], [0, 0, 1, 1], [], []>} : vector<256x384xbf16>, vector<384x128xbf16>, vector<256x128xf32> -> vector<256x128xf32>
    %35 = arith.addf %29, %34 : vector<256x128xf32>
    %c0_50 = arith.constant 0 : index
    %c0_51 = arith.constant 0 : index
    %36 = vector.load %arg7[%c0_50, %c0_51] : memref<256x128xf32, #tpu.memory_space<vmem>>, vector<256x128xf32>
    tpu.vector_store %arg7[%c0_50, %c0_51], %35 {strides = array<i32>} : memref<256x128xf32, #tpu.memory_space<vmem>>, vector<256x128xf32>,
    %c0_52 = arith.constant 0 : index
    %c0_53 = arith.constant 0 : index
    %37 = vector.load %arg7[%c0_52, %c0_53] : memref<256x128xf32, #tpu.memory_space<vmem>>, vector<256x128xf32>
    %38 = vector.shape_cast %37 : vector<256x128xf32> to vector<16x16x128xf32>
    %cst_54 = arith.constant 0.000000e+00 : f32
    %39 = vector.broadcast %cst_54 : f32 to vector<16x16x128xf32>
    %40 = arith.cmpf oge, %38, %39 : vector<16x16x128xf32>
    %cst_55 = arith.constant 1.000000e-01 : f32
    %41 = vector.broadcast %cst_55 : f32 to vector<16x16x128xf32>
    %42 = arith.mulf %41, %38 : vector<16x16x128xf32>
    %43 = arith.select %40, %38, %42 : vector<16x16x128xi1>, vector<16x16x128xf32>
    %44 = arith.truncf %43 : vector<16x16x128xf32> to vector<16x16x128xbf16>
    %c0_56 = arith.constant 0 : index
    %c0_57 = arith.constant 0 : index
    %c0_58 = arith.constant 0 : index
    %c0_59 = arith.constant 0 : index
    %45 = vector.load %arg5[%c0_56, %c0_57, %c0_58, %c0_59] : memref<1x16x16x128xbf16, #tpu.memory_space<vmem>>, vector<1x16x16x128xbf16>
    %46 = vector.shape_cast %45 : vector<1x16x16x128xbf16> to vector<16x16x128xbf16>
    %47 = vector.shape_cast %44 : vector<16x16x128xbf16> to vector<1x16x16x128xbf16>
    tpu.vector_store %arg5[%c0_56, %c0_57, %c0_58, %c0_59], %47 {strides = array<i32>} : memref<1x16x16x128xbf16, #tpu.memory_space<vmem>>, vector<1x16x16x128xbf16>,
    return
  }
  func.func @transform_0(%arg0: i32, %arg1: i32) -> (i32, i32, i32, i32) {
    %c0_i32 = arith.constant 0 : i32
    %c0_i32_0 = arith.constant 0 : i32
    %c0_i32_1 = arith.constant 0 : i32
    %c0_i32_2 = arith.constant 0 : i32
    return %arg1, %c0_i32, %c0_i32_0, %c0_i32_1 : i32, i32, i32, i32
  }
  func.func @transform_1(%arg0: i32, %arg1: i32) -> (i32, i32, i32) {
    %c0_i32 = arith.constant 0 : i32
    %c0_i32_0 = arith.constant 0 : i32
    %c0_i32_1 = arith.constant 0 : i32
    return %c0_i32, %c0_i32_0, %arg0 : i32, i32, i32
  }
  func.func @transform_2(%arg0: i32, %arg1: i32) -> (i32, i32) {
    %c0_i32 = arith.constant 0 : i32
    %c0_i32_0 = arith.constant 0 : i32
    return %c0_i32, %arg0 : i32, i32
  }
  func.func @transform_3(%arg0: i32, %arg1: i32) -> (i32, i32, i32, i32) {
    %c0_i32 = arith.constant 0 : i32
    %c0_i32_0 = arith.constant 0 : i32
    %c0_i32_1 = arith.constant 0 : i32
    return %arg1, %c0_i32, %c0_i32_0, %arg0 : i32, i32, i32, i32
  }
}

</mosaic_0001>

<llo_original>
// kernel: convolutional_set_forward.5
$region0: #{convolutional_set_forward.5}
  #allocation0 [shape = 'u32[]', space=smem, size = 0x4, offset = 0x4, fixed_abs, tag = 'smem constant byte address 0x4 - core index']
  #allocation1 [shape = 'u32[72,128]{1,0:T(1,128)}', space=vmem, size = 0x9000, scoped, tag = 'internal scratch']
  %s0 = inlined_call_operand.vmem [shape: bf16[512,128], index: 0, kind: input, shape index: {}]
  %s1 = inlined_call_operand.vmem [shape: bf16[128,128], index: 1, kind: input, shape index: {}]
  %s2 = inlined_call_operand.vmem [shape: f32[1,128], index: 2, kind: input, shape index: {}]
  %s3 = inlined_call_operand.vmem [shape: bf16[512,128], index: 3, kind: output, shape index: {}]
  %s4 = sld [smem:[#allocation0]]
  $region45: #{convolutional_set_forward.5} parent=0
    _
  %s6 = ssub.s32 1, %s4
  %s7 = scalar_select 0, %s6, %s4
  loop: start=0, step=1, limit=4
  $region2: #{convolutional_set_forward.5} parent=0 // loop_pre_header
    _
  $region3: #{convolutional_set_forward.5} parent=0 // loop_header
    %s9 = sphi 0, %s13
    %p10 = scmp.ge.s32.totalorder %s9, 4
    %s16 = sphi 0, %s28
    %s17 = sphi 0, %s24
    %s18 = sphi 0, %s16
    %s19 = sphi 0, %s17
    %s20 = sphi 0, %s18
    %s21 = sphi 0, %s19
    %s31 = sphi 0, %s33
    %s34 = sphi 0, %s31
    %s35 = sphi 0, %s34
    %s51 = sphi 0, %s35
    %s57 = sphi 0, %s59
    %s60 = sphi 0, %s57
    %s61 = sphi 0, %s60
    %s77 = sphi 0, %s61
    %s83 = sphi 0, %s85
    %s86 = sphi 0, %s83
    %s87 = sphi 0, %s86
    %s103 = sphi 0, %s87
    %s111 = sphi 0, %s113
    %s114 = sphi 0, %s111
    %s115 = sphi 0, %s114
    %s131 = sphi 0, %s115
  $region4: #{convolutional_set_forward.5} parent=0 // loop_header_branch
    %12 = sbr.rel (%p10) target = $region8
  $region5: #{convolutional_set_forward.5} parent=0 // loop_body
    %s14 = ssub.s32 %s9, 1
    %s15 = ssub.s32 %s9, 2
    %s22 = sadd.s32 1, %s17
    %p23 = scmp.ge.s32.totalorder %s22, 2
    %s24 = scalar_select %p23, 0, %s22
    %s25 = sadd.s32 1, %s16
    %s26 = scalar_select %p23, %s25, %s16
    %p27 = scmp.ge.s32.totalorder %s26, 1
    %s28 = scalar_select %p27, 0, %s26
    %s29 = ssub.s32 %s17, %s24
    %p30 = scmp.eq.s32.totalorder %s29, 0
    %s32 = sadd.s32 %s31, 1
    %s33 = scalar_select %p30, %s31, %s32
    %p36 = pneg %p30
    %p37 = scmp.eq.s32.totalorder %s9, 1
    %p38 = por %p36, %p37
    %p39 = scmp.ne.s32.totalorder %s31, %s34
    %p40 = scmp.eq.s32.totalorder %s9, 0
    %p41 = por %p39, %p40
    %p42 = scmp.ne.s32.totalorder %s31, %s34
    %p43 = scmp.eq.s32.totalorder %s14, 1
    %p44 = por %p42, %p43
    %p45 = scmp.ne.s32.totalorder %s34, %s35
    %p46 = scmp.eq.s32.totalorder %s14, 0
    %p47 = por %p45, %p46
    %p48 = scmp.ne.s32.totalorder %s34, %s35
    %p49 = scmp.eq.s32.totalorder %s15, 1
    %p50 = por %p48, %p49
    %p52 = scmp.ne.s32.totalorder %s35, %s51
    %p53 = scmp.eq.s32.totalorder %s15, 0
    %p54 = por %p52, %p53
    %s55 = ssub.s32 %s16, %s28
    %p56 = scmp.eq.s32.totalorder %s55, 0
    %s58 = sadd.s32 %s57, 1
    %s59 = scalar_select %p56, %s57, %s58
    %p62 = pneg %p56
    %p63 = scmp.eq.s32.totalorder %s9, 1
    %p64 = por %p62, %p63
    %p65 = scmp.ne.s32.totalorder %s57, %s60
    %p66 = scmp.eq.s32.totalorder %s9, 0
    %p67 = por %p65, %p66
    %p68 = scmp.ne.s32.totalorder %s57, %s60
    %p69 = scmp.eq.s32.totalorder %s14, 1
    %p70 = por %p68, %p69
    %p71 = scmp.ne.s32.totalorder %s60, %s61
    %p72 = scmp.eq.s32.totalorder %s14, 0
    %p73 = por %p71, %p72
    %p74 = scmp.ne.s32.totalorder %s60, %s61
    %p75 = scmp.eq.s32.totalorder %s15, 1
    %p76 = por %p74, %p75
    %p78 = scmp.ne.s32.totalorder %s61, %s77
    %p79 = scmp.eq.s32.totalorder %s15, 0
    %p80 = por %p78, %p79
    %s81 = ssub.s32 %s16, %s28
    %p82 = scmp.eq.s32.totalorder %s81, 0
    %s84 = sadd.s32 %s83, 1
    %s85 = scalar_select %p82, %s83, %s84
    %p88 = pneg %p82
    %p89 = scmp.eq.s32.totalorder %s9, 1
    %p90 = por %p88, %p89
    %p91 = scmp.ne.s32.totalorder %s83, %s86
    %p92 = scmp.eq.s32.totalorder %s9, 0
    %p93 = por %p91, %p92
    %p94 = scmp.ne.s32.totalorder %s83, %s86
    %p95 = scmp.eq.s32.totalorder %s14, 1
    %p96 = por %p94, %p95
    %p97 = scmp.ne.s32.totalorder %s86, %s87
    %p98 = scmp.eq.s32.totalorder %s14, 0
    %p99 = por %p97, %p98
    %p100 = scmp.ne.s32.totalorder %s86, %s87
    %p101 = scmp.eq.s32.totalorder %s15, 1
    %p102 = por %p100, %p101
    %p104 = scmp.ne.s32.totalorder %s87, %s103
    %p105 = scmp.eq.s32.totalorder %s15, 0
    %p106 = por %p104, %p105
    %s107 = ssub.s32 %s17, %s24
    %s108 = ssub.s32 %s16, %s28
    %s109 = sor.u32 %s107, %s108
    %p110 = scmp.eq.s32.totalorder %s109, 0
    %s112 = sadd.s32 %s111, 1
    %s113 = scalar_select %p110, %s111, %s112
    %p116 = pneg %p110
    %p117 = scmp.eq.s32.totalorder %s9, 1
    %p118 = por %p116, %p117
    %p119 = scmp.ne.s32.totalorder %s111, %s114
    %p120 = scmp.eq.s32.totalorder %s9, 0
    %p121 = por %p119, %p120
    %p122 = scmp.ne.s32.totalorder %s111, %s114
    %p123 = scmp.eq.s32.totalorder %s14, 1
    %p124 = por %p122, %p123
    %p125 = scmp.ne.s32.totalorder %s114, %s115
    %p126 = scmp.eq.s32.totalorder %s14, 0
    %p127 = por %p125, %p126
    %p128 = scmp.ne.s32.totalorder %s114, %s115
    %p129 = scmp.eq.s32.totalorder %s15, 1
    %p130 = por %p128, %p129
    %p132 = scmp.ne.s32.totalorder %s115, %s131
    %p133 = scmp.eq.s32.totalorder %s15, 0
    %p134 = por %p132, %p133
    %p135 = scmp.le.s32.totalorder 1, %s9
    %p136 = scmp.lt.s32.totalorder %s9, 3
    %p137 = pnand %p135, %p136
    %p138 = pneg %p137
    // Predicated region
    $region9: #{convolutional_set_forward.5} parent=5 // pred_check
      _
    $region10: #{convolutional_set_forward.5} parent=5 // pred_check_branch
      %140 = sbr.rel (%p137) target = $region12
    $region11: #{convolutional_set_forward.5} parent=5 // pred_region
      %s141 = ssub.s32 %s9, 1
      // Predicated region
      $region13: #{convolutional_set_forward.5} parent=11 // pred_check
        %p142 = pneg %p73
      $region14: #{convolutional_set_forward.5} parent=11 // pred_check_branch
        %144 = sbr.rel (%p142) target = $region16
      $region15: #{convolutional_set_forward.5} parent=11 // pred_region
        %p145 = scmp.lt.s32.totalorder %s18, 0
        %s146 = scalar_select %p145, %s18, 0
        %s147 = smul.addr %s146, 4
        %s148 = scalar_lea.vmem %s1, %s147
      $region16: #{convolutional_set_forward.5} parent=11 // pred_fallthru
        _
      // Predicated region
      $region17: #{convolutional_set_forward.5} parent=11 // pred_check
        %p149 = pneg %p99
      $region18: #{convolutional_set_forward.5} parent=11 // pred_check_branch
        %151 = sbr.rel (%p149) target = $region20
      $region19: #{convolutional_set_forward.5} parent=11 // pred_region
        %p152 = scmp.lt.s32.totalorder %s18, 0
        %s153 = scalar_select %p152, %s18, 0
        %s154 = scalar_lea.vmem %s2, %s153
      $region20: #{convolutional_set_forward.5} parent=11 // pred_fallthru
        _
    $region12: #{convolutional_set_forward.5} parent=5 // pred_fallthru
      _
    %p155 = scmp.lt.s32.totalorder %s9, 2
    // Predicated region
    $region21: #{convolutional_set_forward.5} parent=5 // pred_check
      %p156 = pneg %p155
    $region22: #{convolutional_set_forward.5} parent=5 // pred_check_branch
      %158 = sbr.rel (%p156) target = $region24
    $region23: #{convolutional_set_forward.5} parent=5 // pred_region
      // Predicated region
      $region25: #{convolutional_set_forward.5} parent=23 // pred_check
        %p159 = pneg %p41
      $region26: #{convolutional_set_forward.5} parent=23 // pred_check_branch
        %161 = sbr.rel (%p159) target = $region28
      $region27: #{convolutional_set_forward.5} parent=23 // pred_region
        %s162 = smul.u32 32, %s17
        %p163 = scmp.lt.s32.totalorder %s162, 63
        %s164 = scalar_select %p163, %s162, 63
        %s165 = smul.addr %s164, 4
        %s166 = scalar_lea.vmem %s0, %s165
        %s167 = smul.u32 32, %s17
      $region28: #{convolutional_set_forward.5} parent=23 // pred_fallthru
        _
    $region24: #{convolutional_set_forward.5} parent=5 // pred_fallthru
      _
    %p168 = scmp.le.s32.totalorder 1, %s9
    %p169 = scmp.lt.s32.totalorder %s9, 3
    %p170 = pnand %p168, %p169
    %p171 = pneg %p170
    // Predicated region
    $region29: #{convolutional_set_forward.5} parent=5 // pred_check
      _
    $region30: #{convolutional_set_forward.5} parent=5 // pred_check_branch
      %173 = sbr.rel (%p170) target = $region32
    $region31: #{convolutional_set_forward.5} parent=5 // pred_region
      %s174 = ssub.s32 %s9, 1
      %s175 = smul.u32 32, %s19
      %p176 = scmp.lt.s32.totalorder %s175, 63
      %s177 = scalar_select %p176, %s175, 63
      %s178 = smul.addr %s177, 4
      %s179 = scalar_lea.vmem %s0, %s178
      %p180 = pneg %p47
      %p181 = pneg %p44
      %p182 = scmp.lt.s32.totalorder %s18, 0
      %s183 = scalar_select %p182, %s18, 0
      %s184 = smul.addr %s183, 4
      %s185 = scalar_lea.vmem %s1, %s184
      %p186 = pneg %p73
      %p187 = pneg %p70
      %p188 = scmp.lt.s32.totalorder %s18, 0
      %s189 = scalar_select %p188, %s18, 0
      %s190 = scalar_lea.vmem %s2, %s189
      %p191 = pneg %p99
      %p192 = pneg %p96
      %p193 = pneg %p127
      %p194 = pneg %p124
      %s195 = smul.u32 32, %s19
      %p196 = scmp.lt.s32.totalorder %s195, 63
      %s197 = scalar_select %p196, %s195, 63
      %p198 = scmp.lt.s32.totalorder %s18, 0
      %s199 = scalar_select %p198, %s18, 0
      %s200 = sadd.s32 %s199, %s197
      %s201 = smul.addr %s200, 4
      %s202 = scalar_lea.vmem %s3, %s201
      %s203 = smul.u32 32, %s19
      %p204 = scmp.lt.s32.totalorder %s203, 63
      %s205 = scalar_select %p204, %s203, 63
      %s206 = smul.addr %s205, 4
      %s207 = scalar_lea.vmem %s0, %s206
      %s208 = smul.u32 32, %s19
      %p209 = scmp.lt.s32.totalorder %s18, 0
      %s210 = scalar_select %p209, %s18, 0
      %s211 = smul.addr %s210, 4
      %s212 = scalar_lea.vmem %s1, %s211
      %p213 = scmp.lt.s32.totalorder %s18, 0
      %s214 = scalar_select %p213, %s18, 0
      %s215 = scalar_lea.vmem %s2, %s214
      %s216 = smul.u32 32, %s19
      %p217 = scmp.lt.s32.totalorder %s216, 63
      %s218 = scalar_select %p217, %s216, 63
      %p219 = scmp.lt.s32.totalorder %s18, 0
      %s220 = scalar_select %p219, %s18, 0
      %s221 = sadd.s32 %s220, %s218
      %s222 = smul.addr %s221, 4
      %s223 = scalar_lea.vmem %s3, %s222
      %s224 = smul.u32 32, %s19
      %v225 = vld [vmem:[%s207] sm:$0xf]
      %v226 = vld [vmem:[%s207 + $0x4] sm:$0xf]
      %v227 = vld [vmem:[%s207 + $0x8] sm:$0xf]
      %v228 = vld [vmem:[%s207 + $0xc] sm:$0xf]
      %v229 = vld [vmem:[%s207 + $0x10] sm:$0xf]
      %v230 = vld [vmem:[%s207 + $0x14] sm:$0xf]
      %v231 = vld [vmem:[%s207 + $0x18] sm:$0xf]
      %v232 = vld [vmem:[%s207 + $0x1c] sm:$0xf]
      %v233 = vld [vmem:[%s207 + $0x20] sm:$0xf]
      %v234 = vld [vmem:[%s207 + $0x24] sm:$0xf]
      %v235 = vld [vmem:[%s207 + $0x28] sm:$0xf]
      %v236 = vld [vmem:[%s207 + $0x2c] sm:$0xf]
      %v237 = vld [vmem:[%s207 + $0x30] sm:$0xf]
      %v238 = vld [vmem:[%s207 + $0x34] sm:$0xf]
      %v239 = vld [vmem:[%s207 + $0x38] sm:$0xf]
      %v240 = vld [vmem:[%s207 + $0x3c] sm:$0xf]
      %v241 = vld [vmem:[%s207 + $0x40] sm:$0xf]
      %v242 = vld [vmem:[%s207 + $0x44] sm:$0xf]
      %v243 = vld [vmem:[%s207 + $0x48] sm:$0xf]
      %v244 = vld [vmem:[%s207 + $0x4c] sm:$0xf]
      %v245 = vld [vmem:[%s207 + $0x50] sm:$0xf]
      %v246 = vld [vmem:[%s207 + $0x54] sm:$0xf]
      %v247 = vld [vmem:[%s207 + $0x58] sm:$0xf]
      %v248 = vld [vmem:[%s207 + $0x5c] sm:$0xf]
      %v249 = vld [vmem:[%s207 + $0x60] sm:$0xf]
      %v250 = vld [vmem:[%s207 + $0x64] sm:$0xf]
      %v251 = vld [vmem:[%s207 + $0x68] sm:$0xf]
      %v252 = vld [vmem:[%s207 + $0x6c] sm:$0xf]
      %v253 = vld [vmem:[%s207 + $0x70] sm:$0xf]
      %v254 = vld [vmem:[%s207 + $0x74] sm:$0xf]
      %v255 = vld [vmem:[%s207 + $0x78] sm:$0xf]
      %v256 = vld [vmem:[%s207 + $0x7c] sm:$0xf]
      %v257 = vld [vmem:[%s212] sm:$0xf]
      %v258 = vld [vmem:[%s212 + $0x4] sm:$0xf]
      %v259 = vld [vmem:[%s212 + $0x8] sm:$0xf]
      %v260 = vld [vmem:[%s212 + $0xc] sm:$0xf]
      %v261 = vld [vmem:[%s212 + $0x10] sm:$0xf]
      %v262 = vld [vmem:[%s212 + $0x14] sm:$0xf]
      %v263 = vld [vmem:[%s212 + $0x18] sm:$0xf]
      %v264 = vld [vmem:[%s212 + $0x1c] sm:$0xf]
      %v265 = vld [vmem:[%s212 + $0x20] sm:$0xf]
      %v266 = vld [vmem:[%s212 + $0x24] sm:$0xf]
      %v267 = vld [vmem:[%s212 + $0x28] sm:$0xf]
      %v268 = vld [vmem:[%s212 + $0x2c] sm:$0xf]
      %v269 = vld [vmem:[%s212 + $0x30] sm:$0xf]
      %v270 = vld [vmem:[%s212 + $0x34] sm:$0xf]
      %v271 = vld [vmem:[%s212 + $0x38] sm:$0xf]
      %v272 = vld [vmem:[%s212 + $0x3c] sm:$0xf]
      %v273 = vld [vmem:[%s215] sm:$0x1]
      %v275 = vperm.slane %v273, 0
      %v309 = vunpack.c.l.b16 %v225
      %v310 = vunpack.c.l.b16 %v226
      %v311 = vunpack.c.l.b16 %v227
      %v312 = vunpack.c.l.b16 %v228
      %v313 = vunpack.c.l.b16 %v229
      %v314 = vunpack.c.l.b16 %v230
      %v315 = vunpack.c.l.b16 %v231
      %v316 = vunpack.c.l.b16 %v232
      %v317 = vunpack.c.l.b16 %v233
      %v318 = vunpack.c.l.b16 %v234
      %v319 = vunpack.c.l.b16 %v235
      %v320 = vunpack.c.l.b16 %v236
      %v321 = vunpack.c.l.b16 %v237
      %v322 = vunpack.c.l.b16 %v238
      %v323 = vunpack.c.l.b16 %v239
      %v324 = vunpack.c.l.b16 %v240
      %v325 = vunpack.c.l.b16 %v241
      %v326 = vunpack.c.l.b16 %v242
      %v327 = vunpack.c.l.b16 %v243
      %v328 = vunpack.c.l.b16 %v244
      %v329 = vunpack.c.l.b16 %v245
      %v330 = vunpack.c.l.b16 %v246
      %v331 = vunpack.c.l.b16 %v247
      %v332 = vunpack.c.l.b16 %v248
      %v333 = vunpack.c.l.b16 %v249
      %v334 = vunpack.c.l.b16 %v250
      %v335 = vunpack.c.l.b16 %v251
      %v336 = vunpack.c.l.b16 %v252
      %v337 = vunpack.c.l.b16 %v253
      %v338 = vunpack.c.l.b16 %v254
      %v339 = vunpack.c.l.b16 %v255
      %v340 = vunpack.c.l.b16 %v256
      %v341 = vpack.c.b16 %v310, %v309
      %v342 = vpack.c.b16 %v312, %v311
      %v343 = vpack.c.b16 %v314, %v313
      %v344 = vpack.c.b16 %v316, %v315
      %v345 = vpack.c.b16 %v318, %v317
      %v346 = vpack.c.b16 %v320, %v319
      %v347 = vpack.c.b16 %v322, %v321
      %v348 = vpack.c.b16 %v324, %v323
      %v349 = vpack.c.b16 %v326, %v325
      %v350 = vpack.c.b16 %v328, %v327
      %v351 = vpack.c.b16 %v330, %v329
      %v352 = vpack.c.b16 %v332, %v331
      %v353 = vpack.c.b16 %v334, %v333
      %v354 = vpack.c.b16 %v336, %v335
      %v355 = vpack.c.b16 %v338, %v337
      %v356 = vpack.c.b16 %v340, %v339
      %v389 = vunpack.c.l.b16 %v257
      %v390 = vunpack.c.l.b16 %v258
      %v391 = vunpack.c.l.b16 %v259
      %v392 = vunpack.c.l.b16 %v260
      %v393 = vunpack.c.l.b16 %v261
      %v394 = vunpack.c.l.b16 %v262
      %v395 = vunpack.c.l.b16 %v263
      %v396 = vunpack.c.l.b16 %v264
      %v397 = vunpack.c.l.b16 %v265
      %v398 = vunpack.c.l.b16 %v266
      %v399 = vunpack.c.l.b16 %v267
      %v400 = vunpack.c.l.b16 %v268
      %v401 = vunpack.c.l.b16 %v269
      %v402 = vunpack.c.l.b16 %v270
      %v403 = vunpack.c.l.b16 %v271
      %v404 = vunpack.c.l.b16 %v272
      %v405 = vpack.c.b16 %v390, %v389
      %v406 = vpack.c.b16 %v392, %v391
      %v407 = vpack.c.b16 %v394, %v393
      %v408 = vpack.c.b16 %v396, %v395
      %v409 = vpack.c.b16 %v398, %v397
      %v410 = vpack.c.b16 %v400, %v399
      %v411 = vpack.c.b16 %v402, %v401
      %v412 = vpack.c.b16 %v404, %v403
      %421 = vmatpush.bf16.msra.mxu0 %v412
      %422 = vmatpush.bf16.msra.mxu0 %v411
      %423 = vmatpush.bf16.msra.mxu0 %v410
      %424 = vmatpush.bf16.msra.mxu0 %v409
      %425 = vmatpush.bf16.msra.mxu0 %v408
      %426 = vmatpush.bf16.msra.mxu0 %v407
      %427 = vmatpush.bf16.msra.mxu0 %v406
      %428 = vmatpush.bf16.msra.mxu0 %v405
      %429 = vmatmul.bf16.gmra.mxu0 %v341
      %v430 = vpop.f32.mrf.mxu0
      %v431 = vadd.f32 %v275, %v430
      %v432 = vpop.f32.mrf.mxu0
      %v433 = vadd.f32 %v275, %v432
      %434 = vmatmul.bf16.gmra.mxu0 %v342
      %v435 = vpop.f32.mrf.mxu0
      %v436 = vadd.f32 %v275, %v435
      %v437 = vpop.f32.mrf.mxu0
      %v438 = vadd.f32 %v275, %v437
      %439 = vmatmul.bf16.gmra.mxu0 %v343
      %v440 = vpop.f32.mrf.mxu0
      %v441 = vadd.f32 %v275, %v440
      %v442 = vpop.f32.mrf.mxu0
      %v443 = vadd.f32 %v275, %v442
      %444 = vmatmul.bf16.gmra.mxu0 %v344
      %v445 = vpop.f32.mrf.mxu0
      %v446 = vadd.f32 %v275, %v445
      %v447 = vpop.f32.mrf.mxu0
      %v448 = vadd.f32 %v275, %v447
      %449 = vmatmul.bf16.gmra.mxu0 %v345
      %v450 = vpop.f32.mrf.mxu0
      %v451 = vadd.f32 %v275, %v450
      %v452 = vpop.f32.mrf.mxu0
      %v453 = vadd.f32 %v275, %v452
      %454 = vmatmul.bf16.gmra.mxu0 %v346
      %v455 = vpop.f32.mrf.mxu0
      %v456 = vadd.f32 %v275, %v455
      %v457 = vpop.f32.mrf.mxu0
      %v458 = vadd.f32 %v275, %v457
      %459 = vmatmul.bf16.gmra.mxu0 %v347
      %v460 = vpop.f32.mrf.mxu0
      %v461 = vadd.f32 %v275, %v460
      %v462 = vpop.f32.mrf.mxu0
      %v463 = vadd.f32 %v275, %v462
      %464 = vmatmul.bf16.gmra.mxu0 %v348
      %v465 = vpop.f32.mrf.mxu0
      %v466 = vadd.f32 %v275, %v465
      %v467 = vpop.f32.mrf.mxu0
      %v468 = vadd.f32 %v275, %v467
      %469 = vmatmul.bf16.gmra.mxu0 %v349
      %v470 = vpop.f32.mrf.mxu0
      %v471 = vadd.f32 %v275, %v470
      %v472 = vpop.f32.mrf.mxu0
      %v473 = vadd.f32 %v275, %v472
      %474 = vmatmul.bf16.gmra.mxu0 %v350
      %v475 = vpop.f32.mrf.mxu0
      %v476 = vadd.f32 %v275, %v475
      %v477 = vpop.f32.mrf.mxu0
      %v478 = vadd.f32 %v275, %v477
      %479 = vmatmul.bf16.gmra.mxu0 %v351
      %v480 = vpop.f32.mrf.mxu0
      %v481 = vadd.f32 %v275, %v480
      %v482 = vpop.f32.mrf.mxu0
      %v483 = vadd.f32 %v275, %v482
      %484 = vmatmul.bf16.gmra.mxu0 %v352
      %v485 = vpop.f32.mrf.mxu0
      %v486 = vadd.f32 %v275, %v485
      %v487 = vpop.f32.mrf.mxu0
      %v488 = vadd.f32 %v275, %v487
      %489 = vmatmul.bf16.gmra.mxu0 %v353
      %v490 = vpop.f32.mrf.mxu0
      %v491 = vadd.f32 %v275, %v490
      %v492 = vpop.f32.mrf.mxu0
      %v493 = vadd.f32 %v275, %v492
      %494 = vmatmul.bf16.gmra.mxu0 %v354
      %v495 = vpop.f32.mrf.mxu0
      %v496 = vadd.f32 %v275, %v495
      %v497 = vpop.f32.mrf.mxu0
      %v498 = vadd.f32 %v275, %v497
      %499 = vmatmul.bf16.gmra.mxu0 %v355
      %v500 = vpop.f32.mrf.mxu0
      %v501 = vadd.f32 %v275, %v500
      %v502 = vpop.f32.mrf.mxu0
      %v503 = vadd.f32 %v275, %v502
      %504 = vmatmul.bf16.gmra.mxu0 %v356
      %v505 = vpop.f32.mrf.mxu0
      %v506 = vadd.f32 %v275, %v505
      %v507 = vpop.f32.mrf.mxu0
      %v508 = vadd.f32 %v275, %v507
      %509 = vdwg.mxu0
      %vm510 = vcmp.ge.f32.partialorder %v431, 0.0
      %vm511 = vcmp.ge.f32.partialorder %v433, 0.0
      %vm512 = vcmp.ge.f32.partialorder %v436, 0.0
      %vm513 = vcmp.ge.f32.partialorder %v438, 0.0
      %vm514 = vcmp.ge.f32.partialorder %v441, 0.0
      %vm515 = vcmp.ge.f32.partialorder %v443, 0.0
      %vm516 = vcmp.ge.f32.partialorder %v446, 0.0
      %vm517 = vcmp.ge.f32.partialorder %v448, 0.0
      %vm518 = vcmp.ge.f32.partialorder %v451, 0.0
      %vm519 = vcmp.ge.f32.partialorder %v453, 0.0
      %vm520 = vcmp.ge.f32.partialorder %v456, 0.0
      %vm521 = vcmp.ge.f32.partialorder %v458, 0.0
      %vm522 = vcmp.ge.f32.partialorder %v461, 0.0
      %vm523 = vcmp.ge.f32.partialorder %v463, 0.0
      %vm524 = vcmp.ge.f32.partialorder %v466, 0.0
      %vm525 = vcmp.ge.f32.partialorder %v468, 0.0
      %vm526 = vcmp.ge.f32.partialorder %v471, 0.0
      %vm527 = vcmp.ge.f32.partialorder %v473, 0.0
      %vm528 = vcmp.ge.f32.partialorder %v476, 0.0
      %vm529 = vcmp.ge.f32.partialorder %v478, 0.0
      %vm530 = vcmp.ge.f32.partialorder %v481, 0.0
      %vm531 = vcmp.ge.f32.partialorder %v483, 0.0
      %vm532 = vcmp.ge.f32.partialorder %v486, 0.0
      %vm533 = vcmp.ge.f32.partialorder %v488, 0.0
      %vm534 = vcmp.ge.f32.partialorder %v491, 0.0
      %vm535 = vcmp.ge.f32.partialorder %v493, 0.0
      %vm536 = vcmp.ge.f32.partialorder %v496, 0.0
      %vm537 = vcmp.ge.f32.partialorder %v498, 0.0
      %vm538 = vcmp.ge.f32.partialorder %v501, 0.0
      %vm539 = vcmp.ge.f32.partialorder %v503, 0.0
      %vm540 = vcmp.ge.f32.partialorder %v506, 0.0
      %vm541 = vcmp.ge.f32.partialorder %v508, 0.0
      %v542 = vmul.f32 %v431, 0.1
      %v543 = vmul.f32 %v433, 0.1
      %v544 = vmul.f32 %v436, 0.1
      %v545 = vmul.f32 %v438, 0.1
      %v546 = vmul.f32 %v441, 0.1
      %v547 = vmul.f32 %v443, 0.1
      %v548 = vmul.f32 %v446, 0.1
      %v549 = vmul.f32 %v448, 0.1
      %v550 = vmul.f32 %v451, 0.1
      %v551 = vmul.f32 %v453, 0.1
      %v552 = vmul.f32 %v456, 0.1
      %v553 = vmul.f32 %v458, 0.1
      %v554 = vmul.f32 %v461, 0.1
      %v555 = vmul.f32 %v463, 0.1
      %v556 = vmul.f32 %v466, 0.1
      %v557 = vmul.f32 %v468, 0.1
      %v558 = vmul.f32 %v471, 0.1
      %v559 = vmul.f32 %v473, 0.1
      %v560 = vmul.f32 %v476, 0.1
      %v561 = vmul.f32 %v478, 0.1
      %v562 = vmul.f32 %v481, 0.1
      %v563 = vmul.f32 %v483, 0.1
      %v564 = vmul.f32 %v486, 0.1
      %v565 = vmul.f32 %v488, 0.1
      %v566 = vmul.f32 %v491, 0.1
      %v567 = vmul.f32 %v493, 0.1
      %v568 = vmul.f32 %v496, 0.1
      %v569 = vmul.f32 %v498, 0.1
      %v570 = vmul.f32 %v501, 0.1
      %v571 = vmul.f32 %v503, 0.1
      %v572 = vmul.f32 %v506, 0.1
      %v573 = vmul.f32 %v508, 0.1
      %v574 = vsel %vm510, %v431, %v542
      %v575 = vsel %vm511, %v433, %v543
      %v576 = vsel %vm512, %v436, %v544
      %v577 = vsel %vm513, %v438, %v545
      %v578 = vsel %vm514, %v441, %v546
      %v579 = vsel %vm515, %v443, %v547
      %v580 = vsel %vm516, %v446, %v548
      %v581 = vsel %vm517, %v448, %v549
      %v582 = vsel %vm518, %v451, %v550
      %v583 = vsel %vm519, %v453, %v551
      %v584 = vsel %vm520, %v456, %v552
      %v585 = vsel %vm521, %v458, %v553
      %v586 = vsel %vm522, %v461, %v554
      %v587 = vsel %vm523, %v463, %v555
      %v588 = vsel %vm524, %v466, %v556
      %v589 = vsel %vm525, %v468, %v557
      %v590 = vsel %vm526, %v471, %v558
      %v591 = vsel %vm527, %v473, %v559
      %v592 = vsel %vm528, %v476, %v560
      %v593 = vsel %vm529, %v478, %v561
      %v594 = vsel %vm530, %v481, %v562
      %v595 = vsel %vm531, %v483, %v563
      %v596 = vsel %vm532, %v486, %v564
      %v597 = vsel %vm533, %v488, %v565
      %v598 = vsel %vm534, %v491, %v566
      %v599 = vsel %vm535, %v493, %v567
      %v600 = vsel %vm536, %v496, %v568
      %v601 = vsel %vm537, %v498, %v569
      %v602 = vsel %vm538, %v501, %v570
      %v603 = vsel %vm539, %v503, %v571
      %v604 = vsel %vm540, %v506, %v572
      %v605 = vsel %vm541, %v508, %v573
      %v606 = vpack.c.bf16 %v574, %v574
      %v607 = vpack.c.bf16 %v575, %v575
      %v608 = vpack.c.bf16 %v576, %v576
      %v609 = vpack.c.bf16 %v577, %v577
      %v610 = vpack.c.bf16 %v578, %v578
      %v611 = vpack.c.bf16 %v579, %v579
      %v612 = vpack.c.bf16 %v580, %v580
      %v613 = vpack.c.bf16 %v581, %v581
      %v614 = vpack.c.bf16 %v582, %v582
      %v615 = vpack.c.bf16 %v583, %v583
      %v616 = vpack.c.bf16 %v584, %v584
      %v617 = vpack.c.bf16 %v585, %v585
      %v618 = vpack.c.bf16 %v586, %v586
      %v619 = vpack.c.bf16 %v587, %v587
      %v620 = vpack.c.bf16 %v588, %v588
      %v621 = vpack.c.bf16 %v589, %v589
      %v622 = vpack.c.bf16 %v590, %v590
      %v623 = vpack.c.bf16 %v591, %v591
      %v624 = vpack.c.bf16 %v592, %v592
      %v625 = vpack.c.bf16 %v593, %v593
      %v626 = vpack.c.bf16 %v594, %v594
      %v627 = vpack.c.bf16 %v595, %v595
      %v628 = vpack.c.bf16 %v596, %v596
      %v629 = vpack.c.bf16 %v597, %v597
      %v630 = vpack.c.bf16 %v598, %v598
      %v631 = vpack.c.bf16 %v599, %v599
      %v632 = vpack.c.bf16 %v600, %v600
      %v633 = vpack.c.bf16 %v601, %v601
      %v634 = vpack.c.bf16 %v602, %v602
      %v635 = vpack.c.bf16 %v603, %v603
      %v636 = vpack.c.bf16 %v604, %v604
      %v637 = vpack.c.bf16 %v605, %v605
      %638 = vst [vmem:[%s223] sm:$0xf] %v606
      %639 = vst [vmem:[%s223 + $0x4] sm:$0xf] %v607
      %640 = vst [vmem:[%s223 + $0x8] sm:$0xf] %v608
      %641 = vst [vmem:[%s223 + $0xc] sm:$0xf] %v609
      %642 = vst [vmem:[%s223 + $0x10] sm:$0xf] %v610
      %643 = vst [vmem:[%s223 + $0x14] sm:$0xf] %v611
      %644 = vst [vmem:[%s223 + $0x18] sm:$0xf] %v612
      %645 = vst [vmem:[%s223 + $0x1c] sm:$0xf] %v613
      %646 = vst [vmem:[%s223 + $0x20] sm:$0xf] %v614
      %647 = vst [vmem:[%s223 + $0x24] sm:$0xf] %v615
      %648 = vst [vmem:[%s223 + $0x28] sm:$0xf] %v616
      %649 = vst [vmem:[%s223 + $0x2c] sm:$0xf] %v617
      %650 = vst [vmem:[%s223 + $0x30] sm:$0xf] %v618
      %651 = vst [vmem:[%s223 + $0x34] sm:$0xf] %v619
      %652 = vst [vmem:[%s223 + $0x38] sm:$0xf] %v620
      %653 = vst [vmem:[%s223 + $0x3c] sm:$0xf] %v621
      %654 = vst [vmem:[%s223 + $0x40] sm:$0xf] %v622
      %655 = vst [vmem:[%s223 + $0x44] sm:$0xf] %v623
      %656 = vst [vmem:[%s223 + $0x48] sm:$0xf] %v624
      %657 = vst [vmem:[%s223 + $0x4c] sm:$0xf] %v625
      %658 = vst [vmem:[%s223 + $0x50] sm:$0xf] %v626
      %659 = vst [vmem:[%s223 + $0x54] sm:$0xf] %v627
      %660 = vst [vmem:[%s223 + $0x58] sm:$0xf] %v628
      %661 = vst [vmem:[%s223 + $0x5c] sm:$0xf] %v629
      %662 = vst [vmem:[%s223 + $0x60] sm:$0xf] %v630
      %663 = vst [vmem:[%s223 + $0x64] sm:$0xf] %v631
      %664 = vst [vmem:[%s223 + $0x68] sm:$0xf] %v632
      %665 = vst [vmem:[%s223 + $0x6c] sm:$0xf] %v633
      %666 = vst [vmem:[%s223 + $0x70] sm:$0xf] %v634
      %667 = vst [vmem:[%s223 + $0x74] sm:$0xf] %v635
      %668 = vst [vmem:[%s223 + $0x78] sm:$0xf] %v636
      %669 = vst [vmem:[%s223 + $0x7c] sm:$0xf] %v637
      %s670 = smul.u32 32, %s19
      %p671 = scmp.lt.s32.totalorder %s670, 63
      %s672 = scalar_select %p671, %s670, 63
      %p673 = scmp.lt.s32.totalorder %s18, 0
      %s674 = scalar_select %p673, %s18, 0
      %s675 = sadd.s32 %s674, %s672
      %s676 = smul.addr %s675, 4
      %s677 = scalar_lea.vmem %s3, %s676
      // Predicated region
      $region33: #{convolutional_set_forward.5} parent=31 // pred_check
        %p678 = pneg %p124
      $region34: #{convolutional_set_forward.5} parent=31 // pred_check_branch
        %680 = sbr.rel (%p678) target = $region36
      $region35: #{convolutional_set_forward.5} parent=31 // pred_region
        %s681 = smul.u32 32, %s19
      $region36: #{convolutional_set_forward.5} parent=31 // pred_fallthru
        _
    $region32: #{convolutional_set_forward.5} parent=5 // pred_fallthru
      _
    %p682 = scmp.le.s32.totalorder 2, %s9
    // Predicated region
    $region37: #{convolutional_set_forward.5} parent=5 // pred_check
      %p683 = pneg %p682
    $region38: #{convolutional_set_forward.5} parent=5 // pred_check_branch
      %685 = sbr.rel (%p683) target = $region40
    $region39: #{convolutional_set_forward.5} parent=5 // pred_region
      %s686 = ssub.s32 %s9, 2
      // Predicated region
      $region41: #{convolutional_set_forward.5} parent=39 // pred_check
        %p687 = pneg %p130
      $region42: #{convolutional_set_forward.5} parent=39 // pred_check_branch
        %689 = sbr.rel (%p687) target = $region44
      $region43: #{convolutional_set_forward.5} parent=39 // pred_region
        %s690 = smul.u32 32, %s21
        %p691 = scmp.lt.s32.totalorder %s690, 63
        %s692 = scalar_select %p691, %s690, 63
        %p693 = scmp.lt.s32.totalorder %s20, 0
        %s694 = scalar_select %p693, %s20, 0
        %s695 = sadd.s32 %s694, %s692
        %s696 = smul.addr %s695, 4
        %s697 = scalar_lea.vmem %s3, %s696
      $region44: #{convolutional_set_forward.5} parent=39 // pred_fallthru
        _
    $region40: #{convolutional_set_forward.5} parent=5 // pred_fallthru
      _
  $region6: #{convolutional_set_forward.5} parent=0 // loop_footer
    %s13 = sadd.s32 1, %s9
  $region7: #{convolutional_set_forward.5} parent=0 // loop_footer_branch
    %8 = sbr.rel target = $region3
  $region8: #{convolutional_set_forward.5} parent=0 // loop_exit
    _

// kernel: convolutional_set_forward.6
$region0: #{convolutional_set_forward.6}
  #allocation0 [shape = 'u32[]', space=smem, size = 0x4, offset = 0x4, fixed_abs, tag = 'smem constant byte address 0x4 - core index']
  #allocation1 [shape = 'u32[72,128]{1,0:T(1,128)}', space=vmem, size = 0x9000, scoped, tag = 'internal scratch']
  #allocation2 [shape = 'bf16[18,16,384]{2,1,0:T(8,128)(2,1)}', space=vmem, size = 0x36000, scoped, tag = 'scratch operand']
  #allocation3 [shape = 'f32[256,128]{1,0:T(8,128)}', space=vmem, size = 0x20000, scoped, tag = 'scratch operand']
  %s0 = inlined_call_operand.vmem [shape: bf16[2,18,18,128], index: 0, kind: input, shape index: {}]
  %s1 = inlined_call_operand.vmem [shape: bf16[3,384,128], index: 1, kind: input, shape index: {}]
  %s2 = inlined_call_operand.vmem [shape: f32[1,128], index: 2, kind: input, shape index: {}]
  %s3 = inlined_call_operand.vmem [shape: bf16[2,16,16,128], index: 3, kind: output, shape index: {}]
  %s4 = sld [smem:[#allocation0]]
  $region45: #{convolutional_set_forward.6} parent=0
    _
  %s6 = ssub.s32 1, %s4
  %s7 = scalar_select 0, %s6, %s4
  loop: start=0, step=1, limit=4
  $region2: #{convolutional_set_forward.6} parent=0 // loop_pre_header
    _
  $region3: #{convolutional_set_forward.6} parent=0 // loop_header
    %s9 = sphi 0, %s13
    %p10 = scmp.ge.s32.totalorder %s9, 4
    %s16 = sphi 0, %s28
    %s17 = sphi 0, %s24
    %s18 = sphi 0, %s16
    %s19 = sphi 0, %s17
    %s20 = sphi 0, %s18
    %s21 = sphi 0, %s19
    %s31 = sphi 0, %s33
    %s34 = sphi 0, %s31
    %s35 = sphi 0, %s34
    %s51 = sphi 0, %s35
    %s57 = sphi 0, %s59
    %s60 = sphi 0, %s57
    %s61 = sphi 0, %s60
    %s77 = sphi 0, %s61
    %s83 = sphi 0, %s85
    %s86 = sphi 0, %s83
    %s87 = sphi 0, %s86
    %s103 = sphi 0, %s87
    %s111 = sphi 0, %s113
    %s114 = sphi 0, %s111
    %s115 = sphi 0, %s114
    %s131 = sphi 0, %s115
  $region4: #{convolutional_set_forward.6} parent=0 // loop_header_branch
    %12 = sbr.rel (%p10) target = $region8
  $region5: #{convolutional_set_forward.6} parent=0 // loop_body
    %s14 = ssub.s32 %s9, 1
    %s15 = ssub.s32 %s9, 2
    %s22 = sadd.s32 1, %s17
    %p23 = scmp.ge.s32.totalorder %s22, 2
    %s24 = scalar_select %p23, 0, %s22
    %s25 = sadd.s32 1, %s16
    %s26 = scalar_select %p23, %s25, %s16
    %p27 = scmp.ge.s32.totalorder %s26, 1
    %s28 = scalar_select %p27, 0, %s26
    %s29 = ssub.s32 %s17, %s24
    %p30 = scmp.eq.s32.totalorder %s29, 0
    %s32 = sadd.s32 %s31, 1
    %s33 = scalar_select %p30, %s31, %s32
    %p36 = pneg %p30
    %p37 = scmp.eq.s32.totalorder %s9, 1
    %p38 = por %p36, %p37
    %p39 = scmp.ne.s32.totalorder %s31, %s34
    %p40 = scmp.eq.s32.totalorder %s9, 0
    %p41 = por %p39, %p40
    %p42 = scmp.ne.s32.totalorder %s31, %s34
    %p43 = scmp.eq.s32.totalorder %s14, 1
    %p44 = por %p42, %p43
    %p45 = scmp.ne.s32.totalorder %s34, %s35
    %p46 = scmp.eq.s32.totalorder %s14, 0
    %p47 = por %p45, %p46
    %p48 = scmp.ne.s32.totalorder %s34, %s35
    %p49 = scmp.eq.s32.totalorder %s15, 1
    %p50 = por %p48, %p49
    %p52 = scmp.ne.s32.totalorder %s35, %s51
    %p53 = scmp.eq.s32.totalorder %s15, 0
    %p54 = por %p52, %p53
    %s55 = ssub.s32 %s16, %s28
    %p56 = scmp.eq.s32.totalorder %s55, 0
    %s58 = sadd.s32 %s57, 1
    %s59 = scalar_select %p56, %s57, %s58
    %p62 = pneg %p56
    %p63 = scmp.eq.s32.totalorder %s9, 1
    %p64 = por %p62, %p63
    %p65 = scmp.ne.s32.totalorder %s57, %s60
    %p66 = scmp.eq.s32.totalorder %s9, 0
    %p67 = por %p65, %p66
    %p68 = scmp.ne.s32.totalorder %s57, %s60
    %p69 = scmp.eq.s32.totalorder %s14, 1
    %p70 = por %p68, %p69
    %p71 = scmp.ne.s32.totalorder %s60, %s61
    %p72 = scmp.eq.s32.totalorder %s14, 0
    %p73 = por %p71, %p72
    %p74 = scmp.ne.s32.totalorder %s60, %s61
    %p75 = scmp.eq.s32.totalorder %s15, 1
    %p76 = por %p74, %p75
    %p78 = scmp.ne.s32.totalorder %s61, %s77
    %p79 = scmp.eq.s32.totalorder %s15, 0
    %p80 = por %p78, %p79
    %s81 = ssub.s32 %s16, %s28
    %p82 = scmp.eq.s32.totalorder %s81, 0
    %s84 = sadd.s32 %s83, 1
    %s85 = scalar_select %p82, %s83, %s84
    %p88 = pneg %p82
    %p89 = scmp.eq.s32.totalorder %s9, 1
    %p90 = por %p88, %p89
    %p91 = scmp.ne.s32.totalorder %s83, %s86
    %p92 = scmp.eq.s32.totalorder %s9, 0
    %p93 = por %p91, %p92
    %p94 = scmp.ne.s32.totalorder %s83, %s86
    %p95 = scmp.eq.s32.totalorder %s14, 1
    %p96 = por %p94, %p95
    %p97 = scmp.ne.s32.totalorder %s86, %s87
    %p98 = scmp.eq.s32.totalorder %s14, 0
    %p99 = por %p97, %p98
    %p100 = scmp.ne.s32.totalorder %s86, %s87
    %p101 = scmp.eq.s32.totalorder %s15, 1
    %p102 = por %p100, %p101
    %p104 = scmp.ne.s32.totalorder %s87, %s103
    %p105 = scmp.eq.s32.totalorder %s15, 0
    %p106 = por %p104, %p105
    %s107 = ssub.s32 %s17, %s24
    %s108 = ssub.s32 %s16, %s28
    %s109 = sor.u32 %s107, %s108
    %p110 = scmp.eq.s32.totalorder %s109, 0
    %s112 = sadd.s32 %s111, 1
    %s113 = scalar_select %p110, %s111, %s112
    %p116 = pneg %p110
    %p117 = scmp.eq.s32.totalorder %s9, 1
    %p118 = por %p116, %p117
    %p119 = scmp.ne.s32.totalorder %s111, %s114
    %p120 = scmp.eq.s32.totalorder %s9, 0
    %p121 = por %p119, %p120
    %p122 = scmp.ne.s32.totalorder %s111, %s114
    %p123 = scmp.eq.s32.totalorder %s14, 1
    %p124 = por %p122, %p123
    %p125 = scmp.ne.s32.totalorder %s114, %s115
    %p126 = scmp.eq.s32.totalorder %s14, 0
    %p127 = por %p125, %p126
    %p128 = scmp.ne.s32.totalorder %s114, %s115
    %p129 = scmp.eq.s32.totalorder %s15, 1
    %p130 = por %p128, %p129
    %p132 = scmp.ne.s32.totalorder %s115, %s131
    %p133 = scmp.eq.s32.totalorder %s15, 0
    %p134 = por %p132, %p133
    %p135 = scmp.le.s32.totalorder 1, %s9
    %p136 = scmp.lt.s32.totalorder %s9, 3
    %p137 = pnand %p135, %p136
    %p138 = pneg %p137
    // Predicated region
    $region9: #{convolutional_set_forward.6} parent=5 // pred_check
      _
    $region10: #{convolutional_set_forward.6} parent=5 // pred_check_branch
      %140 = sbr.rel (%p137) target = $region12
    $region11: #{convolutional_set_forward.6} parent=5 // pred_region
      %s141 = ssub.s32 %s9, 1
      // Predicated region
      $region13: #{convolutional_set_forward.6} parent=11 // pred_check
        %p142 = pneg %p73
      $region14: #{convolutional_set_forward.6} parent=11 // pred_check_branch
        %144 = sbr.rel (%p142) target = $region16
      $region15: #{convolutional_set_forward.6} parent=11 // pred_region
        %p145 = scmp.lt.s32.totalorder %s18, 0
        %s146 = scalar_select %p145, %s18, 0
        %s147 = smul.addr %s146, 4
        %s148 = scalar_lea.vmem %s1, %s147
      $region16: #{convolutional_set_forward.6} parent=11 // pred_fallthru
        _
      // Predicated region
      $region17: #{convolutional_set_forward.6} parent=11 // pred_check
        %p149 = pneg %p99
      $region18: #{convolutional_set_forward.6} parent=11 // pred_check_branch
        %151 = sbr.rel (%p149) target = $region20
      $region19: #{convolutional_set_forward.6} parent=11 // pred_region
        %p152 = scmp.lt.s32.totalorder %s18, 0
        %s153 = scalar_select %p152, %s18, 0
        %s154 = scalar_lea.vmem %s2, %s153
      $region20: #{convolutional_set_forward.6} parent=11 // pred_fallthru
        _
    $region12: #{convolutional_set_forward.6} parent=5 // pred_fallthru
      _
    %p155 = scmp.lt.s32.totalorder %s9, 2
    // Predicated region
    $region21: #{convolutional_set_forward.6} parent=5 // pred_check
      %p156 = pneg %p155
    $region22: #{convolutional_set_forward.6} parent=5 // pred_check_branch
      %158 = sbr.rel (%p156) target = $region24
    $region23: #{convolutional_set_forward.6} parent=5 // pred_region
      // Predicated region
      $region25: #{convolutional_set_forward.6} parent=23 // pred_check
        %p159 = pneg %p41
      $region26: #{convolutional_set_forward.6} parent=23 // pred_check_branch
        %161 = sbr.rel (%p159) target = $region28
      $region27: #{convolutional_set_forward.6} parent=23 // pred_region
        %p162 = scmp.lt.s32.totalorder %s17, 1
        %s163 = scalar_select %p162, %s17, 1
        %s164 = smul.addr %s163, 54
        %s165 = smul.addr %s164, 4
        %s166 = scalar_lea.vmem %s0, %s165
      $region28: #{convolutional_set_forward.6} parent=23 // pred_fallthru
        _
    $region24: #{convolutional_set_forward.6} parent=5 // pred_fallthru
      _
    %p167 = scmp.le.s32.totalorder 1, %s9
    %p168 = scmp.lt.s32.totalorder %s9, 3
    %p169 = pnand %p167, %p168
    %p170 = pneg %p169
    // Predicated region
    $region29: #{convolutional_set_forward.6} parent=5 // pred_check
      _
    $region30: #{convolutional_set_forward.6} parent=5 // pred_check_branch
      %172 = sbr.rel (%p169) target = $region32
    $region31: #{convolutional_set_forward.6} parent=5 // pred_region
      %s173 = ssub.s32 %s9, 1
      %p174 = scmp.lt.s32.totalorder %s19, 1
      %s175 = scalar_select %p174, %s19, 1
      %s176 = smul.addr %s175, 54
      %s177 = smul.addr %s176, 4
      %s178 = scalar_lea.vmem %s0, %s177
      %p179 = pneg %p47
      %p180 = pneg %p44
      %p181 = scmp.lt.s32.totalorder %s18, 0
      %s182 = scalar_select %p181, %s18, 0
      %s183 = smul.addr %s182, 4
      %s184 = scalar_lea.vmem %s1, %s183
      %p185 = pneg %p73
      %p186 = pneg %p70
      %p187 = scmp.lt.s32.totalorder %s18, 0
      %s188 = scalar_select %p187, %s18, 0
      %s189 = scalar_lea.vmem %s2, %s188
      %p190 = pneg %p99
      %p191 = pneg %p96
      %p192 = pneg %p127
      %p193 = pneg %p124
      %p194 = scmp.lt.s32.totalorder %s19, 1
      %s195 = scalar_select %p194, %s19, 1
      %p196 = scmp.lt.s32.totalorder %s18, 0
      %s197 = scalar_select %p196, %s18, 0
      %s198 = smul.addr %s195, 32
      %s199 = sadd.s32 %s197, %s198
      %s200 = smul.addr %s199, 4
      %s201 = scalar_lea.vmem %s3, %s200
      %p202 = scmp.lt.s32.totalorder %s19, 1
      %s203 = scalar_select %p202, %s19, 1
      %s204 = smul.addr %s203, 54
      %s205 = smul.addr %s204, 4
      %s206 = scalar_lea.vmem %s0, %s205
      %p207 = scmp.lt.s32.totalorder %s18, 0
      %s208 = scalar_select %p207, %s18, 0
      %s209 = smul.addr %s208, 4
      %s210 = scalar_lea.vmem %s1, %s209
      %p211 = scmp.lt.s32.totalorder %s18, 0
      %s212 = scalar_select %p211, %s18, 0
      %s213 = scalar_lea.vmem %s2, %s212
      %p214 = scmp.lt.s32.totalorder %s19, 1
      %s215 = scalar_select %p214, %s19, 1
      %p216 = scmp.lt.s32.totalorder %s18, 0
      %s217 = scalar_select %p216, %s18, 0
      %s218 = smul.addr %s215, 32
      %s219 = sadd.s32 %s217, %s218
      %s220 = smul.addr %s219, 4
      %s221 = scalar_lea.vmem %s3, %s220
      %v222 = vld [vmem:[%s206] sm:$0xf]
      %v223 = vld [vmem:[%s206 + $0x4] sm:$0xf]
      %v224 = vld [vmem:[%s206 + $0xc] sm:$0xf]
      %v225 = vld [vmem:[%s206 + $0x10] sm:$0xf]
      %v226 = vld [vmem:[%s206 + $0x18] sm:$0xf]
      %v227 = vld [vmem:[%s206 + $0x1c] sm:$0xf]
      %v228 = vld [vmem:[%s206 + $0x24] sm:$0xf]
      %v229 = vld [vmem:[%s206 + $0x28] sm:$0xf]
      %v230 = vld [vmem:[%s206 + $0x30] sm:$0xf]
      %v231 = vld [vmem:[%s206 + $0x34] sm:$0xf]
      %v232 = vld [vmem:[%s206 + $0x3c] sm:$0xf]
      %v233 = vld [vmem:[%s206 + $0x40] sm:$0xf]
      %v234 = vld [vmem:[%s206 + $0x48] sm:$0xf]
      %v235 = vld [vmem:[%s206 + $0x4c] sm:$0xf]
      %v236 = vld [vmem:[%s206 + $0x54] sm:$0xf]
      %v237 = vld [vmem:[%s206 + $0x58] sm:$0xf]
      %v238 = vld [vmem:[%s206 + $0x60] sm:$0xf]
      %v239 = vld [vmem:[%s206 + $0x64] sm:$0xf]
      %v240 = vld [vmem:[%s206 + $0x6c] sm:$0xf]
      %v241 = vld [vmem:[%s206 + $0x70] sm:$0xf]
      %v242 = vld [vmem:[%s206 + $0x78] sm:$0xf]
      %v243 = vld [vmem:[%s206 + $0x7c] sm:$0xf]
      %v244 = vld [vmem:[%s206 + $0x84] sm:$0xf]
      %v245 = vld [vmem:[%s206 + $0x88] sm:$0xf]
      %v246 = vld [vmem:[%s206 + $0x90] sm:$0xf]
      %v247 = vld [vmem:[%s206 + $0x94] sm:$0xf]
      %v248 = vld [vmem:[%s206 + $0x9c] sm:$0xf]
      %v249 = vld [vmem:[%s206 + $0xa0] sm:$0xf]
      %v250 = vld [vmem:[%s206 + $0xa8] sm:$0xf]
      %v251 = vld [vmem:[%s206 + $0xac] sm:$0xf]
      %v252 = vld [vmem:[%s206 + $0xb4] sm:$0xf]
      %v253 = vld [vmem:[%s206 + $0xb8] sm:$0xf]
      %v254 = vld [vmem:[%s206 + $0xc0] sm:$0xf]
      %v255 = vld [vmem:[%s206 + $0xc4] sm:$0xf]
      %v256 = vld [vmem:[%s206 + $0xcc] sm:$0xf]
      %v257 = vld [vmem:[%s206 + $0xd0] sm:$0xf]
      %258 = vst [vmem:[#allocation2] sm:$0xf] %v222
      %259 = vst [vmem:[#allocation2 + $0xc] sm:$0xf] %v223
      %260 = vst [vmem:[#allocation2 + $0x18] sm:$0xf] %v224
      %261 = vst [vmem:[#allocation2 + $0x24] sm:$0xf] %v225
      %262 = vst [vmem:[#allocation2 + $0x30] sm:$0xf] %v226
      %263 = vst [vmem:[#allocation2 + $0x3c] sm:$0xf] %v227
      %264 = vst [vmem:[#allocation2 + $0x48] sm:$0xf] %v228
      %265 = vst [vmem:[#allocation2 + $0x54] sm:$0xf] %v229
      %266 = vst [vmem:[#allocation2 + $0x60] sm:$0xf] %v230
      %267 = vst [vmem:[#allocation2 + $0x6c] sm:$0xf] %v231
      %268 = vst [vmem:[#allocation2 + $0x78] sm:$0xf] %v232
      %269 = vst [vmem:[#allocation2 + $0x84] sm:$0xf] %v233
      %270 = vst [vmem:[#allocation2 + $0x90] sm:$0xf] %v234
      %271 = vst [vmem:[#allocation2 + $0x9c] sm:$0xf] %v235
      %272 = vst [vmem:[#allocation2 + $0xa8] sm:$0xf] %v236
      %273 = vst [vmem:[#allocation2 + $0xb4] sm:$0xf] %v237
      %274 = vst [vmem:[#allocation2 + $0xc0] sm:$0xf] %v238
      %275 = vst [vmem:[#allocation2 + $0xcc] sm:$0xf] %v239
      %276 = vst [vmem:[#allocation2 + $0xd8] sm:$0xf] %v240
      %277 = vst [vmem:[#allocation2 + $0xe4] sm:$0xf] %v241
      %278 = vst [vmem:[#allocation2 + $0xf0] sm:$0xf] %v242
      %279 = vst [vmem:[#allocation2 + $0xfc] sm:$0xf] %v243
      %280 = vst [vmem:[#allocation2 + $0x108] sm:$0xf] %v244
      %281 = vst [vmem:[#allocation2 + $0x114] sm:$0xf] %v245
      %282 = vst [vmem:[#allocation2 + $0x120] sm:$0xf] %v246
      %283 = vst [vmem:[#allocation2 + $0x12c] sm:$0xf] %v247
      %284 = vst [vmem:[#allocation2 + $0x138] sm:$0xf] %v248
      %285 = vst [vmem:[#allocation2 + $0x144] sm:$0xf] %v249
      %286 = vst [vmem:[#allocation2 + $0x150] sm:$0xf] %v250
      %287 = vst [vmem:[#allocation2 + $0x15c] sm:$0xf] %v251
      %288 = vst [vmem:[#allocation2 + $0x168] sm:$0xf] %v252
      %289 = vst [vmem:[#allocation2 + $0x174] sm:$0xf] %v253
      %290 = vst [vmem:[#allocation2 + $0x180] sm:$0xf] %v254
      %291 = vst [vmem:[#allocation2 + $0x18c] sm:$0xf] %v255
      %292 = vst [vmem:[#allocation2 + $0x198] sm:$0xf] %v256
      %293 = vst [vmem:[#allocation2 + $0x1a4] sm:$0xf] %v257
      %v294 = vld [vmem:[%s206] sm:$0xf]
      %v295 = vld [vmem:[%s206 + $0x4] sm:$0xf]
      %v296 = vld [vmem:[%s206 + $0x8] sm:$0x1]
      %v297 = vld [vmem:[%s206 + $0xc] sm:$0xf]
      %v298 = vld [vmem:[%s206 + $0x10] sm:$0xf]
      %v299 = vld [vmem:[%s206 + $0x14] sm:$0x1]
      %v300 = vld [vmem:[%s206 + $0x18] sm:$0xf]
      %v301 = vld [vmem:[%s206 + $0x1c] sm:$0xf]
      %v302 = vld [vmem:[%s206 + $0x20] sm:$0x1]
      %v303 = vld [vmem:[%s206 + $0x24] sm:$0xf]
      %v304 = vld [vmem:[%s206 + $0x28] sm:$0xf]
      %v305 = vld [vmem:[%s206 + $0x2c] sm:$0x1]
      %v306 = vld [vmem:[%s206 + $0x30] sm:$0xf]
      %v307 = vld [vmem:[%s206 + $0x34] sm:$0xf]
      %v308 = vld [vmem:[%s206 + $0x38] sm:$0x1]
      %v309 = vld [vmem:[%s206 + $0x3c] sm:$0xf]
      %v310 = vld [vmem:[%s206 + $0x40] sm:$0xf]
      %v311 = vld [vmem:[%s206 + $0x44] sm:$0x1]
      %v312 = vld [vmem:[%s206 + $0x48] sm:$0xf]
      %v313 = vld [vmem:[%s206 + $0x4c] sm:$0xf]
      %v314 = vld [vmem:[%s206 + $0x50] sm:$0x1]
      %v315 = vld [vmem:[%s206 + $0x54] sm:$0xf]
      %v316 = vld [vmem:[%s206 + $0x58] sm:$0xf]
      %v317 = vld [vmem:[%s206 + $0x5c] sm:$0x1]
      %v318 = vld [vmem:[%s206 + $0x60] sm:$0xf]
      %v319 = vld [vmem:[%s206 + $0x64] sm:$0xf]
      %v320 = vld [vmem:[%s206 + $0x68] sm:$0x1]
      %v321 = vld [vmem:[%s206 + $0x6c] sm:$0xf]
      %v322 = vld [vmem:[%s206 + $0x70] sm:$0xf]
      %v323 = vld [vmem:[%s206 + $0x74] sm:$0x1]
      %v324 = vld [vmem:[%s206 + $0x78] sm:$0xf]
      %v325 = vld [vmem:[%s206 + $0x7c] sm:$0xf]
      %v326 = vld [vmem:[%s206 + $0x80] sm:$0x1]
      %v327 = vld [vmem:[%s206 + $0x84] sm:$0xf]
      %v328 = vld [vmem:[%s206 + $0x88] sm:$0xf]
      %v329 = vld [vmem:[%s206 + $0x8c] sm:$0x1]
      %v330 = vld [vmem:[%s206 + $0x90] sm:$0xf]
      %v331 = vld [vmem:[%s206 + $0x94] sm:$0xf]
      %v332 = vld [vmem:[%s206 + $0x98] sm:$0x1]
      %v333 = vld [vmem:[%s206 + $0x9c] sm:$0xf]
      %v334 = vld [vmem:[%s206 + $0xa0] sm:$0xf]
      %v335 = vld [vmem:[%s206 + $0xa4] sm:$0x1]
      %v336 = vld [vmem:[%s206 + $0xa8] sm:$0xf]
      %v337 = vld [vmem:[%s206 + $0xac] sm:$0xf]
      %v338 = vld [vmem:[%s206 + $0xb0] sm:$0x1]
      %v339 = vld [vmem:[%s206 + $0xb4] sm:$0xf]
      %v340 = vld [vmem:[%s206 + $0xb8] sm:$0xf]
      %v341 = vld [vmem:[%s206 + $0xbc] sm:$0x1]
      %v342 = vld [vmem:[%s206 + $0xc0] sm:$0xf]
      %v343 = vld [vmem:[%s206 + $0xc4] sm:$0xf]
      %v344 = vld [vmem:[%s206 + $0xc8] sm:$0x1]
      %v345 = vld [vmem:[%s206 + $0xcc] sm:$0xf]
      %v346 = vld [vmem:[%s206 + $0xd0] sm:$0xf]
      %v347 = vld [vmem:[%s206 + $0xd4] sm:$0x1]
      %vm348 = vsmask.f32 3328
      %vm349 = vsmask.f32 7440
      %vm350 = vmor %vm348, %vm349
      %v352 = vshrl.u32 %v294, 16
      %v354 = vrot.slane %v352, 4
      %v355 = vshll.u32 %v294, 16
      %v357 = vrot.slane %v355, 5
      %v358 = vor.u32 %v354, %v357
      %v359 = vrot.slane %v358, 4
      %v361 = vshll.u32 %v295, 16
      %v363 = vrot.slane %v361, 5
      %v364 = vsel %vm350, %v359, %v363
      %v365 = vshrl.u32 %v295, 16
      %v367 = vrot.slane %v365, 4
      %v368 = vor.u32 %v367, %v363
      %v369 = vrot.slane %v368, 4
      %v371 = vshll.u32 %v296, 16
      %v373 = vrot.slane %v371, 5
      %v374 = vsel %vm350, %v369, %v373
      %v376 = vshrl.u32 %v297, 16
      %v378 = vrot.slane %v376, 4
      %v379 = vshll.u32 %v297, 16
      %v381 = vrot.slane %v379, 5
      %v382 = vor.u32 %v378, %v381
      %v383 = vrot.slane %v382, 4
      %v385 = vshll.u32 %v298, 16
      %v387 = vrot.slane %v385, 5
      %v388 = vsel %vm350, %v383, %v387
      %v389 = vshrl.u32 %v298, 16
      %v391 = vrot.slane %v389, 4
      %v392 = vor.u32 %v391, %v387
      %v393 = vrot.slane %v392, 4
      %v395 = vshll.u32 %v299, 16
      %v397 = vrot.slane %v395, 5
      %v398 = vsel %vm350, %v393, %v397
      %v400 = vshrl.u32 %v300, 16
      %v402 = vrot.slane %v400, 4
      %v403 = vshll.u32 %v300, 16
      %v405 = vrot.slane %v403, 5
      %v406 = vor.u32 %v402, %v405
      %v407 = vrot.slane %v406, 4
      %v409 = vshll.u32 %v301, 16
      %v411 = vrot.slane %v409, 5
      %v412 = vsel %vm350, %v407, %v411
      %v413 = vshrl.u32 %v301, 16
      %v415 = vrot.slane %v413, 4
      %v416 = vor.u32 %v415, %v411
      %v417 = vrot.slane %v416, 4
      %v419 = vshll.u32 %v302, 16
      %v421 = vrot.slane %v419, 5
      %v422 = vsel %vm350, %v417, %v421
      %v424 = vshrl.u32 %v303, 16
      %v426 = vrot.slane %v424, 4
      %v427 = vshll.u32 %v303, 16
      %v429 = vrot.slane %v427, 5
      %v430 = vor.u32 %v426, %v429
      %v431 = vrot.slane %v430, 4
      %v433 = vshll.u32 %v304, 16
      %v435 = vrot.slane %v433, 5
      %v436 = vsel %vm350, %v431, %v435
      %v437 = vshrl.u32 %v304, 16
      %v439 = vrot.slane %v437, 4
      %v440 = vor.u32 %v439, %v435
      %v441 = vrot.slane %v440, 4
      %v443 = vshll.u32 %v305, 16
      %v445 = vrot.slane %v443, 5
      %v446 = vsel %vm350, %v441, %v445
      %v448 = vshrl.u32 %v306, 16
      %v450 = vrot.slane %v448, 4
      %v451 = vshll.u32 %v306, 16
      %v453 = vrot.slane %v451, 5
      %v454 = vor.u32 %v450, %v453
      %v455 = vrot.slane %v454, 4
      %v457 = vshll.u32 %v307, 16
      %v459 = vrot.slane %v457, 5
      %v460 = vsel %vm350, %v455, %v459
      %v461 = vshrl.u32 %v307, 16
      %v463 = vrot.slane %v461, 4
      %v464 = vor.u32 %v463, %v459
      %v465 = vrot.slane %v464, 4
      %v467 = vshll.u32 %v308, 16
      %v469 = vrot.slane %v467, 5
      %v470 = vsel %vm350, %v465, %v469
      %v472 = vshrl.u32 %v309, 16
      %v474 = vrot.slane %v472, 4
      %v475 = vshll.u32 %v309, 16
      %v477 = vrot.slane %v475, 5
      %v478 = vor.u32 %v474, %v477
      %v479 = vrot.slane %v478, 4
      %v481 = vshll.u32 %v310, 16
      %v483 = vrot.slane %v481, 5
      %v484 = vsel %vm350, %v479, %v483
      %v485 = vshrl.u32 %v310, 16
      %v487 = vrot.slane %v485, 4
      %v488 = vor.u32 %v487, %v483
      %v489 = vrot.slane %v488, 4
      %v491 = vshll.u32 %v311, 16
      %v493 = vrot.slane %v491, 5
      %v494 = vsel %vm350, %v489, %v493
      %v496 = vshrl.u32 %v312, 16
      %v498 = vrot.slane %v496, 4
      %v499 = vshll.u32 %v312, 16
      %v501 = vrot.slane %v499, 5
      %v502 = vor.u32 %v498, %v501
      %v503 = vrot.slane %v502, 4
      %v505 = vshll.u32 %v313, 16
      %v507 = vrot.slane %v505, 5
      %v508 = vsel %vm350, %v503, %v507
      %v509 = vshrl.u32 %v313, 16
      %v511 = vrot.slane %v509, 4
      %v512 = vor.u32 %v511, %v507
      %v513 = vrot.slane %v512, 4
      %v515 = vshll.u32 %v314, 16
      %v517 = vrot.slane %v515, 5
      %v518 = vsel %vm350, %v513, %v517
      %v520 = vshrl.u32 %v315, 16
      %v522 = vrot.slane %v520, 4
      %v523 = vshll.u32 %v315, 16
      %v525 = vrot.slane %v523, 5
      %v526 = vor.u32 %v522, %v525
      %v527 = vrot.slane %v526, 4
      %v529 = vshll.u32 %v316, 16
      %v531 = vrot.slane %v529, 5
      %v532 = vsel %vm350, %v527, %v531
      %v533 = vshrl.u32 %v316, 16
      %v535 = vrot.slane %v533, 4
      %v536 = vor.u32 %v535, %v531
      %v537 = vrot.slane %v536, 4
      %v539 = vshll.u32 %v317, 16
      %v541 = vrot.slane %v539, 5
      %v542 = vsel %vm350, %v537, %v541
      %v544 = vshrl.u32 %v318, 16
      %v546 = vrot.slane %v544, 4
      %v547 = vshll.u32 %v318, 16
      %v549 = vrot.slane %v547, 5
      %v550 = vor.u32 %v546, %v549
      %v551 = vrot.slane %v550, 4
      %v553 = vshll.u32 %v319, 16
      %v555 = vrot.slane %v553, 5
      %v556 = vsel %vm350, %v551, %v555
      %v557 = vshrl.u32 %v319, 16
      %v559 = vrot.slane %v557, 4
      %v560 = vor.u32 %v559, %v555
      %v561 = vrot.slane %v560, 4
      %v563 = vshll.u32 %v320, 16
      %v565 = vrot.slane %v563, 5
      %v566 = vsel %vm350, %v561, %v565
      %v568 = vshrl.u32 %v321, 16
      %v570 = vrot.slane %v568, 4
      %v571 = vshll.u32 %v321, 16
      %v573 = vrot.slane %v571, 5
      %v574 = vor.u32 %v570, %v573
      %v575 = vrot.slane %v574, 4
      %v577 = vshll.u32 %v322, 16
      %v579 = vrot.slane %v577, 5
      %v580 = vsel %vm350, %v575, %v579
      %v581 = vshrl.u32 %v322, 16
      %v583 = vrot.slane %v581, 4
      %v584 = vor.u32 %v583, %v579
      %v585 = vrot.slane %v584, 4
      %v587 = vshll.u32 %v323, 16
      %v589 = vrot.slane %v587, 5
      %v590 = vsel %vm350, %v585, %v589
      %v592 = vshrl.u32 %v324, 16
      %v594 = vrot.slane %v592, 4
      %v595 = vshll.u32 %v324, 16
      %v597 = vrot.slane %v595, 5
      %v598 = vor.u32 %v594, %v597
      %v599 = vrot.slane %v598, 4
      %v601 = vshll.u32 %v325, 16
      %v603 = vrot.slane %v601, 5
      %v604 = vsel %vm350, %v599, %v603
      %v605 = vshrl.u32 %v325, 16
      %v607 = vrot.slane %v605, 4
      %v608 = vor.u32 %v607, %v603
      %v609 = vrot.slane %v608, 4
      %v611 = vshll.u32 %v326, 16
      %v613 = vrot.slane %v611, 5
      %v614 = vsel %vm350, %v609, %v613
      %v616 = vshrl.u32 %v327, 16
      %v618 = vrot.slane %v616, 4
      %v619 = vshll.u32 %v327, 16
      %v621 = vrot.slane %v619, 5
      %v622 = vor.u32 %v618, %v621
      %v623 = vrot.slane %v622, 4
      %v625 = vshll.u32 %v328, 16
      %v627 = vrot.slane %v625, 5
      %v628 = vsel %vm350, %v623, %v627
      %v629 = vshrl.u32 %v328, 16
      %v631 = vrot.slane %v629, 4
      %v632 = vor.u32 %v631, %v627
      %v633 = vrot.slane %v632, 4
      %v635 = vshll.u32 %v329, 16
      %v637 = vrot.slane %v635, 5
      %v638 = vsel %vm350, %v633, %v637
      %v640 = vshrl.u32 %v330, 16
      %v642 = vrot.slane %v640, 4
      %v643 = vshll.u32 %v330, 16
      %v645 = vrot.slane %v643, 5
      %v646 = vor.u32 %v642, %v645
      %v647 = vrot.slane %v646, 4
      %v649 = vshll.u32 %v331, 16
      %v651 = vrot.slane %v649, 5
      %v652 = vsel %vm350, %v647, %v651
      %v653 = vshrl.u32 %v331, 16
      %v655 = vrot.slane %v653, 4
      %v656 = vor.u32 %v655, %v651
      %v657 = vrot.slane %v656, 4
      %v659 = vshll.u32 %v332, 16
      %v661 = vrot.slane %v659, 5
      %v662 = vsel %vm350, %v657, %v661
      %v664 = vshrl.u32 %v333, 16
      %v666 = vrot.slane %v664, 4
      %v667 = vshll.u32 %v333, 16
      %v669 = vrot.slane %v667, 5
      %v670 = vor.u32 %v666, %v669
      %v671 = vrot.slane %v670, 4
      %v673 = vshll.u32 %v334, 16
      %v675 = vrot.slane %v673, 5
      %v676 = vsel %vm350, %v671, %v675
      %v677 = vshrl.u32 %v334, 16
      %v679 = vrot.slane %v677, 4
      %v680 = vor.u32 %v679, %v675
      %v681 = vrot.slane %v680, 4
      %v683 = vshll.u32 %v335, 16
      %v685 = vrot.slane %v683, 5
      %v686 = vsel %vm350, %v681, %v685
      %v688 = vshrl.u32 %v336, 16
      %v690 = vrot.slane %v688, 4
      %v691 = vshll.u32 %v336, 16
      %v693 = vrot.slane %v691, 5
      %v694 = vor.u32 %v690, %v693
      %v695 = vrot.slane %v694, 4
      %v697 = vshll.u32 %v337, 16
      %v699 = vrot.slane %v697, 5
      %v700 = vsel %vm350, %v695, %v699
      %v701 = vshrl.u32 %v337, 16
      %v703 = vrot.slane %v701, 4
      %v704 = vor.u32 %v703, %v699
      %v705 = vrot.slane %v704, 4
      %v707 = vshll.u32 %v338, 16
      %v709 = vrot.slane %v707, 5
      %v710 = vsel %vm350, %v705, %v709
      %v712 = vshrl.u32 %v339, 16
      %v714 = vrot.slane %v712, 4
      %v715 = vshll.u32 %v339, 16
      %v717 = vrot.slane %v715, 5
      %v718 = vor.u32 %v714, %v717
      %v719 = vrot.slane %v718, 4
      %v721 = vshll.u32 %v340, 16
      %v723 = vrot.slane %v721, 5
      %v724 = vsel %vm350, %v719, %v723
      %v725 = vshrl.u32 %v340, 16
      %v727 = vrot.slane %v725, 4
      %v728 = vor.u32 %v727, %v723
      %v729 = vrot.slane %v728, 4
      %v731 = vshll.u32 %v341, 16
      %v733 = vrot.slane %v731, 5
      %v734 = vsel %vm350, %v729, %v733
      %v736 = vshrl.u32 %v342, 16
      %v738 = vrot.slane %v736, 4
      %v739 = vshll.u32 %v342, 16
      %v741 = vrot.slane %v739, 5
      %v742 = vor.u32 %v738, %v741
      %v743 = vrot.slane %v742, 4
      %v745 = vshll.u32 %v343, 16
      %v747 = vrot.slane %v745, 5
      %v748 = vsel %vm350, %v743, %v747
      %v749 = vshrl.u32 %v343, 16
      %v751 = vrot.slane %v749, 4
      %v752 = vor.u32 %v751, %v747
      %v753 = vrot.slane %v752, 4
      %v755 = vshll.u32 %v344, 16
      %v757 = vrot.slane %v755, 5
      %v758 = vsel %vm350, %v753, %v757
      %v760 = vshrl.u32 %v345, 16
      %v762 = vrot.slane %v760, 4
      %v763 = vshll.u32 %v345, 16
      %v765 = vrot.slane %v763, 5
      %v766 = vor.u32 %v762, %v765
      %v767 = vrot.slane %v766, 4
      %v769 = vshll.u32 %v346, 16
      %v771 = vrot.slane %v769, 5
      %v772 = vsel %vm350, %v767, %v771
      %v773 = vshrl.u32 %v346, 16
      %v775 = vrot.slane %v773, 4
      %v776 = vor.u32 %v775, %v771
      %v777 = vrot.slane %v776, 4
      %v779 = vshll.u32 %v347, 16
      %v781 = vrot.slane %v779, 5
      %v782 = vsel %vm350, %v777, %v781
      %819 = vst [vmem:[#allocation2 + $0x4] sm:$0xf] %v364
      %820 = vst [vmem:[#allocation2 + $0x10] sm:$0xf] %v374
      %821 = vst [vmem:[#allocation2 + $0x1c] sm:$0xf] %v388
      %822 = vst [vmem:[#allocation2 + $0x28] sm:$0xf] %v398
      %823 = vst [vmem:[#allocation2 + $0x34] sm:$0xf] %v412
      %824 = vst [vmem:[#allocation2 + $0x40] sm:$0xf] %v422
      %825 = vst [vmem:[#allocation2 + $0x4c] sm:$0xf] %v436
      %826 = vst [vmem:[#allocation2 + $0x58] sm:$0xf] %v446
      %827 = vst [vmem:[#allocation2 + $0x64] sm:$0xf] %v460
      %828 = vst [vmem:[#allocation2 + $0x70] sm:$0xf] %v470
      %829 = vst [vmem:[#allocation2 + $0x7c] sm:$0xf] %v484
      %830 = vst [vmem:[#allocation2 + $0x88] sm:$0xf] %v494
      %831 = vst [vmem:[#allocation2 + $0x94] sm:$0xf] %v508
      %832 = vst [vmem:[#allocation2 + $0xa0] sm:$0xf] %v518
      %833 = vst [vmem:[#allocation2 + $0xac] sm:$0xf] %v532
      %834 = vst [vmem:[#allocation2 + $0xb8] sm:$0xf] %v542
      %835 = vst [vmem:[#allocation2 + $0xc4] sm:$0xf] %v556
      %836 = vst [vmem:[#allocation2 + $0xd0] sm:$0xf] %v566
      %837 = vst [vmem:[#allocation2 + $0xdc] sm:$0xf] %v580
      %838 = vst [vmem:[#allocation2 + $0xe8] sm:$0xf] %v590
      %839 = vst [vmem:[#allocation2 + $0xf4] sm:$0xf] %v604
      %840 = vst [vmem:[#allocation2 + $0x100] sm:$0xf] %v614
      %841 = vst [vmem:[#allocation2 + $0x10c] sm:$0xf] %v628
      %842 = vst [vmem:[#allocation2 + $0x118] sm:$0xf] %v638
      %843 = vst [vmem:[#allocation2 + $0x124] sm:$0xf] %v652
      %844 = vst [vmem:[#allocation2 + $0x130] sm:$0xf] %v662
      %845 = vst [vmem:[#allocation2 + $0x13c] sm:$0xf] %v676
      %846 = vst [vmem:[#allocation2 + $0x148] sm:$0xf] %v686
      %847 = vst [vmem:[#allocation2 + $0x154] sm:$0xf] %v700
      %848 = vst [vmem:[#allocation2 + $0x160] sm:$0xf] %v710
      %849 = vst [vmem:[#allocation2 + $0x16c] sm:$0xf] %v724
      %850 = vst [vmem:[#allocation2 + $0x178] sm:$0xf] %v734
      %851 = vst [vmem:[#allocation2 + $0x184] sm:$0xf] %v748
      %852 = vst [vmem:[#allocation2 + $0x190] sm:$0xf] %v758
      %853 = vst [vmem:[#allocation2 + $0x19c] sm:$0xf] %v772
      %854 = vst [vmem:[#allocation2 + $0x1a8] sm:$0xf] %v782
      %v855 = vld [vmem:[%s206] sm:$0xe]
      %v856 = vld [vmem:[%s206 + $0x4] sm:$0xf]
      %v857 = vld [vmem:[%s206 + $0x8] sm:$0x1]
      %v858 = vld [vmem:[%s206 + $0xc] sm:$0xe]
      %v859 = vld [vmem:[%s206 + $0x10] sm:$0xf]
      %v860 = vld [vmem:[%s206 + $0x14] sm:$0x1]
      %v861 = vld [vmem:[%s206 + $0x18] sm:$0xe]
      %v862 = vld [vmem:[%s206 + $0x1c] sm:$0xf]
      %v863 = vld [vmem:[%s206 + $0x20] sm:$0x1]
      %v864 = vld [vmem:[%s206 + $0x24] sm:$0xe]
      %v865 = vld [vmem:[%s206 + $0x28] sm:$0xf]
      %v866 = vld [vmem:[%s206 + $0x2c] sm:$0x1]
      %v867 = vld [vmem:[%s206 + $0x30] sm:$0xe]
      %v868 = vld [vmem:[%s206 + $0x34] sm:$0xf]
      %v869 = vld [vmem:[%s206 + $0x38] sm:$0x1]
      %v870 = vld [vmem:[%s206 + $0x3c] sm:$0xe]
      %v871 = vld [vmem:[%s206 + $0x40] sm:$0xf]
      %v872 = vld [vmem:[%s206 + $0x44] sm:$0x1]
      %v873 = vld [vmem:[%s206 + $0x48] sm:$0xe]
      %v874 = vld [vmem:[%s206 + $0x4c] sm:$0xf]
      %v875 = vld [vmem:[%s206 + $0x50] sm:$0x1]
      %v876 = vld [vmem:[%s206 + $0x54] sm:$0xe]
      %v877 = vld [vmem:[%s206 + $0x58] sm:$0xf]
      %v878 = vld [vmem:[%s206 + $0x5c] sm:$0x1]
      %v879 = vld [vmem:[%s206 + $0x60] sm:$0xe]
      %v880 = vld [vmem:[%s206 + $0x64] sm:$0xf]
      %v881 = vld [vmem:[%s206 + $0x68] sm:$0x1]
      %v882 = vld [vmem:[%s206 + $0x6c] sm:$0xe]
      %v883 = vld [vmem:[%s206 + $0x70] sm:$0xf]
      %v884 = vld [vmem:[%s206 + $0x74] sm:$0x1]
      %v885 = vld [vmem:[%s206 + $0x78] sm:$0xe]
      %v886 = vld [vmem:[%s206 + $0x7c] sm:$0xf]
      %v887 = vld [vmem:[%s206 + $0x80] sm:$0x1]
      %v888 = vld [vmem:[%s206 + $0x84] sm:$0xe]
      %v889 = vld [vmem:[%s206 + $0x88] sm:$0xf]
      %v890 = vld [vmem:[%s206 + $0x8c] sm:$0x1]
      %v891 = vld [vmem:[%s206 + $0x90] sm:$0xe]
      %v892 = vld [vmem:[%s206 + $0x94] sm:$0xf]
      %v893 = vld [vmem:[%s206 + $0x98] sm:$0x1]
      %v894 = vld [vmem:[%s206 + $0x9c] sm:$0xe]
      %v895 = vld [vmem:[%s206 + $0xa0] sm:$0xf]
      %v896 = vld [vmem:[%s206 + $0xa4] sm:$0x1]
      %v897 = vld [vmem:[%s206 + $0xa8] sm:$0xe]
      %v898 = vld [vmem:[%s206 + $0xac] sm:$0xf]
      %v899 = vld [vmem:[%s206 + $0xb0] sm:$0x1]
      %v900 = vld [vmem:[%s206 + $0xb4] sm:$0xe]
      %v901 = vld [vmem:[%s206 + $0xb8] sm:$0xf]
      %v902 = vld [vmem:[%s206 + $0xbc] sm:$0x1]
      %v903 = vld [vmem:[%s206 + $0xc0] sm:$0xe]
      %v904 = vld [vmem:[%s206 + $0xc4] sm:$0xf]
      %v905 = vld [vmem:[%s206 + $0xc8] sm:$0x1]
      %v906 = vld [vmem:[%s206 + $0xcc] sm:$0xe]
      %v907 = vld [vmem:[%s206 + $0xd0] sm:$0xf]
      %v908 = vld [vmem:[%s206 + $0xd4] sm:$0x1]
      %vm963 = vcmask 1042432
      %vm964 = vcmask 1046532
      %vm965 = vmor %vm963, %vm964
      %v966 = vrot.slane %v855, 5
      %v967 = vrot.slane %v966, 4
      %v968 = vrot.slane %v856, 5
      %v969 = vsel %vm965, %v967, %v968
      %v970 = vrot.slane %v968, 4
      %v971 = vrot.slane %v857, 5
      %v972 = vsel %vm965, %v970, %v971
      %v973 = vrot.slane %v858, 5
      %v974 = vrot.slane %v973, 4
      %v975 = vrot.slane %v859, 5
      %v976 = vsel %vm965, %v974, %v975
      %v977 = vrot.slane %v975, 4
      %v978 = vrot.slane %v860, 5
      %v979 = vsel %vm965, %v977, %v978
      %v980 = vrot.slane %v861, 5
      %v981 = vrot.slane %v980, 4
      %v982 = vrot.slane %v862, 5
      %v983 = vsel %vm965, %v981, %v982
      %v984 = vrot.slane %v982, 4
      %v985 = vrot.slane %v863, 5
      %v986 = vsel %vm965, %v984, %v985
      %v987 = vrot.slane %v864, 5
      %v988 = vrot.slane %v987, 4
      %v989 = vrot.slane %v865, 5
      %v990 = vsel %vm965, %v988, %v989
      %v991 = vrot.slane %v989, 4
      %v992 = vrot.slane %v866, 5
      %v993 = vsel %vm965, %v991, %v992
      %v994 = vrot.slane %v867, 5
      %v995 = vrot.slane %v994, 4
      %v996 = vrot.slane %v868, 5
      %v997 = vsel %vm965, %v995, %v996
      %v998 = vrot.slane %v996, 4
      %v999 = vrot.slane %v869, 5
      %v1000 = vsel %vm965, %v998, %v999
      %v1001 = vrot.slane %v870, 5
      %v1002 = vrot.slane %v1001, 4
      %v1003 = vrot.slane %v871, 5
      %v1004 = vsel %vm965, %v1002, %v1003
      %v1005 = vrot.slane %v1003, 4
      %v1006 = vrot.slane %v872, 5
      %v1007 = vsel %vm965, %v1005, %v1006
      %v1008 = vrot.slane %v873, 5
      %v1009 = vrot.slane %v1008, 4
      %v1010 = vrot.slane %v874, 5
      %v1011 = vsel %vm965, %v1009, %v1010
      %v1012 = vrot.slane %v1010, 4
      %v1013 = vrot.slane %v875, 5
      %v1014 = vsel %vm965, %v1012, %v1013
      %v1015 = vrot.slane %v876, 5
      %v1016 = vrot.slane %v1015, 4
      %v1017 = vrot.slane %v877, 5
      %v1018 = vsel %vm965, %v1016, %v1017
      %v1019 = vrot.slane %v1017, 4
      %v1020 = vrot.slane %v878, 5
      %v1021 = vsel %vm965, %v1019, %v1020
      %v1022 = vrot.slane %v879, 5
      %v1023 = vrot.slane %v1022, 4
      %v1024 = vrot.slane %v880, 5
      %v1025 = vsel %vm965, %v1023, %v1024
      %v1026 = vrot.slane %v1024, 4
      %v1027 = vrot.slane %v881, 5
      %v1028 = vsel %vm965, %v1026, %v1027
      %v1029 = vrot.slane %v882, 5
      %v1030 = vrot.slane %v1029, 4
      %v1031 = vrot.slane %v883, 5
      %v1032 = vsel %vm965, %v1030, %v1031
      %v1033 = vrot.slane %v1031, 4
      %v1034 = vrot.slane %v884, 5
      %v1035 = vsel %vm965, %v1033, %v1034
      %v1036 = vrot.slane %v885, 5
      %v1037 = vrot.slane %v1036, 4
      %v1038 = vrot.slane %v886, 5
      %v1039 = vsel %vm965, %v1037, %v1038
      %v1040 = vrot.slane %v1038, 4
      %v1041 = vrot.slane %v887, 5
      %v1042 = vsel %vm965, %v1040, %v1041
      %v1043 = vrot.slane %v888, 5
      %v1044 = vrot.slane %v1043, 4
      %v1045 = vrot.slane %v889, 5
      %v1046 = vsel %vm965, %v1044, %v1045
      %v1047 = vrot.slane %v1045, 4
      %v1048 = vrot.slane %v890, 5
      %v1049 = vsel %vm965, %v1047, %v1048
      %v1050 = vrot.slane %v891, 5
      %v1051 = vrot.slane %v1050, 4
      %v1052 = vrot.slane %v892, 5
      %v1053 = vsel %vm965, %v1051, %v1052
      %v1054 = vrot.slane %v1052, 4
      %v1055 = vrot.slane %v893, 5
      %v1056 = vsel %vm965, %v1054, %v1055
      %v1057 = vrot.slane %v894, 5
      %v1058 = vrot.slane %v1057, 4
      %v1059 = vrot.slane %v895, 5
      %v1060 = vsel %vm965, %v1058, %v1059
      %v1061 = vrot.slane %v1059, 4
      %v1062 = vrot.slane %v896, 5
      %v1063 = vsel %vm965, %v1061, %v1062
      %v1064 = vrot.slane %v897, 5
      %v1065 = vrot.slane %v1064, 4
      %v1066 = vrot.slane %v898, 5
      %v1067 = vsel %vm965, %v1065, %v1066
      %v1068 = vrot.slane %v1066, 4
      %v1069 = vrot.slane %v899, 5
      %v1070 = vsel %vm965, %v1068, %v1069
      %v1071 = vrot.slane %v900, 5
      %v1072 = vrot.slane %v1071, 4
      %v1073 = vrot.slane %v901, 5
      %v1074 = vsel %vm965, %v1072, %v1073
      %v1075 = vrot.slane %v1073, 4
      %v1076 = vrot.slane %v902, 5
      %v1077 = vsel %vm965, %v1075, %v1076
      %v1078 = vrot.slane %v903, 5
      %v1079 = vrot.slane %v1078, 4
      %v1080 = vrot.slane %v904, 5
      %v1081 = vsel %vm965, %v1079, %v1080
      %v1082 = vrot.slane %v1080, 4
      %v1083 = vrot.slane %v905, 5
      %v1084 = vsel %vm965, %v1082, %v1083
      %v1085 = vrot.slane %v906, 5
      %v1086 = vrot.slane %v1085, 4
      %v1087 = vrot.slane %v907, 5
      %v1088 = vsel %vm965, %v1086, %v1087
      %v1089 = vrot.slane %v1087, 4
      %v1090 = vrot.slane %v908, 5
      %v1091 = vsel %vm965, %v1089, %v1090
      %1128 = vst [vmem:[#allocation2 + $0x8] sm:$0xf] %v969
      %1129 = vst [vmem:[#allocation2 + $0x14] sm:$0xf] %v972
      %1130 = vst [vmem:[#allocation2 + $0x20] sm:$0xf] %v976
      %1131 = vst [vmem:[#allocation2 + $0x2c] sm:$0xf] %v979
      %1132 = vst [vmem:[#allocation2 + $0x38] sm:$0xf] %v983
      %1133 = vst [vmem:[#allocation2 + $0x44] sm:$0xf] %v986
      %1134 = vst [vmem:[#allocation2 + $0x50] sm:$0xf] %v990
      %1135 = vst [vmem:[#allocation2 + $0x5c] sm:$0xf] %v993
      %1136 = vst [vmem:[#allocation2 + $0x68] sm:$0xf] %v997
      %1137 = vst [vmem:[#allocation2 + $0x74] sm:$0xf] %v1000
      %1138 = vst [vmem:[#allocation2 + $0x80] sm:$0xf] %v1004
      %1139 = vst [vmem:[#allocation2 + $0x8c] sm:$0xf] %v1007
      %1140 = vst [vmem:[#allocation2 + $0x98] sm:$0xf] %v1011
      %1141 = vst [vmem:[#allocation2 + $0xa4] sm:$0xf] %v1014
      %1142 = vst [vmem:[#allocation2 + $0xb0] sm:$0xf] %v1018
      %1143 = vst [vmem:[#allocation2 + $0xbc] sm:$0xf] %v1021
      %1144 = vst [vmem:[#allocation2 + $0xc8] sm:$0xf] %v1025
      %1145 = vst [vmem:[#allocation2 + $0xd4] sm:$0xf] %v1028
      %1146 = vst [vmem:[#allocation2 + $0xe0] sm:$0xf] %v1032
      %1147 = vst [vmem:[#allocation2 + $0xec] sm:$0xf] %v1035
      %1148 = vst [vmem:[#allocation2 + $0xf8] sm:$0xf] %v1039
      %1149 = vst [vmem:[#allocation2 + $0x104] sm:$0xf] %v1042
      %1150 = vst [vmem:[#allocation2 + $0x110] sm:$0xf] %v1046
      %1151 = vst [vmem:[#allocation2 + $0x11c] sm:$0xf] %v1049
      %1152 = vst [vmem:[#allocation2 + $0x128] sm:$0xf] %v1053
      %1153 = vst [vmem:[#allocation2 + $0x134] sm:$0xf] %v1056
      %1154 = vst [vmem:[#allocation2 + $0x140] sm:$0xf] %v1060
      %1155 = vst [vmem:[#allocation2 + $0x14c] sm:$0xf] %v1063
      %1156 = vst [vmem:[#allocation2 + $0x158] sm:$0xf] %v1067
      %1157 = vst [vmem:[#allocation2 + $0x164] sm:$0xf] %v1070
      %1158 = vst [vmem:[#allocation2 + $0x170] sm:$0xf] %v1074
      %1159 = vst [vmem:[#allocation2 + $0x17c] sm:$0xf] %v1077
      %1160 = vst [vmem:[#allocation2 + $0x188] sm:$0xf] %v1081
      %1161 = vst [vmem:[#allocation2 + $0x194] sm:$0xf] %v1084
      %1162 = vst [vmem:[#allocation2 + $0x1a0] sm:$0xf] %v1088
      %1163 = vst [vmem:[#allocation2 + $0x1ac] sm:$0xf] %v1091
      %v1164 = vld [vmem:[%s213] sm:$0x1]
      %v1166 = vperm.slane %v1164, 0
      %1168 = vst [vmem:[#allocation3] sm:$0xff] %v1166
      %1169 = vst [vmem:[#allocation3 + $0x8] sm:$0xff] %v1166
      %1170 = vst [vmem:[#allocation3 + $0x10] sm:$0xff] %v1166
      %1171 = vst [vmem:[#allocation3 + $0x18] sm:$0xff] %v1166
      %1172 = vst [vmem:[#allocation3 + $0x20] sm:$0xff] %v1166
      %1173 = vst [vmem:[#allocation3 + $0x28] sm:$0xff] %v1166
      %1174 = vst [vmem:[#allocation3 + $0x30] sm:$0xff] %v1166
      %1175 = vst [vmem:[#allocation3 + $0x38] sm:$0xff] %v1166
      %1176 = vst [vmem:[#allocation3 + $0x40] sm:$0xff] %v1166
      %1177 = vst [vmem:[#allocation3 + $0x48] sm:$0xff] %v1166
      %1178 = vst [vmem:[#allocation3 + $0x50] sm:$0xff] %v1166
      %1179 = vst [vmem:[#allocation3 + $0x58] sm:$0xff] %v1166
      %1180 = vst [vmem:[#allocation3 + $0x60] sm:$0xff] %v1166
      %1181 = vst [vmem:[#allocation3 + $0x68] sm:$0xff] %v1166
      %1182 = vst [vmem:[#allocation3 + $0x70] sm:$0xff] %v1166
      %1183 = vst [vmem:[#allocation3 + $0x78] sm:$0xff] %v1166
      %1184 = vst [vmem:[#allocation3 + $0x80] sm:$0xff] %v1166
      %1185 = vst [vmem:[#allocation3 + $0x88] sm:$0xff] %v1166
      %1186 = vst [vmem:[#allocation3 + $0x90] sm:$0xff] %v1166
      %1187 = vst [vmem:[#allocation3 + $0x98] sm:$0xff] %v1166
      %1188 = vst [vmem:[#allocation3 + $0xa0] sm:$0xff] %v1166
      %1189 = vst [vmem:[#allocation3 + $0xa8] sm:$0xff] %v1166
      %1190 = vst [vmem:[#allocation3 + $0xb0] sm:$0xff] %v1166
      %1191 = vst [vmem:[#allocation3 + $0xb8] sm:$0xff] %v1166
      %1192 = vst [vmem:[#allocation3 + $0xc0] sm:$0xff] %v1166
      %1193 = vst [vmem:[#allocation3 + $0xc8] sm:$0xff] %v1166
      %1194 = vst [vmem:[#allocation3 + $0xd0] sm:$0xff] %v1166
      %1195 = vst [vmem:[#allocation3 + $0xd8] sm:$0xff] %v1166
      %1196 = vst [vmem:[#allocation3 + $0xe0] sm:$0xff] %v1166
      %1197 = vst [vmem:[#allocation3 + $0xe8] sm:$0xff] %v1166
      %1198 = vst [vmem:[#allocation3 + $0xf0] sm:$0xff] %v1166
      %1199 = vst [vmem:[#allocation3 + $0xf8] sm:$0xff] %v1166
      %v1200 = vld [vmem:[#allocation3] sm:$0xff]
      %v1201 = vld [vmem:[#allocation3 + $0x8] sm:$0xff]
      %v1202 = vld [vmem:[#allocation3 + $0x10] sm:$0xff]
      %v1203 = vld [vmem:[#allocation3 + $0x18] sm:$0xff]
      %v1204 = vld [vmem:[#allocation3 + $0x20] sm:$0xff]
      %v1205 = vld [vmem:[#allocation3 + $0x28] sm:$0xff]
      %v1206 = vld [vmem:[#allocation3 + $0x30] sm:$0xff]
      %v1207 = vld [vmem:[#allocation3 + $0x38] sm:$0xff]
      %v1208 = vld [vmem:[#allocation3 + $0x40] sm:$0xff]
      %v1209 = vld [vmem:[#allocation3 + $0x48] sm:$0xff]
      %v1210 = vld [vmem:[#allocation3 + $0x50] sm:$0xff]
      %v1211 = vld [vmem:[#allocation3 + $0x58] sm:$0xff]
      %v1212 = vld [vmem:[#allocation3 + $0x60] sm:$0xff]
      %v1213 = vld [vmem:[#allocation3 + $0x68] sm:$0xff]
      %v1214 = vld [vmem:[#allocation3 + $0x70] sm:$0xff]
      %v1215 = vld [vmem:[#allocation3 + $0x78] sm:$0xff]
      %v1216 = vld [vmem:[#allocation3 + $0x80] sm:$0xff]
      %v1217 = vld [vmem:[#allocation3 + $0x88] sm:$0xff]
      %v1218 = vld [vmem:[#allocation3 + $0x90] sm:$0xff]
      %v1219 = vld [vmem:[#allocation3 + $0x98] sm:$0xff]
      %v1220 = vld [vmem:[#allocation3 + $0xa0] sm:$0xff]
      %v1221 = vld [vmem:[#allocation3 + $0xa8] sm:$0xff]
      %v1222 = vld [vmem:[#allocation3 + $0xb0] sm:$0xff]
      %v1223 = vld [vmem:[#allocation3 + $0xb8] sm:$0xff]
      %v1224 = vld [vmem:[#allocation3 + $0xc0] sm:$0xff]
      %v1225 = vld [vmem:[#allocation3 + $0xc8] sm:$0xff]
      %v1226 = vld [vmem:[#allocation3 + $0xd0] sm:$0xff]
      %v1227 = vld [vmem:[#allocation3 + $0xd8] sm:$0xff]
      %v1228 = vld [vmem:[#allocation3 + $0xe0] sm:$0xff]
      %v1229 = vld [vmem:[#allocation3 + $0xe8] sm:$0xff]
      %v1230 = vld [vmem:[#allocation3 + $0xf0] sm:$0xff]
      %v1231 = vld [vmem:[#allocation3 + $0xf8] sm:$0xff]
      %v1232 = vld [vmem:[#allocation2] sm:$0xff]
      %v1233 = vld [vmem:[#allocation2 + $0x8] sm:$0xf]
      %v1234 = vld [vmem:[#allocation2 + $0xc] sm:$0xff]
      %v1235 = vld [vmem:[#allocation2 + $0x14] sm:$0xf]
      %v1236 = vld [vmem:[#allocation2 + $0x18] sm:$0xff]
      %v1237 = vld [vmem:[#allocation2 + $0x20] sm:$0xf]
      %v1238 = vld [vmem:[#allocation2 + $0x24] sm:$0xff]
      %v1239 = vld [vmem:[#allocation2 + $0x2c] sm:$0xf]
      %v1240 = vld [vmem:[#allocation2 + $0x30] sm:$0xff]
      %v1241 = vld [vmem:[#allocation2 + $0x38] sm:$0xf]
      %v1242 = vld [vmem:[#allocation2 + $0x3c] sm:$0xff]
      %v1243 = vld [vmem:[#allocation2 + $0x44] sm:$0xf]
      %v1244 = vld [vmem:[#allocation2 + $0x48] sm:$0xff]
      %v1245 = vld [vmem:[#allocation2 + $0x50] sm:$0xf]
      %v1246 = vld [vmem:[#allocation2 + $0x54] sm:$0xff]
      %v1247 = vld [vmem:[#allocation2 + $0x5c] sm:$0xf]
      %v1248 = vld [vmem:[#allocation2 + $0x60] sm:$0xff]
      %v1249 = vld [vmem:[#allocation2 + $0x68] sm:$0xf]
      %v1250 = vld [vmem:[#allocation2 + $0x6c] sm:$0xff]
      %v1251 = vld [vmem:[#allocation2 + $0x74] sm:$0xf]
      %v1252 = vld [vmem:[#allocation2 + $0x78] sm:$0xff]
      %v1253 = vld [vmem:[#allocation2 + $0x80] sm:$0xf]
      %v1254 = vld [vmem:[#allocation2 + $0x84] sm:$0xff]
      %v1255 = vld [vmem:[#allocation2 + $0x8c] sm:$0xf]
      %v1256 = vld [vmem:[#allocation2 + $0x90] sm:$0xff]
      %v1257 = vld [vmem:[#allocation2 + $0x98] sm:$0xf]
      %v1258 = vld [vmem:[#allocation2 + $0x9c] sm:$0xff]
      %v1259 = vld [vmem:[#allocation2 + $0xa4] sm:$0xf]
      %v1260 = vld [vmem:[#allocation2 + $0xa8] sm:$0xff]
      %v1261 = vld [vmem:[#allocation2 + $0xb0] sm:$0xf]
      %v1262 = vld [vmem:[#allocation2 + $0xb4] sm:$0xff]
      %v1263 = vld [vmem:[#allocation2 + $0xbc] sm:$0xf]
      %v1264 = vld [vmem:[#allocation2 + $0xc0] sm:$0xff]
      %v1265 = vld [vmem:[#allocation2 + $0xc8] sm:$0xf]
      %v1266 = vld [vmem:[#allocation2 + $0xcc] sm:$0xff]
      %v1267 = vld [vmem:[#allocation2 + $0xd4] sm:$0xf]
      %v1268 = vld [vmem:[#allocation2 + $0xd8] sm:$0xff]
      %v1269 = vld [vmem:[#allocation2 + $0xe0] sm:$0xf]
      %v1270 = vld [vmem:[#allocation2 + $0xe4] sm:$0xff]
      %v1271 = vld [vmem:[#allocation2 + $0xec] sm:$0xf]
      %v1272 = vld [vmem:[#allocation2 + $0xf0] sm:$0xff]
      %v1273 = vld [vmem:[#allocation2 + $0xf8] sm:$0xf]
      %v1274 = vld [vmem:[#allocation2 + $0xfc] sm:$0xff]
      %v1275 = vld [vmem:[#allocation2 + $0x104] sm:$0xf]
      %v1276 = vld [vmem:[#allocation2 + $0x108] sm:$0xff]
      %v1277 = vld [vmem:[#allocation2 + $0x110] sm:$0xf]
      %v1278 = vld [vmem:[#allocation2 + $0x114] sm:$0xff]
      %v1279 = vld [vmem:[#allocation2 + $0x11c] sm:$0xf]
      %v1280 = vld [vmem:[#allocation2 + $0x120] sm:$0xff]
      %v1281 = vld [vmem:[#allocation2 + $0x128] sm:$0xf]
      %v1282 = vld [vmem:[#allocation2 + $0x12c] sm:$0xff]
      %v1283 = vld [vmem:[#allocation2 + $0x134] sm:$0xf]
      %v1284 = vld [vmem:[#allocation2 + $0x138] sm:$0xff]
      %v1285 = vld [vmem:[#allocation2 + $0x140] sm:$0xf]
      %v1286 = vld [vmem:[#allocation2 + $0x144] sm:$0xff]
      %v1287 = vld [vmem:[#allocation2 + $0x14c] sm:$0xf]
      %v1288 = vld [vmem:[#allocation2 + $0x150] sm:$0xff]
      %v1289 = vld [vmem:[#allocation2 + $0x158] sm:$0xf]
      %v1290 = vld [vmem:[#allocation2 + $0x15c] sm:$0xff]
      %v1291 = vld [vmem:[#allocation2 + $0x164] sm:$0xf]
      %v1292 = vld [vmem:[#allocation2 + $0x168] sm:$0xff]
      %v1293 = vld [vmem:[#allocation2 + $0x170] sm:$0xf]
      %v1294 = vld [vmem:[#allocation2 + $0x174] sm:$0xff]
      %v1295 = vld [vmem:[#allocation2 + $0x17c] sm:$0xf]
      %v1296 = vld [vmem:[%s210] sm:$0xf]
      %v1297 = vld [vmem:[%s210 + $0x4] sm:$0xf]
      %v1298 = vld [vmem:[%s210 + $0x8] sm:$0xf]
      %v1299 = vld [vmem:[%s210 + $0xc] sm:$0xf]
      %v1300 = vld [vmem:[%s210 + $0x10] sm:$0xf]
      %v1301 = vld [vmem:[%s210 + $0x14] sm:$0xf]
      %v1302 = vld [vmem:[%s210 + $0x18] sm:$0xf]
      %v1303 = vld [vmem:[%s210 + $0x1c] sm:$0xf]
      %v1304 = vld [vmem:[%s210 + $0x20] sm:$0xf]
      %v1305 = vld [vmem:[%s210 + $0x24] sm:$0xf]
      %v1306 = vld [vmem:[%s210 + $0x28] sm:$0xf]
      %v1307 = vld [vmem:[%s210 + $0x2c] sm:$0xf]
      %v1308 = vld [vmem:[%s210 + $0x30] sm:$0xf]
      %v1309 = vld [vmem:[%s210 + $0x34] sm:$0xf]
      %v1310 = vld [vmem:[%s210 + $0x38] sm:$0xf]
      %v1311 = vld [vmem:[%s210 + $0x3c] sm:$0xf]
      %v1312 = vld [vmem:[%s210 + $0x40] sm:$0xf]
      %v1313 = vld [vmem:[%s210 + $0x44] sm:$0xf]
      %v1314 = vld [vmem:[%s210 + $0x48] sm:$0xf]
      %v1315 = vld [vmem:[%s210 + $0x4c] sm:$0xf]
      %v1316 = vld [vmem:[%s210 + $0x50] sm:$0xf]
      %v1317 = vld [vmem:[%s210 + $0x54] sm:$0xf]
      %v1318 = vld [vmem:[%s210 + $0x58] sm:$0xf]
      %v1319 = vld [vmem:[%s210 + $0x5c] sm:$0xf]
      %v1320 = vld [vmem:[%s210 + $0x60] sm:$0xf]
      %v1321 = vld [vmem:[%s210 + $0x64] sm:$0xf]
      %v1322 = vld [vmem:[%s210 + $0x68] sm:$0xf]
      %v1323 = vld [vmem:[%s210 + $0x6c] sm:$0xf]
      %v1324 = vld [vmem:[%s210 + $0x70] sm:$0xf]
      %v1325 = vld [vmem:[%s210 + $0x74] sm:$0xf]
      %v1326 = vld [vmem:[%s210 + $0x78] sm:$0xf]
      %v1327 = vld [vmem:[%s210 + $0x7c] sm:$0xf]
      %v1328 = vld [vmem:[%s210 + $0x80] sm:$0xf]
      %v1329 = vld [vmem:[%s210 + $0x84] sm:$0xf]
      %v1330 = vld [vmem:[%s210 + $0x88] sm:$0xf]
      %v1331 = vld [vmem:[%s210 + $0x8c] sm:$0xf]
      %v1332 = vld [vmem:[%s210 + $0x90] sm:$0xf]
      %v1333 = vld [vmem:[%s210 + $0x94] sm:$0xf]
      %v1334 = vld [vmem:[%s210 + $0x98] sm:$0xf]
      %v1335 = vld [vmem:[%s210 + $0x9c] sm:$0xf]
      %v1336 = vld [vmem:[%s210 + $0xa0] sm:$0xf]
      %v1337 = vld [vmem:[%s210 + $0xa4] sm:$0xf]
      %v1338 = vld [vmem:[%s210 + $0xa8] sm:$0xf]
      %v1339 = vld [vmem:[%s210 + $0xac] sm:$0xf]
      %v1340 = vld [vmem:[%s210 + $0xb0] sm:$0xf]
      %v1341 = vld [vmem:[%s210 + $0xb4] sm:$0xf]
      %v1342 = vld [vmem:[%s210 + $0xb8] sm:$0xf]
      %v1343 = vld [vmem:[%s210 + $0xbc] sm:$0xf]
      %v1408 = vunpack.c.l.b16 %v1232
      %v1409 = vunpack.c.h.b16 %v1232
      %v1410 = vunpack.c.l.b16 %v1233
      %v1411 = vunpack.c.l.b16 %v1234
      %v1412 = vunpack.c.h.b16 %v1234
      %v1413 = vunpack.c.l.b16 %v1235
      %v1414 = vunpack.c.l.b16 %v1236
      %v1415 = vunpack.c.h.b16 %v1236
      %v1416 = vunpack.c.l.b16 %v1237
      %v1417 = vunpack.c.l.b16 %v1238
      %v1418 = vunpack.c.h.b16 %v1238
      %v1419 = vunpack.c.l.b16 %v1239
      %v1420 = vunpack.c.l.b16 %v1240
      %v1421 = vunpack.c.h.b16 %v1240
      %v1422 = vunpack.c.l.b16 %v1241
      %v1423 = vunpack.c.l.b16 %v1242
      %v1424 = vunpack.c.h.b16 %v1242
      %v1425 = vunpack.c.l.b16 %v1243
      %v1426 = vunpack.c.l.b16 %v1244
      %v1427 = vunpack.c.h.b16 %v1244
      %v1428 = vunpack.c.l.b16 %v1245
      %v1429 = vunpack.c.l.b16 %v1246
      %v1430 = vunpack.c.h.b16 %v1246
      %v1431 = vunpack.c.l.b16 %v1247
      %v1432 = vunpack.c.l.b16 %v1248
      %v1433 = vunpack.c.h.b16 %v1248
      %v1434 = vunpack.c.l.b16 %v1249
      %v1435 = vunpack.c.l.b16 %v1250
      %v1436 = vunpack.c.h.b16 %v1250
      %v1437 = vunpack.c.l.b16 %v1251
      %v1438 = vunpack.c.l.b16 %v1252
      %v1439 = vunpack.c.h.b16 %v1252
      %v1440 = vunpack.c.l.b16 %v1253
      %v1441 = vunpack.c.l.b16 %v1254
      %v1442 = vunpack.c.h.b16 %v1254
      %v1443 = vunpack.c.l.b16 %v1255
      %v1444 = vunpack.c.l.b16 %v1256
      %v1445 = vunpack.c.h.b16 %v1256
      %v1446 = vunpack.c.l.b16 %v1257
      %v1447 = vunpack.c.l.b16 %v1258
      %v1448 = vunpack.c.h.b16 %v1258
      %v1449 = vunpack.c.l.b16 %v1259
      %v1450 = vunpack.c.l.b16 %v1260
      %v1451 = vunpack.c.h.b16 %v1260
      %v1452 = vunpack.c.l.b16 %v1261
      %v1453 = vunpack.c.l.b16 %v1262
      %v1454 = vunpack.c.h.b16 %v1262
      %v1455 = vunpack.c.l.b16 %v1263
      %v1456 = vunpack.c.l.b16 %v1264
      %v1457 = vunpack.c.h.b16 %v1264
      %v1458 = vunpack.c.l.b16 %v1265
      %v1459 = vunpack.c.l.b16 %v1266
      %v1460 = vunpack.c.h.b16 %v1266
      %v1461 = vunpack.c.l.b16 %v1267
      %v1462 = vunpack.c.l.b16 %v1268
      %v1463 = vunpack.c.h.b16 %v1268
      %v1464 = vunpack.c.l.b16 %v1269
      %v1465 = vunpack.c.l.b16 %v1270
      %v1466 = vunpack.c.h.b16 %v1270
      %v1467 = vunpack.c.l.b16 %v1271
      %v1468 = vunpack.c.l.b16 %v1272
      %v1469 = vunpack.c.h.b16 %v1272
      %v1470 = vunpack.c.l.b16 %v1273
      %v1471 = vunpack.c.l.b16 %v1274
      %v1472 = vunpack.c.h.b16 %v1274
      %v1473 = vunpack.c.l.b16 %v1275
      %v1474 = vunpack.c.l.b16 %v1276
      %v1475 = vunpack.c.h.b16 %v1276
      %v1476 = vunpack.c.l.b16 %v1277
      %v1477 = vunpack.c.l.b16 %v1278
      %v1478 = vunpack.c.h.b16 %v1278
      %v1479 = vunpack.c.l.b16 %v1279
      %v1480 = vunpack.c.l.b16 %v1280
      %v1481 = vunpack.c.h.b16 %v1280
      %v1482 = vunpack.c.l.b16 %v1281
      %v1483 = vunpack.c.l.b16 %v1282
      %v1484 = vunpack.c.h.b16 %v1282
      %v1485 = vunpack.c.l.b16 %v1283
      %v1486 = vunpack.c.l.b16 %v1284
      %v1487 = vunpack.c.h.b16 %v1284
      %v1488 = vunpack.c.l.b16 %v1285
      %v1489 = vunpack.c.l.b16 %v1286
      %v1490 = vunpack.c.h.b16 %v1286
      %v1491 = vunpack.c.l.b16 %v1287
      %v1492 = vunpack.c.l.b16 %v1288
      %v1493 = vunpack.c.h.b16 %v1288
      %v1494 = vunpack.c.l.b16 %v1289
      %v1495 = vunpack.c.l.b16 %v1290
      %v1496 = vunpack.c.h.b16 %v1290
      %v1497 = vunpack.c.l.b16 %v1291
      %v1498 = vunpack.c.l.b16 %v1292
      %v1499 = vunpack.c.h.b16 %v1292
      %v1500 = vunpack.c.l.b16 %v1293
      %v1501 = vunpack.c.l.b16 %v1294
      %v1502 = vunpack.c.h.b16 %v1294
      %v1503 = vunpack.c.l.b16 %v1295
      %v1504 = vpack.c.b16 %v1411, %v1408
      %v1505 = vpack.c.b16 %v1412, %v1409
      %v1506 = vpack.c.b16 %v1413, %v1410
      %v1507 = vpack.c.b16 %v1417, %v1414
      %v1508 = vpack.c.b16 %v1418, %v1415
      %v1509 = vpack.c.b16 %v1419, %v1416
      %v1510 = vpack.c.b16 %v1423, %v1420
      %v1511 = vpack.c.b16 %v1424, %v1421
      %v1512 = vpack.c.b16 %v1425, %v1422
      %v1513 = vpack.c.b16 %v1429, %v1426
      %v1514 = vpack.c.b16 %v1430, %v1427
      %v1515 = vpack.c.b16 %v1431, %v1428
      %v1516 = vpack.c.b16 %v1435, %v1432
      %v1517 = vpack.c.b16 %v1436, %v1433
      %v1518 = vpack.c.b16 %v1437, %v1434
      %v1519 = vpack.c.b16 %v1441, %v1438
      %v1520 = vpack.c.b16 %v1442, %v1439
      %v1521 = vpack.c.b16 %v1443, %v1440
      %v1522 = vpack.c.b16 %v1447, %v1444
      %v1523 = vpack.c.b16 %v1448, %v1445
      %v1524 = vpack.c.b16 %v1449, %v1446
      %v1525 = vpack.c.b16 %v1453, %v1450
      %v1526 = vpack.c.b16 %v1454, %v1451
      %v1527 = vpack.c.b16 %v1455, %v1452
      %v1528 = vpack.c.b16 %v1459, %v1456
      %v1529 = vpack.c.b16 %v1460, %v1457
      %v1530 = vpack.c.b16 %v1461, %v1458
      %v1531 = vpack.c.b16 %v1465, %v1462
      %v1532 = vpack.c.b16 %v1466, %v1463
      %v1533 = vpack.c.b16 %v1467, %v1464
      %v1534 = vpack.c.b16 %v1471, %v1468
      %v1535 = vpack.c.b16 %v1472, %v1469
      %v1536 = vpack.c.b16 %v1473, %v1470
      %v1537 = vpack.c.b16 %v1477, %v1474
      %v1538 = vpack.c.b16 %v1478, %v1475
      %v1539 = vpack.c.b16 %v1479, %v1476
      %v1540 = vpack.c.b16 %v1483, %v1480
      %v1541 = vpack.c.b16 %v1484, %v1481
      %v1542 = vpack.c.b16 %v1485, %v1482
      %v1543 = vpack.c.b16 %v1489, %v1486
      %v1544 = vpack.c.b16 %v1490, %v1487
      %v1545 = vpack.c.b16 %v1491, %v1488
      %v1546 = vpack.c.b16 %v1495, %v1492
      %v1547 = vpack.c.b16 %v1496, %v1493
      %v1548 = vpack.c.b16 %v1497, %v1494
      %v1549 = vpack.c.b16 %v1501, %v1498
      %v1550 = vpack.c.b16 %v1502, %v1499
      %v1551 = vpack.c.b16 %v1503, %v1500
      %v1648 = vunpack.c.l.b16 %v1296
      %v1649 = vunpack.c.l.b16 %v1297
      %v1650 = vunpack.c.l.b16 %v1298
      %v1651 = vunpack.c.l.b16 %v1299
      %v1652 = vunpack.c.l.b16 %v1300
      %v1653 = vunpack.c.l.b16 %v1301
      %v1654 = vunpack.c.l.b16 %v1302
      %v1655 = vunpack.c.l.b16 %v1303
      %v1656 = vunpack.c.l.b16 %v1304
      %v1657 = vunpack.c.l.b16 %v1305
      %v1658 = vunpack.c.l.b16 %v1306
      %v1659 = vunpack.c.l.b16 %v1307
      %v1660 = vunpack.c.l.b16 %v1308
      %v1661 = vunpack.c.l.b16 %v1309
      %v1662 = vunpack.c.l.b16 %v1310
      %v1663 = vunpack.c.l.b16 %v1311
      %v1664 = vunpack.c.l.b16 %v1312
      %v1665 = vunpack.c.l.b16 %v1313
      %v1666 = vunpack.c.l.b16 %v1314
      %v1667 = vunpack.c.l.b16 %v1315
      %v1668 = vunpack.c.l.b16 %v1316
      %v1669 = vunpack.c.l.b16 %v1317
      %v1670 = vunpack.c.l.b16 %v1318
      %v1671 = vunpack.c.l.b16 %v1319
      %v1672 = vunpack.c.l.b16 %v1320
      %v1673 = vunpack.c.l.b16 %v1321
      %v1674 = vunpack.c.l.b16 %v1322
      %v1675 = vunpack.c.l.b16 %v1323
      %v1676 = vunpack.c.l.b16 %v1324
      %v1677 = vunpack.c.l.b16 %v1325
      %v1678 = vunpack.c.l.b16 %v1326
      %v1679 = vunpack.c.l.b16 %v1327
      %v1680 = vunpack.c.l.b16 %v1328
      %v1681 = vunpack.c.l.b16 %v1329
      %v1682 = vunpack.c.l.b16 %v1330
      %v1683 = vunpack.c.l.b16 %v1331
      %v1684 = vunpack.c.l.b16 %v1332
      %v1685 = vunpack.c.l.b16 %v1333
      %v1686 = vunpack.c.l.b16 %v1334
      %v1687 = vunpack.c.l.b16 %v1335
      %v1688 = vunpack.c.l.b16 %v1336
      %v1689 = vunpack.c.l.b16 %v1337
      %v1690 = vunpack.c.l.b16 %v1338
      %v1691 = vunpack.c.l.b16 %v1339
      %v1692 = vunpack.c.l.b16 %v1340
      %v1693 = vunpack.c.l.b16 %v1341
      %v1694 = vunpack.c.l.b16 %v1342
      %v1695 = vunpack.c.l.b16 %v1343
      %v1696 = vpack.c.b16 %v1649, %v1648
      %v1697 = vpack.c.b16 %v1651, %v1650
      %v1698 = vpack.c.b16 %v1653, %v1652
      %v1699 = vpack.c.b16 %v1655, %v1654
      %v1700 = vpack.c.b16 %v1657, %v1656
      %v1701 = vpack.c.b16 %v1659, %v1658
      %v1702 = vpack.c.b16 %v1661, %v1660
      %v1703 = vpack.c.b16 %v1663, %v1662
      %v1704 = vpack.c.b16 %v1665, %v1664
      %v1705 = vpack.c.b16 %v1667, %v1666
      %v1706 = vpack.c.b16 %v1669, %v1668
      %v1707 = vpack.c.b16 %v1671, %v1670
      %v1708 = vpack.c.b16 %v1673, %v1672
      %v1709 = vpack.c.b16 %v1675, %v1674
      %v1710 = vpack.c.b16 %v1677, %v1676
      %v1711 = vpack.c.b16 %v1679, %v1678
      %v1712 = vpack.c.b16 %v1681, %v1680
      %v1713 = vpack.c.b16 %v1683, %v1682
      %v1714 = vpack.c.b16 %v1685, %v1684
      %v1715 = vpack.c.b16 %v1687, %v1686
      %v1716 = vpack.c.b16 %v1689, %v1688
      %v1717 = vpack.c.b16 %v1691, %v1690
      %v1718 = vpack.c.b16 %v1693, %v1692
      %v1719 = vpack.c.b16 %v1695, %v1694
      %1744 = vmatpush.bf16.msra.mxu0 %v1703
      %1745 = vmatpush.bf16.msra.mxu0 %v1702
      %1746 = vmatpush.bf16.msra.mxu0 %v1701
      %1747 = vmatpush.bf16.msra.mxu0 %v1700
      %1748 = vmatpush.bf16.msra.mxu0 %v1699
      %1749 = vmatpush.bf16.msra.mxu0 %v1698
      %1750 = vmatpush.bf16.msra.mxu0 %v1697
      %1751 = vmatpush.bf16.msra.mxu0 %v1696
      %1752 = vmatmul.bf16.gmra.mxu0 %v1504
      %v1753 = vpop.f32.mrf.mxu0
      %v1754 = vadd.f32 0.0, %v1753
      %v1755 = vpop.f32.mrf.mxu0
      %v1756 = vadd.f32 0.0, %v1755
      %1757 = vmatmul.bf16.gmra.mxu0 %v1507
      %v1758 = vpop.f32.mrf.mxu0
      %v1759 = vadd.f32 0.0, %v1758
      %v1760 = vpop.f32.mrf.mxu0
      %v1761 = vadd.f32 0.0, %v1760
      %1762 = vmatmul.bf16.gmra.mxu0 %v1510
      %v1763 = vpop.f32.mrf.mxu0
      %v1764 = vadd.f32 0.0, %v1763
      %v1765 = vpop.f32.mrf.mxu0
      %v1766 = vadd.f32 0.0, %v1765
      %1767 = vmatmul.bf16.gmra.mxu0 %v1513
      %v1768 = vpop.f32.mrf.mxu0
      %v1769 = vadd.f32 0.0, %v1768
      %v1770 = vpop.f32.mrf.mxu0
      %v1771 = vadd.f32 0.0, %v1770
      %1772 = vmatmul.bf16.gmra.mxu0 %v1516
      %v1773 = vpop.f32.mrf.mxu0
      %v1774 = vadd.f32 0.0, %v1773
      %v1775 = vpop.f32.mrf.mxu0
      %v1776 = vadd.f32 0.0, %v1775
      %1777 = vmatmul.bf16.gmra.mxu0 %v1519
      %v1778 = vpop.f32.mrf.mxu0
      %v1779 = vadd.f32 0.0, %v1778
      %v1780 = vpop.f32.mrf.mxu0
      %v1781 = vadd.f32 0.0, %v1780
      %1782 = vmatmul.bf16.gmra.mxu0 %v1522
      %v1783 = vpop.f32.mrf.mxu0
      %v1784 = vadd.f32 0.0, %v1783
      %v1785 = vpop.f32.mrf.mxu0
      %v1786 = vadd.f32 0.0, %v1785
      %1787 = vmatmul.bf16.gmra.mxu0 %v1525
      %v1788 = vpop.f32.mrf.mxu0
      %v1789 = vadd.f32 0.0, %v1788
      %v1790 = vpop.f32.mrf.mxu0
      %v1791 = vadd.f32 0.0, %v1790
      %1792 = vmatmul.bf16.gmra.mxu0 %v1528
      %v1793 = vpop.f32.mrf.mxu0
      %v1794 = vadd.f32 0.0, %v1793
      %v1795 = vpop.f32.mrf.mxu0
      %v1796 = vadd.f32 0.0, %v1795
      %1797 = vmatmul.bf16.gmra.mxu0 %v1531
      %v1798 = vpop.f32.mrf.mxu0
      %v1799 = vadd.f32 0.0, %v1798
      %v1800 = vpop.f32.mrf.mxu0
      %v1801 = vadd.f32 0.0, %v1800
      %1802 = vmatmul.bf16.gmra.mxu0 %v1534
      %v1803 = vpop.f32.mrf.mxu0
      %v1804 = vadd.f32 0.0, %v1803
      %v1805 = vpop.f32.mrf.mxu0
      %v1806 = vadd.f32 0.0, %v1805
      %1807 = vmatmul.bf16.gmra.mxu0 %v1537
      %v1808 = vpop.f32.mrf.mxu0
      %v1809 = vadd.f32 0.0, %v1808
      %v1810 = vpop.f32.mrf.mxu0
      %v1811 = vadd.f32 0.0, %v1810
      %1812 = vmatmul.bf16.gmra.mxu0 %v1540
      %v1813 = vpop.f32.mrf.mxu0
      %v1814 = vadd.f32 0.0, %v1813
      %v1815 = vpop.f32.mrf.mxu0
      %v1816 = vadd.f32 0.0, %v1815
      %1817 = vmatmul.bf16.gmra.mxu0 %v1543
      %v1818 = vpop.f32.mrf.mxu0
      %v1819 = vadd.f32 0.0, %v1818
      %v1820 = vpop.f32.mrf.mxu0
      %v1821 = vadd.f32 0.0, %v1820
      %1822 = vmatmul.bf16.gmra.mxu0 %v1546
      %v1823 = vpop.f32.mrf.mxu0
      %v1824 = vadd.f32 0.0, %v1823
      %v1825 = vpop.f32.mrf.mxu0
      %v1826 = vadd.f32 0.0, %v1825
      %1827 = vmatmul.bf16.gmra.mxu0 %v1549
      %v1828 = vpop.f32.mrf.mxu0
      %v1829 = vadd.f32 0.0, %v1828
      %v1830 = vpop.f32.mrf.mxu0
      %v1831 = vadd.f32 0.0, %v1830
      %1832 = vdwg.mxu0
      %1833 = vmatpush.bf16.msra.mxu0 %v1711
      %1834 = vmatpush.bf16.msra.mxu0 %v1710
      %1835 = vmatpush.bf16.msra.mxu0 %v1709
      %1836 = vmatpush.bf16.msra.mxu0 %v1708
      %1837 = vmatpush.bf16.msra.mxu0 %v1707
      %1838 = vmatpush.bf16.msra.mxu0 %v1706
      %1839 = vmatpush.bf16.msra.mxu0 %v1705
      %1840 = vmatpush.bf16.msra.mxu0 %v1704
      %1841 = vmatmul.bf16.gmra.mxu0 %v1505
      %v1842 = vpop.f32.mrf.mxu0
      %v1843 = vadd.f32 %v1754, %v1842
      %v1844 = vpop.f32.mrf.mxu0
      %v1845 = vadd.f32 %v1756, %v1844
      %1846 = vmatmul.bf16.gmra.mxu0 %v1508
      %v1847 = vpop.f32.mrf.mxu0
      %v1848 = vadd.f32 %v1759, %v1847
      %v1849 = vpop.f32.mrf.mxu0
      %v1850 = vadd.f32 %v1761, %v1849
      %1851 = vmatmul.bf16.gmra.mxu0 %v1511
      %v1852 = vpop.f32.mrf.mxu0
      %v1853 = vadd.f32 %v1764, %v1852
      %v1854 = vpop.f32.mrf.mxu0
      %v1855 = vadd.f32 %v1766, %v1854
      %1856 = vmatmul.bf16.gmra.mxu0 %v1514
      %v1857 = vpop.f32.mrf.mxu0
      %v1858 = vadd.f32 %v1769, %v1857
      %v1859 = vpop.f32.mrf.mxu0
      %v1860 = vadd.f32 %v1771, %v1859
      %1861 = vmatmul.bf16.gmra.mxu0 %v1517
      %v1862 = vpop.f32.mrf.mxu0
      %v1863 = vadd.f32 %v1774, %v1862
      %v1864 = vpop.f32.mrf.mxu0
      %v1865 = vadd.f32 %v1776, %v1864
      %1866 = vmatmul.bf16.gmra.mxu0 %v1520
      %v1867 = vpop.f32.mrf.mxu0
      %v1868 = vadd.f32 %v1779, %v1867
      %v1869 = vpop.f32.mrf.mxu0
      %v1870 = vadd.f32 %v1781, %v1869
      %1871 = vmatmul.bf16.gmra.mxu0 %v1523
      %v1872 = vpop.f32.mrf.mxu0
      %v1873 = vadd.f32 %v1784, %v1872
      %v1874 = vpop.f32.mrf.mxu0
      %v1875 = vadd.f32 %v1786, %v1874
      %1876 = vmatmul.bf16.gmra.mxu0 %v1526
      %v1877 = vpop.f32.mrf.mxu0
      %v1878 = vadd.f32 %v1789, %v1877
      %v1879 = vpop.f32.mrf.mxu0
      %v1880 = vadd.f32 %v1791, %v1879
      %1881 = vmatmul.bf16.gmra.mxu0 %v1529
      %v1882 = vpop.f32.mrf.mxu0
      %v1883 = vadd.f32 %v1794, %v1882
      %v1884 = vpop.f32.mrf.mxu0
      %v1885 = vadd.f32 %v1796, %v1884
      %1886 = vmatmul.bf16.gmra.mxu0 %v1532
      %v1887 = vpop.f32.mrf.mxu0
      %v1888 = vadd.f32 %v1799, %v1887
      %v1889 = vpop.f32.mrf.mxu0
      %v1890 = vadd.f32 %v1801, %v1889
      %1891 = vmatmul.bf16.gmra.mxu0 %v1535
      %v1892 = vpop.f32.mrf.mxu0
      %v1893 = vadd.f32 %v1804, %v1892
      %v1894 = vpop.f32.mrf.mxu0
      %v1895 = vadd.f32 %v1806, %v1894
      %1896 = vmatmul.bf16.gmra.mxu0 %v1538
      %v1897 = vpop.f32.mrf.mxu0
      %v1898 = vadd.f32 %v1809, %v1897
      %v1899 = vpop.f32.mrf.mxu0
      %v1900 = vadd.f32 %v1811, %v1899
      %1901 = vmatmul.bf16.gmra.mxu0 %v1541
      %v1902 = vpop.f32.mrf.mxu0
      %v1903 = vadd.f32 %v1814, %v1902
      %v1904 = vpop.f32.mrf.mxu0
      %v1905 = vadd.f32 %v1816, %v1904
      %1906 = vmatmul.bf16.gmra.mxu0 %v1544
      %v1907 = vpop.f32.mrf.mxu0
      %v1908 = vadd.f32 %v1819, %v1907
      %v1909 = vpop.f32.mrf.mxu0
      %v1910 = vadd.f32 %v1821, %v1909
      %1911 = vmatmul.bf16.gmra.mxu0 %v1547
      %v1912 = vpop.f32.mrf.mxu0
      %v1913 = vadd.f32 %v1824, %v1912
      %v1914 = vpop.f32.mrf.mxu0
      %v1915 = vadd.f32 %v1826, %v1914
      %1916 = vmatmul.bf16.gmra.mxu0 %v1550
      %v1917 = vpop.f32.mrf.mxu0
      %v1918 = vadd.f32 %v1829, %v1917
      %v1919 = vpop.f32.mrf.mxu0
      %v1920 = vadd.f32 %v1831, %v1919
      %1921 = vdwg.mxu0
      %1922 = vmatpush.bf16.msra.mxu0 %v1719
      %1923 = vmatpush.bf16.msra.mxu0 %v1718
      %1924 = vmatpush.bf16.msra.mxu0 %v1717
      %1925 = vmatpush.bf16.msra.mxu0 %v1716
      %1926 = vmatpush.bf16.msra.mxu0 %v1715
      %1927 = vmatpush.bf16.msra.mxu0 %v1714
      %1928 = vmatpush.bf16.msra.mxu0 %v1713
      %1929 = vmatpush.bf16.msra.mxu0 %v1712
      %1930 = vmatmul.bf16.gmra.mxu0 %v1506
      %v1931 = vpop.f32.mrf.mxu0
      %v1932 = vadd.f32 %v1843, %v1931
      %v1933 = vpop.f32.mrf.mxu0
      %v1934 = vadd.f32 %v1845, %v1933
      %1935 = vmatmul.bf16.gmra.mxu0 %v1509
      %v1936 = vpop.f32.mrf.mxu0
      %v1937 = vadd.f32 %v1848, %v1936
      %v1938 = vpop.f32.mrf.mxu0
      %v1939 = vadd.f32 %v1850, %v1938
      %1940 = vmatmul.bf16.gmra.mxu0 %v1512
      %v1941 = vpop.f32.mrf.mxu0
      %v1942 = vadd.f32 %v1853, %v1941
      %v1943 = vpop.f32.mrf.mxu0
      %v1944 = vadd.f32 %v1855, %v1943
      %1945 = vmatmul.bf16.gmra.mxu0 %v1515
      %v1946 = vpop.f32.mrf.mxu0
      %v1947 = vadd.f32 %v1858, %v1946
      %v1948 = vpop.f32.mrf.mxu0
      %v1949 = vadd.f32 %v1860, %v1948
      %1950 = vmatmul.bf16.gmra.mxu0 %v1518
      %v1951 = vpop.f32.mrf.mxu0
      %v1952 = vadd.f32 %v1863, %v1951
      %v1953 = vpop.f32.mrf.mxu0
      %v1954 = vadd.f32 %v1865, %v1953
      %1955 = vmatmul.bf16.gmra.mxu0 %v1521
      %v1956 = vpop.f32.mrf.mxu0
      %v1957 = vadd.f32 %v1868, %v1956
      %v1958 = vpop.f32.mrf.mxu0
      %v1959 = vadd.f32 %v1870, %v1958
      %1960 = vmatmul.bf16.gmra.mxu0 %v1524
      %v1961 = vpop.f32.mrf.mxu0
      %v1962 = vadd.f32 %v1873, %v1961
      %v1963 = vpop.f32.mrf.mxu0
      %v1964 = vadd.f32 %v1875, %v1963
      %1965 = vmatmul.bf16.gmra.mxu0 %v1527
      %v1966 = vpop.f32.mrf.mxu0
      %v1967 = vadd.f32 %v1878, %v1966
      %v1968 = vpop.f32.mrf.mxu0
      %v1969 = vadd.f32 %v1880, %v1968
      %1970 = vmatmul.bf16.gmra.mxu0 %v1530
      %v1971 = vpop.f32.mrf.mxu0
      %v1972 = vadd.f32 %v1883, %v1971
      %v1973 = vpop.f32.mrf.mxu0
      %v1974 = vadd.f32 %v1885, %v1973
      %1975 = vmatmul.bf16.gmra.mxu0 %v1533
      %v1976 = vpop.f32.mrf.mxu0
      %v1977 = vadd.f32 %v1888, %v1976
      %v1978 = vpop.f32.mrf.mxu0
      %v1979 = vadd.f32 %v1890, %v1978
      %1980 = vmatmul.bf16.gmra.mxu0 %v1536
      %v1981 = vpop.f32.mrf.mxu0
      %v1982 = vadd.f32 %v1893, %v1981
      %v1983 = vpop.f32.mrf.mxu0
      %v1984 = vadd.f32 %v1895, %v1983
      %1985 = vmatmul.bf16.gmra.mxu0 %v1539
      %v1986 = vpop.f32.mrf.mxu0
      %v1987 = vadd.f32 %v1898, %v1986
      %v1988 = vpop.f32.mrf.mxu0
      %v1989 = vadd.f32 %v1900, %v1988
      %1990 = vmatmul.bf16.gmra.mxu0 %v1542
      %v1991 = vpop.f32.mrf.mxu0
      %v1992 = vadd.f32 %v1903, %v1991
      %v1993 = vpop.f32.mrf.mxu0
      %v1994 = vadd.f32 %v1905, %v1993
      %1995 = vmatmul.bf16.gmra.mxu0 %v1545
      %v1996 = vpop.f32.mrf.mxu0
      %v1997 = vadd.f32 %v1908, %v1996
      %v1998 = vpop.f32.mrf.mxu0
      %v1999 = vadd.f32 %v1910, %v1998
      %2000 = vmatmul.bf16.gmra.mxu0 %v1548
      %v2001 = vpop.f32.mrf.mxu0
      %v2002 = vadd.f32 %v1913, %v2001
      %v2003 = vpop.f32.mrf.mxu0
      %v2004 = vadd.f32 %v1915, %v2003
      %2005 = vmatmul.bf16.gmra.mxu0 %v1551
      %v2006 = vpop.f32.mrf.mxu0
      %v2007 = vadd.f32 %v1918, %v2006
      %v2008 = vpop.f32.mrf.mxu0
      %v2009 = vadd.f32 %v1920, %v2008
      %2010 = vdwg.mxu0
      %v2011 = vadd.f32 %v1200, %v1932
      %v2012 = vadd.f32 %v1201, %v1934
      %v2013 = vadd.f32 %v1202, %v1937
      %v2014 = vadd.f32 %v1203, %v1939
      %v2015 = vadd.f32 %v1204, %v1942
      %v2016 = vadd.f32 %v1205, %v1944
      %v2017 = vadd.f32 %v1206, %v1947
      %v2018 = vadd.f32 %v1207, %v1949
      %v2019 = vadd.f32 %v1208, %v1952
      %v2020 = vadd.f32 %v1209, %v1954
      %v2021 = vadd.f32 %v1210, %v1957
      %v2022 = vadd.f32 %v1211, %v1959
      %v2023 = vadd.f32 %v1212, %v1962
      %v2024 = vadd.f32 %v1213, %v1964
      %v2025 = vadd.f32 %v1214, %v1967
      %v2026 = vadd.f32 %v1215, %v1969
      %v2027 = vadd.f32 %v1216, %v1972
      %v2028 = vadd.f32 %v1217, %v1974
      %v2029 = vadd.f32 %v1218, %v1977
      %v2030 = vadd.f32 %v1219, %v1979
      %v2031 = vadd.f32 %v1220, %v1982
      %v2032 = vadd.f32 %v1221, %v1984
      %v2033 = vadd.f32 %v1222, %v1987
      %v2034 = vadd.f32 %v1223, %v1989
      %v2035 = vadd.f32 %v1224, %v1992
      %v2036 = vadd.f32 %v1225, %v1994
      %v2037 = vadd.f32 %v1226, %v1997
      %v2038 = vadd.f32 %v1227, %v1999
      %v2039 = vadd.f32 %v1228, %v2002
      %v2040 = vadd.f32 %v1229, %v2004
      %v2041 = vadd.f32 %v1230, %v2007
      %v2042 = vadd.f32 %v1231, %v2009
      %2043 = vst [vmem:[#allocation3] sm:$0xff] %v2011
      %2044 = vst [vmem:[#allocation3 + $0x8] sm:$0xff] %v2012
      %2045 = vst [vmem:[#allocation3 + $0x10] sm:$0xff] %v2013
      %2046 = vst [vmem:[#allocation3 + $0x18] sm:$0xff] %v2014
      %2047 = vst [vmem:[#allocation3 + $0x20] sm:$0xff] %v2015
      %2048 = vst [vmem:[#allocation3 + $0x28] sm:$0xff] %v2016
      %2049 = vst [vmem:[#allocation3 + $0x30] sm:$0xff] %v2017
      %2050 = vst [vmem:[#allocation3 + $0x38] sm:$0xff] %v2018
      %2051 = vst [vmem:[#allocation3 + $0x40] sm:$0xff] %v2019
      %2052 = vst [vmem:[#allocation3 + $0x48] sm:$0xff] %v2020
      %2053 = vst [vmem:[#allocation3 + $0x50] sm:$0xff] %v2021
      %2054 = vst [vmem:[#allocation3 + $0x58] sm:$0xff] %v2022
      %2055 = vst [vmem:[#allocation3 + $0x60] sm:$0xff] %v2023
      %2056 = vst [vmem:[#allocation3 + $0x68] sm:$0xff] %v2024
      %2057 = vst [vmem:[#allocation3 + $0x70] sm:$0xff] %v2025
      %2058 = vst [vmem:[#allocation3 + $0x78] sm:$0xff] %v2026
      %2059 = vst [vmem:[#allocation3 + $0x80] sm:$0xff] %v2027
      %2060 = vst [vmem:[#allocation3 + $0x88] sm:$0xff] %v2028
      %2061 = vst [vmem:[#allocation3 + $0x90] sm:$0xff] %v2029
      %2062 = vst [vmem:[#allocation3 + $0x98] sm:$0xff] %v2030
      %2063 = vst [vmem:[#allocation3 + $0xa0] sm:$0xff] %v2031
      %2064 = vst [vmem:[#allocation3 + $0xa8] sm:$0xff] %v2032
      %2065 = vst [vmem:[#allocation3 + $0xb0] sm:$0xff] %v2033
      %2066 = vst [vmem:[#allocation3 + $0xb8] sm:$0xff] %v2034
      %2067 = vst [vmem:[#allocation3 + $0xc0] sm:$0xff] %v2035
      %2068 = vst [vmem:[#allocation3 + $0xc8] sm:$0xff] %v2036
      %2069 = vst [vmem:[#allocation3 + $0xd0] sm:$0xff] %v2037
      %2070 = vst [vmem:[#allocation3 + $0xd8] sm:$0xff] %v2038
      %2071 = vst [vmem:[#allocation3 + $0xe0] sm:$0xff] %v2039
      %2072 = vst [vmem:[#allocation3 + $0xe8] sm:$0xff] %v2040
      %2073 = vst [vmem:[#allocation3 + $0xf0] sm:$0xff] %v2041
      %2074 = vst [vmem:[#allocation3 + $0xf8] sm:$0xff] %v2042
      %v2075 = vld [vmem:[#allocation3] sm:$0xff]
      %v2076 = vld [vmem:[#allocation3 + $0x8] sm:$0xff]
      %v2077 = vld [vmem:[#allocation3 + $0x10] sm:$0xff]
      %v2078 = vld [vmem:[#allocation3 + $0x18] sm:$0xff]
      %v2079 = vld [vmem:[#allocation3 + $0x20] sm:$0xff]
      %v2080 = vld [vmem:[#allocation3 + $0x28] sm:$0xff]
      %v2081 = vld [vmem:[#allocation3 + $0x30] sm:$0xff]
      %v2082 = vld [vmem:[#allocation3 + $0x38] sm:$0xff]
      %v2083 = vld [vmem:[#allocation3 + $0x40] sm:$0xff]
      %v2084 = vld [vmem:[#allocation3 + $0x48] sm:$0xff]
      %v2085 = vld [vmem:[#allocation3 + $0x50] sm:$0xff]
      %v2086 = vld [vmem:[#allocation3 + $0x58] sm:$0xff]
      %v2087 = vld [vmem:[#allocation3 + $0x60] sm:$0xff]
      %v2088 = vld [vmem:[#allocation3 + $0x68] sm:$0xff]
      %v2089 = vld [vmem:[#allocation3 + $0x70] sm:$0xff]
      %v2090 = vld [vmem:[#allocation3 + $0x78] sm:$0xff]
      %v2091 = vld [vmem:[#allocation3 + $0x80] sm:$0xff]
      %v2092 = vld [vmem:[#allocation3 + $0x88] sm:$0xff]
      %v2093 = vld [vmem:[#allocation3 + $0x90] sm:$0xff]
      %v2094 = vld [vmem:[#allocation3 + $0x98] sm:$0xff]
      %v2095 = vld [vmem:[#allocation3 + $0xa0] sm:$0xff]
      %v2096 = vld [vmem:[#allocation3 + $0xa8] sm:$0xff]
      %v2097 = vld [vmem:[#allocation3 + $0xb0] sm:$0xff]
      %v2098 = vld [vmem:[#allocation3 + $0xb8] sm:$0xff]
      %v2099 = vld [vmem:[#allocation3 + $0xc0] sm:$0xff]
      %v2100 = vld [vmem:[#allocation3 + $0xc8] sm:$0xff]
      %v2101 = vld [vmem:[#allocation3 + $0xd0] sm:$0xff]
      %v2102 = vld [vmem:[#allocation3 + $0xd8] sm:$0xff]
      %v2103 = vld [vmem:[#allocation3 + $0xe0] sm:$0xff]
      %v2104 = vld [vmem:[#allocation3 + $0xe8] sm:$0xff]
      %v2105 = vld [vmem:[#allocation3 + $0xf0] sm:$0xff]
      %v2106 = vld [vmem:[#allocation3 + $0xf8] sm:$0xff]
      %s2107 = scalar_lea.vmem [#allocation2], 24
      %v2108 = vld [vmem:[%s2107] sm:$0xff]
      %v2109 = vld [vmem:[%s2107 + $0x8] sm:$0xf]
      %v2110 = vld [vmem:[%s2107 + $0xc] sm:$0xff]
      %v2111 = vld [vmem:[%s2107 + $0x14] sm:$0xf]
      %v2112 = vld [vmem:[%s2107 + $0x18] sm:$0xff]
      %v2113 = vld [vmem:[%s2107 + $0x20] sm:$0xf]
      %v2114 = vld [vmem:[%s2107 + $0x24] sm:$0xff]
      %v2115 = vld [vmem:[%s2107 + $0x2c] sm:$0xf]
      %v2116 = vld [vmem:[%s2107 + $0x30] sm:$0xff]
      %v2117 = vld [vmem:[%s2107 + $0x38] sm:$0xf]
      %v2118 = vld [vmem:[%s2107 + $0x3c] sm:$0xff]
      %v2119 = vld [vmem:[%s2107 + $0x44] sm:$0xf]
      %v2120 = vld [vmem:[%s2107 + $0x48] sm:$0xff]
      %v2121 = vld [vmem:[%s2107 + $0x50] sm:$0xf]
      %v2122 = vld [vmem:[%s2107 + $0x54] sm:$0xff]
      %v2123 = vld [vmem:[%s2107 + $0x5c] sm:$0xf]
      %v2124 = vld [vmem:[%s2107 + $0x60] sm:$0xff]
      %v2125 = vld [vmem:[%s2107 + $0x68] sm:$0xf]
      %v2126 = vld [vmem:[%s2107 + $0x6c] sm:$0xff]
      %v2127 = vld [vmem:[%s2107 + $0x74] sm:$0xf]
      %v2128 = vld [vmem:[%s2107 + $0x78] sm:$0xff]
      %v2129 = vld [vmem:[%s2107 + $0x80] sm:$0xf]
      %v2130 = vld [vmem:[%s2107 + $0x84] sm:$0xff]
      %v2131 = vld [vmem:[%s2107 + $0x8c] sm:$0xf]
      %v2132 = vld [vmem:[%s2107 + $0x90] sm:$0xff]
      %v2133 = vld [vmem:[%s2107 + $0x98] sm:$0xf]
      %v2134 = vld [vmem:[%s2107 + $0x9c] sm:$0xff]
      %v2135 = vld [vmem:[%s2107 + $0xa4] sm:$0xf]
      %v2136 = vld [vmem:[%s2107 + $0xa8] sm:$0xff]
      %v2137 = vld [vmem:[%s2107 + $0xb0] sm:$0xf]
      %v2138 = vld [vmem:[%s2107 + $0xb4] sm:$0xff]
      %v2139 = vld [vmem:[%s2107 + $0xbc] sm:$0xf]
      %v2140 = vld [vmem:[%s2107 + $0xc0] sm:$0xff]
      %v2141 = vld [vmem:[%s2107 + $0xc8] sm:$0xf]
      %v2142 = vld [vmem:[%s2107 + $0xcc] sm:$0xff]
      %v2143 = vld [vmem:[%s2107 + $0xd4] sm:$0xf]
      %v2144 = vld [vmem:[%s2107 + $0xd8] sm:$0xff]
      %v2145 = vld [vmem:[%s2107 + $0xe0] sm:$0xf]
      %v2146 = vld [vmem:[%s2107 + $0xe4] sm:$0xff]
      %v2147 = vld [vmem:[%s2107 + $0xec] sm:$0xf]
      %v2148 = vld [vmem:[%s2107 + $0xf0] sm:$0xff]
      %v2149 = vld [vmem:[%s2107 + $0xf8] sm:$0xf]
      %v2150 = vld [vmem:[%s2107 + $0xfc] sm:$0xff]
      %v2151 = vld [vmem:[%s2107 + $0x104] sm:$0xf]
      %v2152 = vld [vmem:[%s2107 + $0x108] sm:$0xff]
      %v2153 = vld [vmem:[%s2107 + $0x110] sm:$0xf]
      %v2154 = vld [vmem:[%s2107 + $0x114] sm:$0xff]
      %v2155 = vld [vmem:[%s2107 + $0x11c] sm:$0xf]
      %v2156 = vld [vmem:[%s2107 + $0x120] sm:$0xff]
      %v2157 = vld [vmem:[%s2107 + $0x128] sm:$0xf]
      %v2158 = vld [vmem:[%s2107 + $0x12c] sm:$0xff]
      %v2159 = vld [vmem:[%s2107 + $0x134] sm:$0xf]
      %v2160 = vld [vmem:[%s2107 + $0x138] sm:$0xff]
      %v2161 = vld [vmem:[%s2107 + $0x140] sm:$0xf]
      %v2162 = vld [vmem:[%s2107 + $0x144] sm:$0xff]
      %v2163 = vld [vmem:[%s2107 + $0x14c] sm:$0xf]
      %v2164 = vld [vmem:[%s2107 + $0x150] sm:$0xff]
      %v2165 = vld [vmem:[%s2107 + $0x158] sm:$0xf]
      %v2166 = vld [vmem:[%s2107 + $0x15c] sm:$0xff]
      %v2167 = vld [vmem:[%s2107 + $0x164] sm:$0xf]
      %v2168 = vld [vmem:[%s2107 + $0x168] sm:$0xff]
      %v2169 = vld [vmem:[%s2107 + $0x170] sm:$0xf]
      %v2170 = vld [vmem:[%s2107 + $0x174] sm:$0xff]
      %v2171 = vld [vmem:[%s2107 + $0x17c] sm:$0xf]
      %s2172 = scalar_lea.vmem %s210, 192
      %v2173 = vld [vmem:[%s2172] sm:$0xf]
      %v2174 = vld [vmem:[%s2172 + $0x4] sm:$0xf]
      %v2175 = vld [vmem:[%s2172 + $0x8] sm:$0xf]
      %v2176 = vld [vmem:[%s2172 + $0xc] sm:$0xf]
      %v2177 = vld [vmem:[%s2172 + $0x10] sm:$0xf]
      %v2178 = vld [vmem:[%s2172 + $0x14] sm:$0xf]
      %v2179 = vld [vmem:[%s2172 + $0x18] sm:$0xf]
      %v2180 = vld [vmem:[%s2172 + $0x1c] sm:$0xf]
      %v2181 = vld [vmem:[%s2172 + $0x20] sm:$0xf]
      %v2182 = vld [vmem:[%s2172 + $0x24] sm:$0xf]
      %v2183 = vld [vmem:[%s2172 + $0x28] sm:$0xf]
      %v2184 = vld [vmem:[%s2172 + $0x2c] sm:$0xf]
      %v2185 = vld [vmem:[%s2172 + $0x30] sm:$0xf]
      %v2186 = vld [vmem:[%s2172 + $0x34] sm:$0xf]
      %v2187 = vld [vmem:[%s2172 + $0x38] sm:$0xf]
      %v2188 = vld [vmem:[%s2172 + $0x3c] sm:$0xf]
      %v2189 = vld [vmem:[%s2172 + $0x40] sm:$0xf]
      %v2190 = vld [vmem:[%s2172 + $0x44] sm:$0xf]
      %v2191 = vld [vmem:[%s2172 + $0x48] sm:$0xf]
      %v2192 = vld [vmem:[%s2172 + $0x4c] sm:$0xf]
      %v2193 = vld [vmem:[%s2172 + $0x50] sm:$0xf]
      %v2194 = vld [vmem:[%s2172 + $0x54] sm:$0xf]
      %v2195 = vld [vmem:[%s2172 + $0x58] sm:$0xf]
      %v2196 = vld [vmem:[%s2172 + $0x5c] sm:$0xf]
      %v2197 = vld [vmem:[%s2172 + $0x60] sm:$0xf]
      %v2198 = vld [vmem:[%s2172 + $0x64] sm:$0xf]
      %v2199 = vld [vmem:[%s2172 + $0x68] sm:$0xf]
      %v2200 = vld [vmem:[%s2172 + $0x6c] sm:$0xf]
      %v2201 = vld [vmem:[%s2172 + $0x70] sm:$0xf]
      %v2202 = vld [vmem:[%s2172 + $0x74] sm:$0xf]
      %v2203 = vld [vmem:[%s2172 + $0x78] sm:$0xf]
      %v2204 = vld [vmem:[%s2172 + $0x7c] sm:$0xf]
      %v2205 = vld [vmem:[%s2172 + $0x80] sm:$0xf]
      %v2206 = vld [vmem:[%s2172 + $0x84] sm:$0xf]
      %v2207 = vld [vmem:[%s2172 + $0x88] sm:$0xf]
      %v2208 = vld [vmem:[%s2172 + $0x8c] sm:$0xf]
      %v2209 = vld [vmem:[%s2172 + $0x90] sm:$0xf]
      %v2210 = vld [vmem:[%s2172 + $0x94] sm:$0xf]
      %v2211 = vld [vmem:[%s2172 + $0x98] sm:$0xf]
      %v2212 = vld [vmem:[%s2172 + $0x9c] sm:$0xf]
      %v2213 = vld [vmem:[%s2172 + $0xa0] sm:$0xf]
      %v2214 = vld [vmem:[%s2172 + $0xa4] sm:$0xf]
      %v2215 = vld [vmem:[%s2172 + $0xa8] sm:$0xf]
      %v2216 = vld [vmem:[%s2172 + $0xac] sm:$0xf]
      %v2217 = vld [vmem:[%s2172 + $0xb0] sm:$0xf]
      %v2218 = vld [vmem:[%s2172 + $0xb4] sm:$0xf]
      %v2219 = vld [vmem:[%s2172 + $0xb8] sm:$0xf]
      %v2220 = vld [vmem:[%s2172 + $0xbc] sm:$0xf]
      %v2285 = vunpack.c.l.b16 %v2108
      %v2286 = vunpack.c.h.b16 %v2108
      %v2287 = vunpack.c.l.b16 %v2109
      %v2288 = vunpack.c.l.b16 %v2110
      %v2289 = vunpack.c.h.b16 %v2110
      %v2290 = vunpack.c.l.b16 %v2111
      %v2291 = vunpack.c.l.b16 %v2112
      %v2292 = vunpack.c.h.b16 %v2112
      %v2293 = vunpack.c.l.b16 %v2113
      %v2294 = vunpack.c.l.b16 %v2114
      %v2295 = vunpack.c.h.b16 %v2114
      %v2296 = vunpack.c.l.b16 %v2115
      %v2297 = vunpack.c.l.b16 %v2116
      %v2298 = vunpack.c.h.b16 %v2116
      %v2299 = vunpack.c.l.b16 %v2117
      %v2300 = vunpack.c.l.b16 %v2118
      %v2301 = vunpack.c.h.b16 %v2118
      %v2302 = vunpack.c.l.b16 %v2119
      %v2303 = vunpack.c.l.b16 %v2120
      %v2304 = vunpack.c.h.b16 %v2120
      %v2305 = vunpack.c.l.b16 %v2121
      %v2306 = vunpack.c.l.b16 %v2122
      %v2307 = vunpack.c.h.b16 %v2122
      %v2308 = vunpack.c.l.b16 %v2123
      %v2309 = vunpack.c.l.b16 %v2124
      %v2310 = vunpack.c.h.b16 %v2124
      %v2311 = vunpack.c.l.b16 %v2125
      %v2312 = vunpack.c.l.b16 %v2126
      %v2313 = vunpack.c.h.b16 %v2126
      %v2314 = vunpack.c.l.b16 %v2127
      %v2315 = vunpack.c.l.b16 %v2128
      %v2316 = vunpack.c.h.b16 %v2128
      %v2317 = vunpack.c.l.b16 %v2129
      %v2318 = vunpack.c.l.b16 %v2130
      %v2319 = vunpack.c.h.b16 %v2130
      %v2320 = vunpack.c.l.b16 %v2131
      %v2321 = vunpack.c.l.b16 %v2132
      %v2322 = vunpack.c.h.b16 %v2132
      %v2323 = vunpack.c.l.b16 %v2133
      %v2324 = vunpack.c.l.b16 %v2134
      %v2325 = vunpack.c.h.b16 %v2134
      %v2326 = vunpack.c.l.b16 %v2135
      %v2327 = vunpack.c.l.b16 %v2136
      %v2328 = vunpack.c.h.b16 %v2136
      %v2329 = vunpack.c.l.b16 %v2137
      %v2330 = vunpack.c.l.b16 %v2138
      %v2331 = vunpack.c.h.b16 %v2138
      %v2332 = vunpack.c.l.b16 %v2139
      %v2333 = vunpack.c.l.b16 %v2140
      %v2334 = vunpack.c.h.b16 %v2140
      %v2335 = vunpack.c.l.b16 %v2141
      %v2336 = vunpack.c.l.b16 %v2142
      %v2337 = vunpack.c.h.b16 %v2142
      %v2338 = vunpack.c.l.b16 %v2143
      %v2339 = vunpack.c.l.b16 %v2144
      %v2340 = vunpack.c.h.b16 %v2144
      %v2341 = vunpack.c.l.b16 %v2145
      %v2342 = vunpack.c.l.b16 %v2146
      %v2343 = vunpack.c.h.b16 %v2146
      %v2344 = vunpack.c.l.b16 %v2147
      %v2345 = vunpack.c.l.b16 %v2148
      %v2346 = vunpack.c.h.b16 %v2148
      %v2347 = vunpack.c.l.b16 %v2149
      %v2348 = vunpack.c.l.b16 %v2150
      %v2349 = vunpack.c.h.b16 %v2150
      %v2350 = vunpack.c.l.b16 %v2151
      %v2351 = vunpack.c.l.b16 %v2152
      %v2352 = vunpack.c.h.b16 %v2152
      %v2353 = vunpack.c.l.b16 %v2153
      %v2354 = vunpack.c.l.b16 %v2154
      %v2355 = vunpack.c.h.b16 %v2154
      %v2356 = vunpack.c.l.b16 %v2155
      %v2357 = vunpack.c.l.b16 %v2156
      %v2358 = vunpack.c.h.b16 %v2156
      %v2359 = vunpack.c.l.b16 %v2157
      %v2360 = vunpack.c.l.b16 %v2158
      %v2361 = vunpack.c.h.b16 %v2158
      %v2362 = vunpack.c.l.b16 %v2159
      %v2363 = vunpack.c.l.b16 %v2160
      %v2364 = vunpack.c.h.b16 %v2160
      %v2365 = vunpack.c.l.b16 %v2161
      %v2366 = vunpack.c.l.b16 %v2162
      %v2367 = vunpack.c.h.b16 %v2162
      %v2368 = vunpack.c.l.b16 %v2163
      %v2369 = vunpack.c.l.b16 %v2164
      %v2370 = vunpack.c.h.b16 %v2164
      %v2371 = vunpack.c.l.b16 %v2165
      %v2372 = vunpack.c.l.b16 %v2166
      %v2373 = vunpack.c.h.b16 %v2166
      %v2374 = vunpack.c.l.b16 %v2167
      %v2375 = vunpack.c.l.b16 %v2168
      %v2376 = vunpack.c.h.b16 %v2168
      %v2377 = vunpack.c.l.b16 %v2169
      %v2378 = vunpack.c.l.b16 %v2170
      %v2379 = vunpack.c.h.b16 %v2170
      %v2380 = vunpack.c.l.b16 %v2171
      %v2381 = vpack.c.b16 %v2288, %v2285
      %v2382 = vpack.c.b16 %v2289, %v2286
      %v2383 = vpack.c.b16 %v2290, %v2287
      %v2384 = vpack.c.b16 %v2294, %v2291
      %v2385 = vpack.c.b16 %v2295, %v2292
      %v2386 = vpack.c.b16 %v2296, %v2293
      %v2387 = vpack.c.b16 %v2300, %v2297
      %v2388 = vpack.c.b16 %v2301, %v2298
      %v2389 = vpack.c.b16 %v2302, %v2299
      %v2390 = vpack.c.b16 %v2306, %v2303
      %v2391 = vpack.c.b16 %v2307, %v2304
      %v2392 = vpack.c.b16 %v2308, %v2305
      %v2393 = vpack.c.b16 %v2312, %v2309
      %v2394 = vpack.c.b16 %v2313, %v2310
      %v2395 = vpack.c.b16 %v2314, %v2311
      %v2396 = vpack.c.b16 %v2318, %v2315
      %v2397 = vpack.c.b16 %v2319, %v2316
      %v2398 = vpack.c.b16 %v2320, %v2317
      %v2399 = vpack.c.b16 %v2324, %v2321
      %v2400 = vpack.c.b16 %v2325, %v2322
      %v2401 = vpack.c.b16 %v2326, %v2323
      %v2402 = vpack.c.b16 %v2330, %v2327
      %v2403 = vpack.c.b16 %v2331, %v2328
      %v2404 = vpack.c.b16 %v2332, %v2329
      %v2405 = vpack.c.b16 %v2336, %v2333
      %v2406 = vpack.c.b16 %v2337, %v2334
      %v2407 = vpack.c.b16 %v2338, %v2335
      %v2408 = vpack.c.b16 %v2342, %v2339
      %v2409 = vpack.c.b16 %v2343, %v2340
      %v2410 = vpack.c.b16 %v2344, %v2341
      %v2411 = vpack.c.b16 %v2348, %v2345
      %v2412 = vpack.c.b16 %v2349, %v2346
      %v2413 = vpack.c.b16 %v2350, %v2347
      %v2414 = vpack.c.b16 %v2354, %v2351
      %v2415 = vpack.c.b16 %v2355, %v2352
      %v2416 = vpack.c.b16 %v2356, %v2353
      %v2417 = vpack.c.b16 %v2360, %v2357
      %v2418 = vpack.c.b16 %v2361, %v2358
      %v2419 = vpack.c.b16 %v2362, %v2359
      %v2420 = vpack.c.b16 %v2366, %v2363
      %v2421 = vpack.c.b16 %v2367, %v2364
      %v2422 = vpack.c.b16 %v2368, %v2365
      %v2423 = vpack.c.b16 %v2372, %v2369
      %v2424 = vpack.c.b16 %v2373, %v2370
      %v2425 = vpack.c.b16 %v2374, %v2371
      %v2426 = vpack.c.b16 %v2378, %v2375
      %v2427 = vpack.c.b16 %v2379, %v2376
      %v2428 = vpack.c.b16 %v2380, %v2377
      %v2525 = vunpack.c.l.b16 %v2173
      %v2526 = vunpack.c.l.b16 %v2174
      %v2527 = vunpack.c.l.b16 %v2175
      %v2528 = vunpack.c.l.b16 %v2176
      %v2529 = vunpack.c.l.b16 %v2177
      %v2530 = vunpack.c.l.b16 %v2178
      %v2531 = vunpack.c.l.b16 %v2179
      %v2532 = vunpack.c.l.b16 %v2180
      %v2533 = vunpack.c.l.b16 %v2181
      %v2534 = vunpack.c.l.b16 %v2182
      %v2535 = vunpack.c.l.b16 %v2183
      %v2536 = vunpack.c.l.b16 %v2184
      %v2537 = vunpack.c.l.b16 %v2185
      %v2538 = vunpack.c.l.b16 %v2186
      %v2539 = vunpack.c.l.b16 %v2187
      %v2540 = vunpack.c.l.b16 %v2188
      %v2541 = vunpack.c.l.b16 %v2189
      %v2542 = vunpack.c.l.b16 %v2190
      %v2543 = vunpack.c.l.b16 %v2191
      %v2544 = vunpack.c.l.b16 %v2192
      %v2545 = vunpack.c.l.b16 %v2193
      %v2546 = vunpack.c.l.b16 %v2194
      %v2547 = vunpack.c.l.b16 %v2195
      %v2548 = vunpack.c.l.b16 %v2196
      %v2549 = vunpack.c.l.b16 %v2197
      %v2550 = vunpack.c.l.b16 %v2198
      %v2551 = vunpack.c.l.b16 %v2199
      %v2552 = vunpack.c.l.b16 %v2200
      %v2553 = vunpack.c.l.b16 %v2201
      %v2554 = vunpack.c.l.b16 %v2202
      %v2555 = vunpack.c.l.b16 %v2203
      %v2556 = vunpack.c.l.b16 %v2204
      %v2557 = vunpack.c.l.b16 %v2205
      %v2558 = vunpack.c.l.b16 %v2206
      %v2559 = vunpack.c.l.b16 %v2207
      %v2560 = vunpack.c.l.b16 %v2208
      %v2561 = vunpack.c.l.b16 %v2209
      %v2562 = vunpack.c.l.b16 %v2210
      %v2563 = vunpack.c.l.b16 %v2211
      %v2564 = vunpack.c.l.b16 %v2212
      %v2565 = vunpack.c.l.b16 %v2213
      %v2566 = vunpack.c.l.b16 %v2214
      %v2567 = vunpack.c.l.b16 %v2215
      %v2568 = vunpack.c.l.b16 %v2216
      %v2569 = vunpack.c.l.b16 %v2217
      %v2570 = vunpack.c.l.b16 %v2218
      %v2571 = vunpack.c.l.b16 %v2219
      %v2572 = vunpack.c.l.b16 %v2220
      %v2573 = vpack.c.b16 %v2526, %v2525
      %v2574 = vpack.c.b16 %v2528, %v2527
      %v2575 = vpack.c.b16 %v2530, %v2529
      %v2576 = vpack.c.b16 %v2532, %v2531
      %v2577 = vpack.c.b16 %v2534, %v2533
      %v2578 = vpack.c.b16 %v2536, %v2535
      %v2579 = vpack.c.b16 %v2538, %v2537
      %v2580 = vpack.c.b16 %v2540, %v2539
      %v2581 = vpack.c.b16 %v2542, %v2541
      %v2582 = vpack.c.b16 %v2544, %v2543
      %v2583 = vpack.c.b16 %v2546, %v2545
      %v2584 = vpack.c.b16 %v2548, %v2547
      %v2585 = vpack.c.b16 %v2550, %v2549
      %v2586 = vpack.c.b16 %v2552, %v2551
      %v2587 = vpack.c.b16 %v2554, %v2553
      %v2588 = vpack.c.b16 %v2556, %v2555
      %v2589 = vpack.c.b16 %v2558, %v2557
      %v2590 = vpack.c.b16 %v2560, %v2559
      %v2591 = vpack.c.b16 %v2562, %v2561
      %v2592 = vpack.c.b16 %v2564, %v2563
      %v2593 = vpack.c.b16 %v2566, %v2565
      %v2594 = vpack.c.b16 %v2568, %v2567
      %v2595 = vpack.c.b16 %v2570, %v2569
      %v2596 = vpack.c.b16 %v2572, %v2571
      %2621 = vmatpush.bf16.msra.mxu0 %v2580
      %2622 = vmatpush.bf16.msra.mxu0 %v2579
      %2623 = vmatpush.bf16.msra.mxu0 %v2578
      %2624 = vmatpush.bf16.msra.mxu0 %v2577
      %2625 = vmatpush.bf16.msra.mxu0 %v2576
      %2626 = vmatpush.bf16.msra.mxu0 %v2575
      %2627 = vmatpush.bf16.msra.mxu0 %v2574
      %2628 = vmatpush.bf16.msra.mxu0 %v2573
      %2629 = vmatmul.bf16.gmra.mxu0 %v2381
      %v2630 = vpop.f32.mrf.mxu0
      %v2631 = vadd.f32 0.0, %v2630
      %v2632 = vpop.f32.mrf.mxu0
      %v2633 = vadd.f32 0.0, %v2632
      %2634 = vmatmul.bf16.gmra.mxu0 %v2384
      %v2635 = vpop.f32.mrf.mxu0
      %v2636 = vadd.f32 0.0, %v2635
      %v2637 = vpop.f32.mrf.mxu0
      %v2638 = vadd.f32 0.0, %v2637
      %2639 = vmatmul.bf16.gmra.mxu0 %v2387
      %v2640 = vpop.f32.mrf.mxu0
      %v2641 = vadd.f32 0.0, %v2640
      %v2642 = vpop.f32.mrf.mxu0
      %v2643 = vadd.f32 0.0, %v2642
      %2644 = vmatmul.bf16.gmra.mxu0 %v2390
      %v2645 = vpop.f32.mrf.mxu0
      %v2646 = vadd.f32 0.0, %v2645
      %v2647 = vpop.f32.mrf.mxu0
      %v2648 = vadd.f32 0.0, %v2647
      %2649 = vmatmul.bf16.gmra.mxu0 %v2393
      %v2650 = vpop.f32.mrf.mxu0
      %v2651 = vadd.f32 0.0, %v2650
      %v2652 = vpop.f32.mrf.mxu0
      %v2653 = vadd.f32 0.0, %v2652
      %2654 = vmatmul.bf16.gmra.mxu0 %v2396
      %v2655 = vpop.f32.mrf.mxu0
      %v2656 = vadd.f32 0.0, %v2655
      %v2657 = vpop.f32.mrf.mxu0
      %v2658 = vadd.f32 0.0, %v2657
      %2659 = vmatmul.bf16.gmra.mxu0 %v2399
      %v2660 = vpop.f32.mrf.mxu0
      %v2661 = vadd.f32 0.0, %v2660
      %v2662 = vpop.f32.mrf.mxu0
      %v2663 = vadd.f32 0.0, %v2662
      %2664 = vmatmul.bf16.gmra.mxu0 %v2402
      %v2665 = vpop.f32.mrf.mxu0
      %v2666 = vadd.f32 0.0, %v2665
      %v2667 = vpop.f32.mrf.mxu0
      %v2668 = vadd.f32 0.0, %v2667
      %2669 = vmatmul.bf16.gmra.mxu0 %v2405
      %v2670 = vpop.f32.mrf.mxu0
      %v2671 = vadd.f32 0.0, %v2670
      %v2672 = vpop.f32.mrf.mxu0
      %v2673 = vadd.f32 0.0, %v2672
      %2674 = vmatmul.bf16.gmra.mxu0 %v2408
      %v2675 = vpop.f32.mrf.mxu0
      %v2676 = vadd.f32 0.0, %v2675
      %v2677 = vpop.f32.mrf.mxu0
      %v2678 = vadd.f32 0.0, %v2677
      %2679 = vmatmul.bf16.gmra.mxu0 %v2411
      %v2680 = vpop.f32.mrf.mxu0
      %v2681 = vadd.f32 0.0, %v2680
      %v2682 = vpop.f32.mrf.mxu0
      %v2683 = vadd.f32 0.0, %v2682
      %2684 = vmatmul.bf16.gmra.mxu0 %v2414
      %v2685 = vpop.f32.mrf.mxu0
      %v2686 = vadd.f32 0.0, %v2685
      %v2687 = vpop.f32.mrf.mxu0
      %v2688 = vadd.f32 0.0, %v2687
      %2689 = vmatmul.bf16.gmra.mxu0 %v2417
      %v2690 = vpop.f32.mrf.mxu0
      %v2691 = vadd.f32 0.0, %v2690
      %v2692 = vpop.f32.mrf.mxu0
      %v2693 = vadd.f32 0.0, %v2692
      %2694 = vmatmul.bf16.gmra.mxu0 %v2420
      %v2695 = vpop.f32.mrf.mxu0
      %v2696 = vadd.f32 0.0, %v2695
      %v2697 = vpop.f32.mrf.mxu0
      %v2698 = vadd.f32 0.0, %v2697
      %2699 = vmatmul.bf16.gmra.mxu0 %v2423
      %v2700 = vpop.f32.mrf.mxu0
      %v2701 = vadd.f32 0.0, %v2700
      %v2702 = vpop.f32.mrf.mxu0
      %v2703 = vadd.f32 0.0, %v2702
      %2704 = vmatmul.bf16.gmra.mxu0 %v2426
      %v2705 = vpop.f32.mrf.mxu0
      %v2706 = vadd.f32 0.0, %v2705
      %v2707 = vpop.f32.mrf.mxu0
      %v2708 = vadd.f32 0.0, %v2707
      %2709 = vdwg.mxu0
      %2710 = vmatpush.bf16.msra.mxu0 %v2588
      %2711 = vmatpush.bf16.msra.mxu0 %v2587
      %2712 = vmatpush.bf16.msra.mxu0 %v2586
      %2713 = vmatpush.bf16.msra.mxu0 %v2585
      %2714 = vmatpush.bf16.msra.mxu0 %v2584
      %2715 = vmatpush.bf16.msra.mxu0 %v2583
      %2716 = vmatpush.bf16.msra.mxu0 %v2582
      %2717 = vmatpush.bf16.msra.mxu0 %v2581
      %2718 = vmatmul.bf16.gmra.mxu0 %v2382
      %v2719 = vpop.f32.mrf.mxu0
      %v2720 = vadd.f32 %v2631, %v2719
      %v2721 = vpop.f32.mrf.mxu0
      %v2722 = vadd.f32 %v2633, %v2721
      %2723 = vmatmul.bf16.gmra.mxu0 %v2385
      %v2724 = vpop.f32.mrf.mxu0
      %v2725 = vadd.f32 %v2636, %v2724
      %v2726 = vpop.f32.mrf.mxu0
      %v2727 = vadd.f32 %v2638, %v2726
      %2728 = vmatmul.bf16.gmra.mxu0 %v2388
      %v2729 = vpop.f32.mrf.mxu0
      %v2730 = vadd.f32 %v2641, %v2729
      %v2731 = vpop.f32.mrf.mxu0
      %v2732 = vadd.f32 %v2643, %v2731
      %2733 = vmatmul.bf16.gmra.mxu0 %v2391
      %v2734 = vpop.f32.mrf.mxu0
      %v2735 = vadd.f32 %v2646, %v2734
      %v2736 = vpop.f32.mrf.mxu0
      %v2737 = vadd.f32 %v2648, %v2736
      %2738 = vmatmul.bf16.gmra.mxu0 %v2394
      %v2739 = vpop.f32.mrf.mxu0
      %v2740 = vadd.f32 %v2651, %v2739
      %v2741 = vpop.f32.mrf.mxu0
      %v2742 = vadd.f32 %v2653, %v2741
      %2743 = vmatmul.bf16.gmra.mxu0 %v2397
      %v2744 = vpop.f32.mrf.mxu0
      %v2745 = vadd.f32 %v2656, %v2744
      %v2746 = vpop.f32.mrf.mxu0
      %v2747 = vadd.f32 %v2658, %v2746
      %2748 = vmatmul.bf16.gmra.mxu0 %v2400
      %v2749 = vpop.f32.mrf.mxu0
      %v2750 = vadd.f32 %v2661, %v2749
      %v2751 = vpop.f32.mrf.mxu0
      %v2752 = vadd.f32 %v2663, %v2751
      %2753 = vmatmul.bf16.gmra.mxu0 %v2403
      %v2754 = vpop.f32.mrf.mxu0
      %v2755 = vadd.f32 %v2666, %v2754
      %v2756 = vpop.f32.mrf.mxu0
      %v2757 = vadd.f32 %v2668, %v2756
      %2758 = vmatmul.bf16.gmra.mxu0 %v2406
      %v2759 = vpop.f32.mrf.mxu0
      %v2760 = vadd.f32 %v2671, %v2759
      %v2761 = vpop.f32.mrf.mxu0
      %v2762 = vadd.f32 %v2673, %v2761
      %2763 = vmatmul.bf16.gmra.mxu0 %v2409
      %v2764 = vpop.f32.mrf.mxu0
      %v2765 = vadd.f32 %v2676, %v2764
      %v2766 = vpop.f32.mrf.mxu0
      %v2767 = vadd.f32 %v2678, %v2766
      %2768 = vmatmul.bf16.gmra.mxu0 %v2412
      %v2769 = vpop.f32.mrf.mxu0
      %v2770 = vadd.f32 %v2681, %v2769
      %v2771 = vpop.f32.mrf.mxu0
      %v2772 = vadd.f32 %v2683, %v2771
      %2773 = vmatmul.bf16.gmra.mxu0 %v2415
      %v2774 = vpop.f32.mrf.mxu0
      %v2775 = vadd.f32 %v2686, %v2774
      %v2776 = vpop.f32.mrf.mxu0
      %v2777 = vadd.f32 %v2688, %v2776
      %2778 = vmatmul.bf16.gmra.mxu0 %v2418
      %v2779 = vpop.f32.mrf.mxu0
      %v2780 = vadd.f32 %v2691, %v2779
      %v2781 = vpop.f32.mrf.mxu0
      %v2782 = vadd.f32 %v2693, %v2781
      %2783 = vmatmul.bf16.gmra.mxu0 %v2421
      %v2784 = vpop.f32.mrf.mxu0
      %v2785 = vadd.f32 %v2696, %v2784
      %v2786 = vpop.f32.mrf.mxu0
      %v2787 = vadd.f32 %v2698, %v2786
      %2788 = vmatmul.bf16.gmra.mxu0 %v2424
      %v2789 = vpop.f32.mrf.mxu0
      %v2790 = vadd.f32 %v2701, %v2789
      %v2791 = vpop.f32.mrf.mxu0
      %v2792 = vadd.f32 %v2703, %v2791
      %2793 = vmatmul.bf16.gmra.mxu0 %v2427
      %v2794 = vpop.f32.mrf.mxu0
      %v2795 = vadd.f32 %v2706, %v2794
      %v2796 = vpop.f32.mrf.mxu0
      %v2797 = vadd.f32 %v2708, %v2796
      %2798 = vdwg.mxu0
      %2799 = vmatpush.bf16.msra.mxu0 %v2596
      %2800 = vmatpush.bf16.msra.mxu0 %v2595
      %2801 = vmatpush.bf16.msra.mxu0 %v2594
      %2802 = vmatpush.bf16.msra.mxu0 %v2593
      %2803 = vmatpush.bf16.msra.mxu0 %v2592
      %2804 = vmatpush.bf16.msra.mxu0 %v2591
      %2805 = vmatpush.bf16.msra.mxu0 %v2590
      %2806 = vmatpush.bf16.msra.mxu0 %v2589
      %2807 = vmatmul.bf16.gmra.mxu0 %v2383
      %v2808 = vpop.f32.mrf.mxu0
      %v2809 = vadd.f32 %v2720, %v2808
      %v2810 = vpop.f32.mrf.mxu0
      %v2811 = vadd.f32 %v2722, %v2810
      %2812 = vmatmul.bf16.gmra.mxu0 %v2386
      %v2813 = vpop.f32.mrf.mxu0
      %v2814 = vadd.f32 %v2725, %v2813
      %v2815 = vpop.f32.mrf.mxu0
      %v2816 = vadd.f32 %v2727, %v2815
      %2817 = vmatmul.bf16.gmra.mxu0 %v2389
      %v2818 = vpop.f32.mrf.mxu0
      %v2819 = vadd.f32 %v2730, %v2818
      %v2820 = vpop.f32.mrf.mxu0
      %v2821 = vadd.f32 %v2732, %v2820
      %2822 = vmatmul.bf16.gmra.mxu0 %v2392
      %v2823 = vpop.f32.mrf.mxu0
      %v2824 = vadd.f32 %v2735, %v2823
      %v2825 = vpop.f32.mrf.mxu0
      %v2826 = vadd.f32 %v2737, %v2825
      %2827 = vmatmul.bf16.gmra.mxu0 %v2395
      %v2828 = vpop.f32.mrf.mxu0
      %v2829 = vadd.f32 %v2740, %v2828
      %v2830 = vpop.f32.mrf.mxu0
      %v2831 = vadd.f32 %v2742, %v2830
      %2832 = vmatmul.bf16.gmra.mxu0 %v2398
      %v2833 = vpop.f32.mrf.mxu0
      %v2834 = vadd.f32 %v2745, %v2833
      %v2835 = vpop.f32.mrf.mxu0
      %v2836 = vadd.f32 %v2747, %v2835
      %2837 = vmatmul.bf16.gmra.mxu0 %v2401
      %v2838 = vpop.f32.mrf.mxu0
      %v2839 = vadd.f32 %v2750, %v2838
      %v2840 = vpop.f32.mrf.mxu0
      %v2841 = vadd.f32 %v2752, %v2840
      %2842 = vmatmul.bf16.gmra.mxu0 %v2404
      %v2843 = vpop.f32.mrf.mxu0
      %v2844 = vadd.f32 %v2755, %v2843
      %v2845 = vpop.f32.mrf.mxu0
      %v2846 = vadd.f32 %v2757, %v2845
      %2847 = vmatmul.bf16.gmra.mxu0 %v2407
      %v2848 = vpop.f32.mrf.mxu0
      %v2849 = vadd.f32 %v2760, %v2848
      %v2850 = vpop.f32.mrf.mxu0
      %v2851 = vadd.f32 %v2762, %v2850
      %2852 = vmatmul.bf16.gmra.mxu0 %v2410
      %v2853 = vpop.f32.mrf.mxu0
      %v2854 = vadd.f32 %v2765, %v2853
      %v2855 = vpop.f32.mrf.mxu0
      %v2856 = vadd.f32 %v2767, %v2855
      %2857 = vmatmul.bf16.gmra.mxu0 %v2413
      %v2858 = vpop.f32.mrf.mxu0
      %v2859 = vadd.f32 %v2770, %v2858
      %v2860 = vpop.f32.mrf.mxu0
      %v2861 = vadd.f32 %v2772, %v2860
      %2862 = vmatmul.bf16.gmra.mxu0 %v2416
      %v2863 = vpop.f32.mrf.mxu0
      %v2864 = vadd.f32 %v2775, %v2863
      %v2865 = vpop.f32.mrf.mxu0
      %v2866 = vadd.f32 %v2777, %v2865
      %2867 = vmatmul.bf16.gmra.mxu0 %v2419
      %v2868 = vpop.f32.mrf.mxu0
      %v2869 = vadd.f32 %v2780, %v2868
      %v2870 = vpop.f32.mrf.mxu0
      %v2871 = vadd.f32 %v2782, %v2870
      %2872 = vmatmul.bf16.gmra.mxu0 %v2422
      %v2873 = vpop.f32.mrf.mxu0
      %v2874 = vadd.f32 %v2785, %v2873
      %v2875 = vpop.f32.mrf.mxu0
      %v2876 = vadd.f32 %v2787, %v2875
      %2877 = vmatmul.bf16.gmra.mxu0 %v2425
      %v2878 = vpop.f32.mrf.mxu0
      %v2879 = vadd.f32 %v2790, %v2878
      %v2880 = vpop.f32.mrf.mxu0
      %v2881 = vadd.f32 %v2792, %v2880
      %2882 = vmatmul.bf16.gmra.mxu0 %v2428
      %v2883 = vpop.f32.mrf.mxu0
      %v2884 = vadd.f32 %v2795, %v2883
      %v2885 = vpop.f32.mrf.mxu0
      %v2886 = vadd.f32 %v2797, %v2885
      %2887 = vdwg.mxu0
      %v2888 = vadd.f32 %v2075, %v2809
      %v2889 = vadd.f32 %v2076, %v2811
      %v2890 = vadd.f32 %v2077, %v2814
      %v2891 = vadd.f32 %v2078, %v2816
      %v2892 = vadd.f32 %v2079, %v2819
      %v2893 = vadd.f32 %v2080, %v2821
      %v2894 = vadd.f32 %v2081, %v2824
      %v2895 = vadd.f32 %v2082, %v2826
      %v2896 = vadd.f32 %v2083, %v2829
      %v2897 = vadd.f32 %v2084, %v2831
      %v2898 = vadd.f32 %v2085, %v2834
      %v2899 = vadd.f32 %v2086, %v2836
      %v2900 = vadd.f32 %v2087, %v2839
      %v2901 = vadd.f32 %v2088, %v2841
      %v2902 = vadd.f32 %v2089, %v2844
      %v2903 = vadd.f32 %v2090, %v2846
      %v2904 = vadd.f32 %v2091, %v2849
      %v2905 = vadd.f32 %v2092, %v2851
      %v2906 = vadd.f32 %v2093, %v2854
      %v2907 = vadd.f32 %v2094, %v2856
      %v2908 = vadd.f32 %v2095, %v2859
      %v2909 = vadd.f32 %v2096, %v2861
      %v2910 = vadd.f32 %v2097, %v2864
      %v2911 = vadd.f32 %v2098, %v2866
      %v2912 = vadd.f32 %v2099, %v2869
      %v2913 = vadd.f32 %v2100, %v2871
      %v2914 = vadd.f32 %v2101, %v2874
      %v2915 = vadd.f32 %v2102, %v2876
      %v2916 = vadd.f32 %v2103, %v2879
      %v2917 = vadd.f32 %v2104, %v2881
      %v2918 = vadd.f32 %v2105, %v2884
      %v2919 = vadd.f32 %v2106, %v2886
      %2920 = vst [vmem:[#allocation3] sm:$0xff] %v2888
      %2921 = vst [vmem:[#allocation3 + $0x8] sm:$0xff] %v2889
      %2922 = vst [vmem:[#allocation3 + $0x10] sm:$0xff] %v2890
      %2923 = vst [vmem:[#allocation3 + $0x18] sm:$0xff] %v2891
      %2924 = vst [vmem:[#allocation3 + $0x20] sm:$0xff] %v2892
      %2925 = vst [vmem:[#allocation3 + $0x28] sm:$0xff] %v2893
      %2926 = vst [vmem:[#allocation3 + $0x30] sm:$0xff] %v2894
      %2927 = vst [vmem:[#allocation3 + $0x38] sm:$0xff] %v2895
      %2928 = vst [vmem:[#allocation3 + $0x40] sm:$0xff] %v2896
      %2929 = vst [vmem:[#allocation3 + $0x48] sm:$0xff] %v2897
      %2930 = vst [vmem:[#allocation3 + $0x50] sm:$0xff] %v2898
      %2931 = vst [vmem:[#allocation3 + $0x58] sm:$0xff] %v2899
      %2932 = vst [vmem:[#allocation3 + $0x60] sm:$0xff] %v2900
      %2933 = vst [vmem:[#allocation3 + $0x68] sm:$0xff] %v2901
      %2934 = vst [vmem:[#allocation3 + $0x70] sm:$0xff] %v2902
      %2935 = vst [vmem:[#allocation3 + $0x78] sm:$0xff] %v2903
      %2936 = vst [vmem:[#allocation3 + $0x80] sm:$0xff] %v2904
      %2937 = vst [vmem:[#allocation3 + $0x88] sm:$0xff] %v2905
      %2938 = vst [vmem:[#allocation3 + $0x90] sm:$0xff] %v2906
      %2939 = vst [vmem:[#allocation3 + $0x98] sm:$0xff] %v2907
      %2940 = vst [vmem:[#allocation3 + $0xa0] sm:$0xff] %v2908
      %2941 = vst [vmem:[#allocation3 + $0xa8] sm:$0xff] %v2909
      %2942 = vst [vmem:[#allocation3 + $0xb0] sm:$0xff] %v2910
      %2943 = vst [vmem:[#allocation3 + $0xb8] sm:$0xff] %v2911
      %2944 = vst [vmem:[#allocation3 + $0xc0] sm:$0xff] %v2912
      %2945 = vst [vmem:[#allocation3 + $0xc8] sm:$0xff] %v2913
      %2946 = vst [vmem:[#allocation3 + $0xd0] sm:$0xff] %v2914
      %2947 = vst [vmem:[#allocation3 + $0xd8] sm:$0xff] %v2915
      %2948 = vst [vmem:[#allocation3 + $0xe0] sm:$0xff] %v2916
      %2949 = vst [vmem:[#allocation3 + $0xe8] sm:$0xff] %v2917
      %2950 = vst [vmem:[#allocation3 + $0xf0] sm:$0xff] %v2918
      %2951 = vst [vmem:[#allocation3 + $0xf8] sm:$0xff] %v2919
      %v2952 = vld [vmem:[#allocation3] sm:$0xff]
      %v2953 = vld [vmem:[#allocation3 + $0x8] sm:$0xff]
      %v2954 = vld [vmem:[#allocation3 + $0x10] sm:$0xff]
      %v2955 = vld [vmem:[#allocation3 + $0x18] sm:$0xff]
      %v2956 = vld [vmem:[#allocation3 + $0x20] sm:$0xff]
      %v2957 = vld [vmem:[#allocation3 + $0x28] sm:$0xff]
      %v2958 = vld [vmem:[#allocation3 + $0x30] sm:$0xff]
      %v2959 = vld [vmem:[#allocation3 + $0x38] sm:$0xff]
      %v2960 = vld [vmem:[#allocation3 + $0x40] sm:$0xff]
      %v2961 = vld [vmem:[#allocation3 + $0x48] sm:$0xff]
      %v2962 = vld [vmem:[#allocation3 + $0x50] sm:$0xff]
      %v2963 = vld [vmem:[#allocation3 + $0x58] sm:$0xff]
      %v2964 = vld [vmem:[#allocation3 + $0x60] sm:$0xff]
      %v2965 = vld [vmem:[#allocation3 + $0x68] sm:$0xff]
      %v2966 = vld [vmem:[#allocation3 + $0x70] sm:$0xff]
      %v2967 = vld [vmem:[#allocation3 + $0x78] sm:$0xff]
      %v2968 = vld [vmem:[#allocation3 + $0x80] sm:$0xff]
      %v2969 = vld [vmem:[#allocation3 + $0x88] sm:$0xff]
      %v2970 = vld [vmem:[#allocation3 + $0x90] sm:$0xff]
      %v2971 = vld [vmem:[#allocation3 + $0x98] sm:$0xff]
      %v2972 = vld [vmem:[#allocation3 + $0xa0] sm:$0xff]
      %v2973 = vld [vmem:[#allocation3 + $0xa8] sm:$0xff]
      %v2974 = vld [vmem:[#allocation3 + $0xb0] sm:$0xff]
      %v2975 = vld [vmem:[#allocation3 + $0xb8] sm:$0xff]
      %v2976 = vld [vmem:[#allocation3 + $0xc0] sm:$0xff]
      %v2977 = vld [vmem:[#allocation3 + $0xc8] sm:$0xff]
      %v2978 = vld [vmem:[#allocation3 + $0xd0] sm:$0xff]
      %v2979 = vld [vmem:[#allocation3 + $0xd8] sm:$0xff]
      %v2980 = vld [vmem:[#allocation3 + $0xe0] sm:$0xff]
      %v2981 = vld [vmem:[#allocation3 + $0xe8] sm:$0xff]
      %v2982 = vld [vmem:[#allocation3 + $0xf0] sm:$0xff]
      %v2983 = vld [vmem:[#allocation3 + $0xf8] sm:$0xff]
      %s2984 = scalar_lea.vmem [#allocation2], 48
      %v2985 = vld [vmem:[%s2984] sm:$0xff]
      %v2986 = vld [vmem:[%s2984 + $0x8] sm:$0xf]
      %v2987 = vld [vmem:[%s2984 + $0xc] sm:$0xff]
      %v2988 = vld [vmem:[%s2984 + $0x14] sm:$0xf]
      %v2989 = vld [vmem:[%s2984 + $0x18] sm:$0xff]
      %v2990 = vld [vmem:[%s2984 + $0x20] sm:$0xf]
      %v2991 = vld [vmem:[%s2984 + $0x24] sm:$0xff]
      %v2992 = vld [vmem:[%s2984 + $0x2c] sm:$0xf]
      %v2993 = vld [vmem:[%s2984 + $0x30] sm:$0xff]
      %v2994 = vld [vmem:[%s2984 + $0x38] sm:$0xf]
      %v2995 = vld [vmem:[%s2984 + $0x3c] sm:$0xff]
      %v2996 = vld [vmem:[%s2984 + $0x44] sm:$0xf]
      %v2997 = vld [vmem:[%s2984 + $0x48] sm:$0xff]
      %v2998 = vld [vmem:[%s2984 + $0x50] sm:$0xf]
      %v2999 = vld [vmem:[%s2984 + $0x54] sm:$0xff]
      %v3000 = vld [vmem:[%s2984 + $0x5c] sm:$0xf]
      %v3001 = vld [vmem:[%s2984 + $0x60] sm:$0xff]
      %v3002 = vld [vmem:[%s2984 + $0x68] sm:$0xf]
      %v3003 = vld [vmem:[%s2984 + $0x6c] sm:$0xff]
      %v3004 = vld [vmem:[%s2984 + $0x74] sm:$0xf]
      %v3005 = vld [vmem:[%s2984 + $0x78] sm:$0xff]
      %v3006 = vld [vmem:[%s2984 + $0x80] sm:$0xf]
      %v3007 = vld [vmem:[%s2984 + $0x84] sm:$0xff]
      %v3008 = vld [vmem:[%s2984 + $0x8c] sm:$0xf]
      %v3009 = vld [vmem:[%s2984 + $0x90] sm:$0xff]
      %v3010 = vld [vmem:[%s2984 + $0x98] sm:$0xf]
      %v3011 = vld [vmem:[%s2984 + $0x9c] sm:$0xff]
      %v3012 = vld [vmem:[%s2984 + $0xa4] sm:$0xf]
      %v3013 = vld [vmem:[%s2984 + $0xa8] sm:$0xff]
      %v3014 = vld [vmem:[%s2984 + $0xb0] sm:$0xf]
      %v3015 = vld [vmem:[%s2984 + $0xb4] sm:$0xff]
      %v3016 = vld [vmem:[%s2984 + $0xbc] sm:$0xf]
      %v3017 = vld [vmem:[%s2984 + $0xc0] sm:$0xff]
      %v3018 = vld [vmem:[%s2984 + $0xc8] sm:$0xf]
      %v3019 = vld [vmem:[%s2984 + $0xcc] sm:$0xff]
      %v3020 = vld [vmem:[%s2984 + $0xd4] sm:$0xf]
      %v3021 = vld [vmem:[%s2984 + $0xd8] sm:$0xff]
      %v3022 = vld [vmem:[%s2984 + $0xe0] sm:$0xf]
      %v3023 = vld [vmem:[%s2984 + $0xe4] sm:$0xff]
      %v3024 = vld [vmem:[%s2984 + $0xec] sm:$0xf]
      %v3025 = vld [vmem:[%s2984 + $0xf0] sm:$0xff]
      %v3026 = vld [vmem:[%s2984 + $0xf8] sm:$0xf]
      %v3027 = vld [vmem:[%s2984 + $0xfc] sm:$0xff]
      %v3028 = vld [vmem:[%s2984 + $0x104] sm:$0xf]
      %v3029 = vld [vmem:[%s2984 + $0x108] sm:$0xff]
      %v3030 = vld [vmem:[%s2984 + $0x110] sm:$0xf]
      %v3031 = vld [vmem:[%s2984 + $0x114] sm:$0xff]
      %v3032 = vld [vmem:[%s2984 + $0x11c] sm:$0xf]
      %v3033 = vld [vmem:[%s2984 + $0x120] sm:$0xff]
      %v3034 = vld [vmem:[%s2984 + $0x128] sm:$0xf]
      %v3035 = vld [vmem:[%s2984 + $0x12c] sm:$0xff]
      %v3036 = vld [vmem:[%s2984 + $0x134] sm:$0xf]
      %v3037 = vld [vmem:[%s2984 + $0x138] sm:$0xff]
      %v3038 = vld [vmem:[%s2984 + $0x140] sm:$0xf]
      %v3039 = vld [vmem:[%s2984 + $0x144] sm:$0xff]
      %v3040 = vld [vmem:[%s2984 + $0x14c] sm:$0xf]
      %v3041 = vld [vmem:[%s2984 + $0x150] sm:$0xff]
      %v3042 = vld [vmem:[%s2984 + $0x158] sm:$0xf]
      %v3043 = vld [vmem:[%s2984 + $0x15c] sm:$0xff]
      %v3044 = vld [vmem:[%s2984 + $0x164] sm:$0xf]
      %v3045 = vld [vmem:[%s2984 + $0x168] sm:$0xff]
      %v3046 = vld [vmem:[%s2984 + $0x170] sm:$0xf]
      %v3047 = vld [vmem:[%s2984 + $0x174] sm:$0xff]
      %v3048 = vld [vmem:[%s2984 + $0x17c] sm:$0xf]
      %s3049 = scalar_lea.vmem %s210, 384
      %v3050 = vld [vmem:[%s3049] sm:$0xf]
      %v3051 = vld [vmem:[%s3049 + $0x4] sm:$0xf]
      %v3052 = vld [vmem:[%s3049 + $0x8] sm:$0xf]
      %v3053 = vld [vmem:[%s3049 + $0xc] sm:$0xf]
      %v3054 = vld [vmem:[%s3049 + $0x10] sm:$0xf]
      %v3055 = vld [vmem:[%s3049 + $0x14] sm:$0xf]
      %v3056 = vld [vmem:[%s3049 + $0x18] sm:$0xf]
      %v3057 = vld [vmem:[%s3049 + $0x1c] sm:$0xf]
      %v3058 = vld [vmem:[%s3049 + $0x20] sm:$0xf]
      %v3059 = vld [vmem:[%s3049 + $0x24] sm:$0xf]
      %v3060 = vld [vmem:[%s3049 + $0x28] sm:$0xf]
      %v3061 = vld [vmem:[%s3049 + $0x2c] sm:$0xf]
      %v3062 = vld [vmem:[%s3049 + $0x30] sm:$0xf]
      %v3063 = vld [vmem:[%s3049 + $0x34] sm:$0xf]
      %v3064 = vld [vmem:[%s3049 + $0x38] sm:$0xf]
      %v3065 = vld [vmem:[%s3049 + $0x3c] sm:$0xf]
      %v3066 = vld [vmem:[%s3049 + $0x40] sm:$0xf]
      %v3067 = vld [vmem:[%s3049 + $0x44] sm:$0xf]
      %v3068 = vld [vmem:[%s3049 + $0x48] sm:$0xf]
      %v3069 = vld [vmem:[%s3049 + $0x4c] sm:$0xf]
      %v3070 = vld [vmem:[%s3049 + $0x50] sm:$0xf]
      %v3071 = vld [vmem:[%s3049 + $0x54] sm:$0xf]
      %v3072 = vld [vmem:[%s3049 + $0x58] sm:$0xf]
      %v3073 = vld [vmem:[%s3049 + $0x5c] sm:$0xf]
      %v3074 = vld [vmem:[%s3049 + $0x60] sm:$0xf]
      %v3075 = vld [vmem:[%s3049 + $0x64] sm:$0xf]
      %v3076 = vld [vmem:[%s3049 + $0x68] sm:$0xf]
      %v3077 = vld [vmem:[%s3049 + $0x6c] sm:$0xf]
      %v3078 = vld [vmem:[%s3049 + $0x70] sm:$0xf]
      %v3079 = vld [vmem:[%s3049 + $0x74] sm:$0xf]
      %v3080 = vld [vmem:[%s3049 + $0x78] sm:$0xf]
      %v3081 = vld [vmem:[%s3049 + $0x7c] sm:$0xf]
      %v3082 = vld [vmem:[%s3049 + $0x80] sm:$0xf]
      %v3083 = vld [vmem:[%s3049 + $0x84] sm:$0xf]
      %v3084 = vld [vmem:[%s3049 + $0x88] sm:$0xf]
      %v3085 = vld [vmem:[%s3049 + $0x8c] sm:$0xf]
      %v3086 = vld [vmem:[%s3049 + $0x90] sm:$0xf]
      %v3087 = vld [vmem:[%s3049 + $0x94] sm:$0xf]
      %v3088 = vld [vmem:[%s3049 + $0x98] sm:$0xf]
      %v3089 = vld [vmem:[%s3049 + $0x9c] sm:$0xf]
      %v3090 = vld [vmem:[%s3049 + $0xa0] sm:$0xf]
      %v3091 = vld [vmem:[%s3049 + $0xa4] sm:$0xf]
      %v3092 = vld [vmem:[%s3049 + $0xa8] sm:$0xf]
      %v3093 = vld [vmem:[%s3049 + $0xac] sm:$0xf]
      %v3094 = vld [vmem:[%s3049 + $0xb0] sm:$0xf]
      %v3095 = vld [vmem:[%s3049 + $0xb4] sm:$0xf]
      %v3096 = vld [vmem:[%s3049 + $0xb8] sm:$0xf]
      %v3097 = vld [vmem:[%s3049 + $0xbc] sm:$0xf]
      %v3162 = vunpack.c.l.b16 %v2985
      %v3163 = vunpack.c.h.b16 %v2985
      %v3164 = vunpack.c.l.b16 %v2986
      %v3165 = vunpack.c.l.b16 %v2987
      %v3166 = vunpack.c.h.b16 %v2987
      %v3167 = vunpack.c.l.b16 %v2988
      %v3168 = vunpack.c.l.b16 %v2989
      %v3169 = vunpack.c.h.b16 %v2989
      %v3170 = vunpack.c.l.b16 %v2990
      %v3171 = vunpack.c.l.b16 %v2991
      %v3172 = vunpack.c.h.b16 %v2991
      %v3173 = vunpack.c.l.b16 %v2992
      %v3174 = vunpack.c.l.b16 %v2993
      %v3175 = vunpack.c.h.b16 %v2993
      %v3176 = vunpack.c.l.b16 %v2994
      %v3177 = vunpack.c.l.b16 %v2995
      %v3178 = vunpack.c.h.b16 %v2995
      %v3179 = vunpack.c.l.b16 %v2996
      %v3180 = vunpack.c.l.b16 %v2997
      %v3181 = vunpack.c.h.b16 %v2997
      %v3182 = vunpack.c.l.b16 %v2998
      %v3183 = vunpack.c.l.b16 %v2999
      %v3184 = vunpack.c.h.b16 %v2999
      %v3185 = vunpack.c.l.b16 %v3000
      %v3186 = vunpack.c.l.b16 %v3001
      %v3187 = vunpack.c.h.b16 %v3001
      %v3188 = vunpack.c.l.b16 %v3002
      %v3189 = vunpack.c.l.b16 %v3003
      %v3190 = vunpack.c.h.b16 %v3003
      %v3191 = vunpack.c.l.b16 %v3004
      %v3192 = vunpack.c.l.b16 %v3005
      %v3193 = vunpack.c.h.b16 %v3005
      %v3194 = vunpack.c.l.b16 %v3006
      %v3195 = vunpack.c.l.b16 %v3007
      %v3196 = vunpack.c.h.b16 %v3007
      %v3197 = vunpack.c.l.b16 %v3008
      %v3198 = vunpack.c.l.b16 %v3009
      %v3199 = vunpack.c.h.b16 %v3009
      %v3200 = vunpack.c.l.b16 %v3010
      %v3201 = vunpack.c.l.b16 %v3011
      %v3202 = vunpack.c.h.b16 %v3011
      %v3203 = vunpack.c.l.b16 %v3012
      %v3204 = vunpack.c.l.b16 %v3013
      %v3205 = vunpack.c.h.b16 %v3013
      %v3206 = vunpack.c.l.b16 %v3014
      %v3207 = vunpack.c.l.b16 %v3015
      %v3208 = vunpack.c.h.b16 %v3015
      %v3209 = vunpack.c.l.b16 %v3016
      %v3210 = vunpack.c.l.b16 %v3017
      %v3211 = vunpack.c.h.b16 %v3017
      %v3212 = vunpack.c.l.b16 %v3018
      %v3213 = vunpack.c.l.b16 %v3019
      %v3214 = vunpack.c.h.b16 %v3019
      %v3215 = vunpack.c.l.b16 %v3020
      %v3216 = vunpack.c.l.b16 %v3021
      %v3217 = vunpack.c.h.b16 %v3021
      %v3218 = vunpack.c.l.b16 %v3022
      %v3219 = vunpack.c.l.b16 %v3023
      %v3220 = vunpack.c.h.b16 %v3023
      %v3221 = vunpack.c.l.b16 %v3024
      %v3222 = vunpack.c.l.b16 %v3025
      %v3223 = vunpack.c.h.b16 %v3025
      %v3224 = vunpack.c.l.b16 %v3026
      %v3225 = vunpack.c.l.b16 %v3027
      %v3226 = vunpack.c.h.b16 %v3027
      %v3227 = vunpack.c.l.b16 %v3028
      %v3228 = vunpack.c.l.b16 %v3029
      %v3229 = vunpack.c.h.b16 %v3029
      %v3230 = vunpack.c.l.b16 %v3030
      %v3231 = vunpack.c.l.b16 %v3031
      %v3232 = vunpack.c.h.b16 %v3031
      %v3233 = vunpack.c.l.b16 %v3032
      %v3234 = vunpack.c.l.b16 %v3033
      %v3235 = vunpack.c.h.b16 %v3033
      %v3236 = vunpack.c.l.b16 %v3034
      %v3237 = vunpack.c.l.b16 %v3035
      %v3238 = vunpack.c.h.b16 %v3035
      %v3239 = vunpack.c.l.b16 %v3036
      %v3240 = vunpack.c.l.b16 %v3037
      %v3241 = vunpack.c.h.b16 %v3037
      %v3242 = vunpack.c.l.b16 %v3038
      %v3243 = vunpack.c.l.b16 %v3039
      %v3244 = vunpack.c.h.b16 %v3039
      %v3245 = vunpack.c.l.b16 %v3040
      %v3246 = vunpack.c.l.b16 %v3041
      %v3247 = vunpack.c.h.b16 %v3041
      %v3248 = vunpack.c.l.b16 %v3042
      %v3249 = vunpack.c.l.b16 %v3043
      %v3250 = vunpack.c.h.b16 %v3043
      %v3251 = vunpack.c.l.b16 %v3044
      %v3252 = vunpack.c.l.b16 %v3045
      %v3253 = vunpack.c.h.b16 %v3045
      %v3254 = vunpack.c.l.b16 %v3046
      %v3255 = vunpack.c.l.b16 %v3047
      %v3256 = vunpack.c.h.b16 %v3047
      %v3257 = vunpack.c.l.b16 %v3048
      %v3258 = vpack.c.b16 %v3165, %v3162
      %v3259 = vpack.c.b16 %v3166, %v3163
      %v3260 = vpack.c.b16 %v3167, %v3164
      %v3261 = vpack.c.b16 %v3171, %v3168
      %v3262 = vpack.c.b16 %v3172, %v3169
      %v3263 = vpack.c.b16 %v3173, %v3170
      %v3264 = vpack.c.b16 %v3177, %v3174
      %v3265 = vpack.c.b16 %v3178, %v3175
      %v3266 = vpack.c.b16 %v3179, %v3176
      %v3267 = vpack.c.b16 %v3183, %v3180
      %v3268 = vpack.c.b16 %v3184, %v3181
      %v3269 = vpack.c.b16 %v3185, %v3182
      %v3270 = vpack.c.b16 %v3189, %v3186
      %v3271 = vpack.c.b16 %v3190, %v3187
      %v3272 = vpack.c.b16 %v3191, %v3188
      %v3273 = vpack.c.b16 %v3195, %v3192
      %v3274 = vpack.c.b16 %v3196, %v3193
      %v3275 = vpack.c.b16 %v3197, %v3194
      %v3276 = vpack.c.b16 %v3201, %v3198
      %v3277 = vpack.c.b16 %v3202, %v3199
      %v3278 = vpack.c.b16 %v3203, %v3200
      %v3279 = vpack.c.b16 %v3207, %v3204
      %v3280 = vpack.c.b16 %v3208, %v3205
      %v3281 = vpack.c.b16 %v3209, %v3206
      %v3282 = vpack.c.b16 %v3213, %v3210
      %v3283 = vpack.c.b16 %v3214, %v3211
      %v3284 = vpack.c.b16 %v3215, %v3212
      %v3285 = vpack.c.b16 %v3219, %v3216
      %v3286 = vpack.c.b16 %v3220, %v3217
      %v3287 = vpack.c.b16 %v3221, %v3218
      %v3288 = vpack.c.b16 %v3225, %v3222
      %v3289 = vpack.c.b16 %v3226, %v3223
      %v3290 = vpack.c.b16 %v3227, %v3224
      %v3291 = vpack.c.b16 %v3231, %v3228
      %v3292 = vpack.c.b16 %v3232, %v3229
      %v3293 = vpack.c.b16 %v3233, %v3230
      %v3294 = vpack.c.b16 %v3237, %v3234
      %v3295 = vpack.c.b16 %v3238, %v3235
      %v3296 = vpack.c.b16 %v3239, %v3236
      %v3297 = vpack.c.b16 %v3243, %v3240
      %v3298 = vpack.c.b16 %v3244, %v3241
      %v3299 = vpack.c.b16 %v3245, %v3242
      %v3300 = vpack.c.b16 %v3249, %v3246
      %v3301 = vpack.c.b16 %v3250, %v3247
      %v3302 = vpack.c.b16 %v3251, %v3248
      %v3303 = vpack.c.b16 %v3255, %v3252
      %v3304 = vpack.c.b16 %v3256, %v3253
      %v3305 = vpack.c.b16 %v3257, %v3254
      %v3402 = vunpack.c.l.b16 %v3050
      %v3403 = vunpack.c.l.b16 %v3051
      %v3404 = vunpack.c.l.b16 %v3052
      %v3405 = vunpack.c.l.b16 %v3053
      %v3406 = vunpack.c.l.b16 %v3054
      %v3407 = vunpack.c.l.b16 %v3055
      %v3408 = vunpack.c.l.b16 %v3056
      %v3409 = vunpack.c.l.b16 %v3057
      %v3410 = vunpack.c.l.b16 %v3058
      %v3411 = vunpack.c.l.b16 %v3059
      %v3412 = vunpack.c.l.b16 %v3060
      %v3413 = vunpack.c.l.b16 %v3061
      %v3414 = vunpack.c.l.b16 %v3062
      %v3415 = vunpack.c.l.b16 %v3063
      %v3416 = vunpack.c.l.b16 %v3064
      %v3417 = vunpack.c.l.b16 %v3065
      %v3418 = vunpack.c.l.b16 %v3066
      %v3419 = vunpack.c.l.b16 %v3067
      %v3420 = vunpack.c.l.b16 %v3068
      %v3421 = vunpack.c.l.b16 %v3069
      %v3422 = vunpack.c.l.b16 %v3070
      %v3423 = vunpack.c.l.b16 %v3071
      %v3424 = vunpack.c.l.b16 %v3072
      %v3425 = vunpack.c.l.b16 %v3073
      %v3426 = vunpack.c.l.b16 %v3074
      %v3427 = vunpack.c.l.b16 %v3075
      %v3428 = vunpack.c.l.b16 %v3076
      %v3429 = vunpack.c.l.b16 %v3077
      %v3430 = vunpack.c.l.b16 %v3078
      %v3431 = vunpack.c.l.b16 %v3079
      %v3432 = vunpack.c.l.b16 %v3080
      %v3433 = vunpack.c.l.b16 %v3081
      %v3434 = vunpack.c.l.b16 %v3082
      %v3435 = vunpack.c.l.b16 %v3083
      %v3436 = vunpack.c.l.b16 %v3084
      %v3437 = vunpack.c.l.b16 %v3085
      %v3438 = vunpack.c.l.b16 %v3086
      %v3439 = vunpack.c.l.b16 %v3087
      %v3440 = vunpack.c.l.b16 %v3088
      %v3441 = vunpack.c.l.b16 %v3089
      %v3442 = vunpack.c.l.b16 %v3090
      %v3443 = vunpack.c.l.b16 %v3091
      %v3444 = vunpack.c.l.b16 %v3092
      %v3445 = vunpack.c.l.b16 %v3093
      %v3446 = vunpack.c.l.b16 %v3094
      %v3447 = vunpack.c.l.b16 %v3095
      %v3448 = vunpack.c.l.b16 %v3096
      %v3449 = vunpack.c.l.b16 %v3097
      %v3450 = vpack.c.b16 %v3403, %v3402
      %v3451 = vpack.c.b16 %v3405, %v3404
      %v3452 = vpack.c.b16 %v3407, %v3406
      %v3453 = vpack.c.b16 %v3409, %v3408
      %v3454 = vpack.c.b16 %v3411, %v3410
      %v3455 = vpack.c.b16 %v3413, %v3412
      %v3456 = vpack.c.b16 %v3415, %v3414
      %v3457 = vpack.c.b16 %v3417, %v3416
      %v3458 = vpack.c.b16 %v3419, %v3418
      %v3459 = vpack.c.b16 %v3421, %v3420
      %v3460 = vpack.c.b16 %v3423, %v3422
      %v3461 = vpack.c.b16 %v3425, %v3424
      %v3462 = vpack.c.b16 %v3427, %v3426
      %v3463 = vpack.c.b16 %v3429, %v3428
      %v3464 = vpack.c.b16 %v3431, %v3430
      %v3465 = vpack.c.b16 %v3433, %v3432
      %v3466 = vpack.c.b16 %v3435, %v3434
      %v3467 = vpack.c.b16 %v3437, %v3436
      %v3468 = vpack.c.b16 %v3439, %v3438
      %v3469 = vpack.c.b16 %v3441, %v3440
      %v3470 = vpack.c.b16 %v3443, %v3442
      %v3471 = vpack.c.b16 %v3445, %v3444
      %v3472 = vpack.c.b16 %v3447, %v3446
      %v3473 = vpack.c.b16 %v3449, %v3448
      %3498 = vmatpush.bf16.msra.mxu0 %v3457
      %3499 = vmatpush.bf16.msra.mxu0 %v3456
      %3500 = vmatpush.bf16.msra.mxu0 %v3455
      %3501 = vmatpush.bf16.msra.mxu0 %v3454
      %3502 = vmatpush.bf16.msra.mxu0 %v3453
      %3503 = vmatpush.bf16.msra.mxu0 %v3452
      %3504 = vmatpush.bf16.msra.mxu0 %v3451
      %3505 = vmatpush.bf16.msra.mxu0 %v3450
      %3506 = vmatmul.bf16.gmra.mxu0 %v3258
      %v3507 = vpop.f32.mrf.mxu0
      %v3508 = vadd.f32 0.0, %v3507
      %v3509 = vpop.f32.mrf.mxu0
      %v3510 = vadd.f32 0.0, %v3509
      %3511 = vmatmul.bf16.gmra.mxu0 %v3261
      %v3512 = vpop.f32.mrf.mxu0
      %v3513 = vadd.f32 0.0, %v3512
      %v3514 = vpop.f32.mrf.mxu0
      %v3515 = vadd.f32 0.0, %v3514
      %3516 = vmatmul.bf16.gmra.mxu0 %v3264
      %v3517 = vpop.f32.mrf.mxu0
      %v3518 = vadd.f32 0.0, %v3517
      %v3519 = vpop.f32.mrf.mxu0
      %v3520 = vadd.f32 0.0, %v3519
      %3521 = vmatmul.bf16.gmra.mxu0 %v3267
      %v3522 = vpop.f32.mrf.mxu0
      %v3523 = vadd.f32 0.0, %v3522
      %v3524 = vpop.f32.mrf.mxu0
      %v3525 = vadd.f32 0.0, %v3524
      %3526 = vmatmul.bf16.gmra.mxu0 %v3270
      %v3527 = vpop.f32.mrf.mxu0
      %v3528 = vadd.f32 0.0, %v3527
      %v3529 = vpop.f32.mrf.mxu0
      %v3530 = vadd.f32 0.0, %v3529
      %3531 = vmatmul.bf16.gmra.mxu0 %v3273
      %v3532 = vpop.f32.mrf.mxu0
      %v3533 = vadd.f32 0.0, %v3532
      %v3534 = vpop.f32.mrf.mxu0
      %v3535 = vadd.f32 0.0, %v3534
      %3536 = vmatmul.bf16.gmra.mxu0 %v3276
      %v3537 = vpop.f32.mrf.mxu0
      %v3538 = vadd.f32 0.0, %v3537
      %v3539 = vpop.f32.mrf.mxu0
      %v3540 = vadd.f32 0.0, %v3539
      %3541 = vmatmul.bf16.gmra.mxu0 %v3279
      %v3542 = vpop.f32.mrf.mxu0
      %v3543 = vadd.f32 0.0, %v3542
      %v3544 = vpop.f32.mrf.mxu0
      %v3545 = vadd.f32 0.0, %v3544
      %3546 = vmatmul.bf16.gmra.mxu0 %v3282
      %v3547 = vpop.f32.mrf.mxu0
      %v3548 = vadd.f32 0.0, %v3547
      %v3549 = vpop.f32.mrf.mxu0
      %v3550 = vadd.f32 0.0, %v3549
      %3551 = vmatmul.bf16.gmra.mxu0 %v3285
      %v3552 = vpop.f32.mrf.mxu0
      %v3553 = vadd.f32 0.0, %v3552
      %v3554 = vpop.f32.mrf.mxu0
      %v3555 = vadd.f32 0.0, %v3554
      %3556 = vmatmul.bf16.gmra.mxu0 %v3288
      %v3557 = vpop.f32.mrf.mxu0
      %v3558 = vadd.f32 0.0, %v3557
      %v3559 = vpop.f32.mrf.mxu0
      %v3560 = vadd.f32 0.0, %v3559
      %3561 = vmatmul.bf16.gmra.mxu0 %v3291
      %v3562 = vpop.f32.mrf.mxu0
      %v3563 = vadd.f32 0.0, %v3562
      %v3564 = vpop.f32.mrf.mxu0
      %v3565 = vadd.f32 0.0, %v3564
      %3566 = vmatmul.bf16.gmra.mxu0 %v3294
      %v3567 = vpop.f32.mrf.mxu0
      %v3568 = vadd.f32 0.0, %v3567
      %v3569 = vpop.f32.mrf.mxu0
      %v3570 = vadd.f32 0.0, %v3569
      %3571 = vmatmul.bf16.gmra.mxu0 %v3297
      %v3572 = vpop.f32.mrf.mxu0
      %v3573 = vadd.f32 0.0, %v3572
      %v3574 = vpop.f32.mrf.mxu0
      %v3575 = vadd.f32 0.0, %v3574
      %3576 = vmatmul.bf16.gmra.mxu0 %v3300
      %v3577 = vpop.f32.mrf.mxu0
      %v3578 = vadd.f32 0.0, %v3577
      %v3579 = vpop.f32.mrf.mxu0
      %v3580 = vadd.f32 0.0, %v3579
      %3581 = vmatmul.bf16.gmra.mxu0 %v3303
      %v3582 = vpop.f32.mrf.mxu0
      %v3583 = vadd.f32 0.0, %v3582
      %v3584 = vpop.f32.mrf.mxu0
      %v3585 = vadd.f32 0.0, %v3584
      %3586 = vdwg.mxu0
      %3587 = vmatpush.bf16.msra.mxu0 %v3465
      %3588 = vmatpush.bf16.msra.mxu0 %v3464
      %3589 = vmatpush.bf16.msra.mxu0 %v3463
      %3590 = vmatpush.bf16.msra.mxu0 %v3462
      %3591 = vmatpush.bf16.msra.mxu0 %v3461
      %3592 = vmatpush.bf16.msra.mxu0 %v3460
      %3593 = vmatpush.bf16.msra.mxu0 %v3459
      %3594 = vmatpush.bf16.msra.mxu0 %v3458
      %3595 = vmatmul.bf16.gmra.mxu0 %v3259
      %v3596 = vpop.f32.mrf.mxu0
      %v3597 = vadd.f32 %v3508, %v3596
      %v3598 = vpop.f32.mrf.mxu0
      %v3599 = vadd.f32 %v3510, %v3598
      %3600 = vmatmul.bf16.gmra.mxu0 %v3262
      %v3601 = vpop.f32.mrf.mxu0
      %v3602 = vadd.f32 %v3513, %v3601
      %v3603 = vpop.f32.mrf.mxu0
      %v3604 = vadd.f32 %v3515, %v3603
      %3605 = vmatmul.bf16.gmra.mxu0 %v3265
      %v3606 = vpop.f32.mrf.mxu0
      %v3607 = vadd.f32 %v3518, %v3606
      %v3608 = vpop.f32.mrf.mxu0
      %v3609 = vadd.f32 %v3520, %v3608
      %3610 = vmatmul.bf16.gmra.mxu0 %v3268
      %v3611 = vpop.f32.mrf.mxu0
      %v3612 = vadd.f32 %v3523, %v3611
      %v3613 = vpop.f32.mrf.mxu0
      %v3614 = vadd.f32 %v3525, %v3613
      %3615 = vmatmul.bf16.gmra.mxu0 %v3271
      %v3616 = vpop.f32.mrf.mxu0
      %v3617 = vadd.f32 %v3528, %v3616
      %v3618 = vpop.f32.mrf.mxu0
      %v3619 = vadd.f32 %v3530, %v3618
      %3620 = vmatmul.bf16.gmra.mxu0 %v3274
      %v3621 = vpop.f32.mrf.mxu0
      %v3622 = vadd.f32 %v3533, %v3621
      %v3623 = vpop.f32.mrf.mxu0
      %v3624 = vadd.f32 %v3535, %v3623
      %3625 = vmatmul.bf16.gmra.mxu0 %v3277
      %v3626 = vpop.f32.mrf.mxu0
      %v3627 = vadd.f32 %v3538, %v3626
      %v3628 = vpop.f32.mrf.mxu0
      %v3629 = vadd.f32 %v3540, %v3628
      %3630 = vmatmul.bf16.gmra.mxu0 %v3280
      %v3631 = vpop.f32.mrf.mxu0
      %v3632 = vadd.f32 %v3543, %v3631
      %v3633 = vpop.f32.mrf.mxu0
      %v3634 = vadd.f32 %v3545, %v3633
      %3635 = vmatmul.bf16.gmra.mxu0 %v3283
      %v3636 = vpop.f32.mrf.mxu0
      %v3637 = vadd.f32 %v3548, %v3636
      %v3638 = vpop.f32.mrf.mxu0
      %v3639 = vadd.f32 %v3550, %v3638
      %3640 = vmatmul.bf16.gmra.mxu0 %v3286
      %v3641 = vpop.f32.mrf.mxu0
      %v3642 = vadd.f32 %v3553, %v3641
      %v3643 = vpop.f32.mrf.mxu0
      %v3644 = vadd.f32 %v3555, %v3643
      %3645 = vmatmul.bf16.gmra.mxu0 %v3289
      %v3646 = vpop.f32.mrf.mxu0
      %v3647 = vadd.f32 %v3558, %v3646
      %v3648 = vpop.f32.mrf.mxu0
      %v3649 = vadd.f32 %v3560, %v3648
      %3650 = vmatmul.bf16.gmra.mxu0 %v3292
      %v3651 = vpop.f32.mrf.mxu0
      %v3652 = vadd.f32 %v3563, %v3651
      %v3653 = vpop.f32.mrf.mxu0
      %v3654 = vadd.f32 %v3565, %v3653
      %3655 = vmatmul.bf16.gmra.mxu0 %v3295
      %v3656 = vpop.f32.mrf.mxu0
      %v3657 = vadd.f32 %v3568, %v3656
      %v3658 = vpop.f32.mrf.mxu0
      %v3659 = vadd.f32 %v3570, %v3658
      %3660 = vmatmul.bf16.gmra.mxu0 %v3298
      %v3661 = vpop.f32.mrf.mxu0
      %v3662 = vadd.f32 %v3573, %v3661
      %v3663 = vpop.f32.mrf.mxu0
      %v3664 = vadd.f32 %v3575, %v3663
      %3665 = vmatmul.bf16.gmra.mxu0 %v3301
      %v3666 = vpop.f32.mrf.mxu0
      %v3667 = vadd.f32 %v3578, %v3666
      %v3668 = vpop.f32.mrf.mxu0
      %v3669 = vadd.f32 %v3580, %v3668
      %3670 = vmatmul.bf16.gmra.mxu0 %v3304
      %v3671 = vpop.f32.mrf.mxu0
      %v3672 = vadd.f32 %v3583, %v3671
      %v3673 = vpop.f32.mrf.mxu0
      %v3674 = vadd.f32 %v3585, %v3673
      %3675 = vdwg.mxu0
      %3676 = vmatpush.bf16.msra.mxu0 %v3473
      %3677 = vmatpush.bf16.msra.mxu0 %v3472
      %3678 = vmatpush.bf16.msra.mxu0 %v3471
      %3679 = vmatpush.bf16.msra.mxu0 %v3470
      %3680 = vmatpush.bf16.msra.mxu0 %v3469
      %3681 = vmatpush.bf16.msra.mxu0 %v3468
      %3682 = vmatpush.bf16.msra.mxu0 %v3467
      %3683 = vmatpush.bf16.msra.mxu0 %v3466
      %3684 = vmatmul.bf16.gmra.mxu0 %v3260
      %v3685 = vpop.f32.mrf.mxu0
      %v3686 = vadd.f32 %v3597, %v3685
      %v3687 = vpop.f32.mrf.mxu0
      %v3688 = vadd.f32 %v3599, %v3687
      %3689 = vmatmul.bf16.gmra.mxu0 %v3263
      %v3690 = vpop.f32.mrf.mxu0
      %v3691 = vadd.f32 %v3602, %v3690
      %v3692 = vpop.f32.mrf.mxu0
      %v3693 = vadd.f32 %v3604, %v3692
      %3694 = vmatmul.bf16.gmra.mxu0 %v3266
      %v3695 = vpop.f32.mrf.mxu0
      %v3696 = vadd.f32 %v3607, %v3695
      %v3697 = vpop.f32.mrf.mxu0
      %v3698 = vadd.f32 %v3609, %v3697
      %3699 = vmatmul.bf16.gmra.mxu0 %v3269
      %v3700 = vpop.f32.mrf.mxu0
      %v3701 = vadd.f32 %v3612, %v3700
      %v3702 = vpop.f32.mrf.mxu0
      %v3703 = vadd.f32 %v3614, %v3702
      %3704 = vmatmul.bf16.gmra.mxu0 %v3272
      %v3705 = vpop.f32.mrf.mxu0
      %v3706 = vadd.f32 %v3617, %v3705
      %v3707 = vpop.f32.mrf.mxu0
      %v3708 = vadd.f32 %v3619, %v3707
      %3709 = vmatmul.bf16.gmra.mxu0 %v3275
      %v3710 = vpop.f32.mrf.mxu0
      %v3711 = vadd.f32 %v3622, %v3710
      %v3712 = vpop.f32.mrf.mxu0
      %v3713 = vadd.f32 %v3624, %v3712
      %3714 = vmatmul.bf16.gmra.mxu0 %v3278
      %v3715 = vpop.f32.mrf.mxu0
      %v3716 = vadd.f32 %v3627, %v3715
      %v3717 = vpop.f32.mrf.mxu0
      %v3718 = vadd.f32 %v3629, %v3717
      %3719 = vmatmul.bf16.gmra.mxu0 %v3281
      %v3720 = vpop.f32.mrf.mxu0
      %v3721 = vadd.f32 %v3632, %v3720
      %v3722 = vpop.f32.mrf.mxu0
      %v3723 = vadd.f32 %v3634, %v3722
      %3724 = vmatmul.bf16.gmra.mxu0 %v3284
      %v3725 = vpop.f32.mrf.mxu0
      %v3726 = vadd.f32 %v3637, %v3725
      %v3727 = vpop.f32.mrf.mxu0
      %v3728 = vadd.f32 %v3639, %v3727
      %3729 = vmatmul.bf16.gmra.mxu0 %v3287
      %v3730 = vpop.f32.mrf.mxu0
      %v3731 = vadd.f32 %v3642, %v3730
      %v3732 = vpop.f32.mrf.mxu0
      %v3733 = vadd.f32 %v3644, %v3732
      %3734 = vmatmul.bf16.gmra.mxu0 %v3290
      %v3735 = vpop.f32.mrf.mxu0
      %v3736 = vadd.f32 %v3647, %v3735
      %v3737 = vpop.f32.mrf.mxu0
      %v3738 = vadd.f32 %v3649, %v3737
      %3739 = vmatmul.bf16.gmra.mxu0 %v3293
      %v3740 = vpop.f32.mrf.mxu0
      %v3741 = vadd.f32 %v3652, %v3740
      %v3742 = vpop.f32.mrf.mxu0
      %v3743 = vadd.f32 %v3654, %v3742
      %3744 = vmatmul.bf16.gmra.mxu0 %v3296
      %v3745 = vpop.f32.mrf.mxu0
      %v3746 = vadd.f32 %v3657, %v3745
      %v3747 = vpop.f32.mrf.mxu0
      %v3748 = vadd.f32 %v3659, %v3747
      %3749 = vmatmul.bf16.gmra.mxu0 %v3299
      %v3750 = vpop.f32.mrf.mxu0
      %v3751 = vadd.f32 %v3662, %v3750
      %v3752 = vpop.f32.mrf.mxu0
      %v3753 = vadd.f32 %v3664, %v3752
      %3754 = vmatmul.bf16.gmra.mxu0 %v3302
      %v3755 = vpop.f32.mrf.mxu0
      %v3756 = vadd.f32 %v3667, %v3755
      %v3757 = vpop.f32.mrf.mxu0
      %v3758 = vadd.f32 %v3669, %v3757
      %3759 = vmatmul.bf16.gmra.mxu0 %v3305
      %v3760 = vpop.f32.mrf.mxu0
      %v3761 = vadd.f32 %v3672, %v3760
      %v3762 = vpop.f32.mrf.mxu0
      %v3763 = vadd.f32 %v3674, %v3762
      %3764 = vdwg.mxu0
      %v3765 = vadd.f32 %v2952, %v3686
      %v3766 = vadd.f32 %v2953, %v3688
      %v3767 = vadd.f32 %v2954, %v3691
      %v3768 = vadd.f32 %v2955, %v3693
      %v3769 = vadd.f32 %v2956, %v3696
      %v3770 = vadd.f32 %v2957, %v3698
      %v3771 = vadd.f32 %v2958, %v3701
      %v3772 = vadd.f32 %v2959, %v3703
      %v3773 = vadd.f32 %v2960, %v3706
      %v3774 = vadd.f32 %v2961, %v3708
      %v3775 = vadd.f32 %v2962, %v3711
      %v3776 = vadd.f32 %v2963, %v3713
      %v3777 = vadd.f32 %v2964, %v3716
      %v3778 = vadd.f32 %v2965, %v3718
      %v3779 = vadd.f32 %v2966, %v3721
      %v3780 = vadd.f32 %v2967, %v3723
      %v3781 = vadd.f32 %v2968, %v3726
      %v3782 = vadd.f32 %v2969, %v3728
      %v3783 = vadd.f32 %v2970, %v3731
      %v3784 = vadd.f32 %v2971, %v3733
      %v3785 = vadd.f32 %v2972, %v3736
      %v3786 = vadd.f32 %v2973, %v3738
      %v3787 = vadd.f32 %v2974, %v3741
      %v3788 = vadd.f32 %v2975, %v3743
      %v3789 = vadd.f32 %v2976, %v3746
      %v3790 = vadd.f32 %v2977, %v3748
      %v3791 = vadd.f32 %v2978, %v3751
      %v3792 = vadd.f32 %v2979, %v3753
      %v3793 = vadd.f32 %v2980, %v3756
      %v3794 = vadd.f32 %v2981, %v3758
      %v3795 = vadd.f32 %v2982, %v3761
      %v3796 = vadd.f32 %v2983, %v3763
      %3797 = vst [vmem:[#allocation3] sm:$0xff] %v3765
      %3798 = vst [vmem:[#allocation3 + $0x8] sm:$0xff] %v3766
      %3799 = vst [vmem:[#allocation3 + $0x10] sm:$0xff] %v3767
      %3800 = vst [vmem:[#allocation3 + $0x18] sm:$0xff] %v3768
      %3801 = vst [vmem:[#allocation3 + $0x20] sm:$0xff] %v3769
      %3802 = vst [vmem:[#allocation3 + $0x28] sm:$0xff] %v3770
      %3803 = vst [vmem:[#allocation3 + $0x30] sm:$0xff] %v3771
      %3804 = vst [vmem:[#allocation3 + $0x38] sm:$0xff] %v3772
      %3805 = vst [vmem:[#allocation3 + $0x40] sm:$0xff] %v3773
      %3806 = vst [vmem:[#allocation3 + $0x48] sm:$0xff] %v3774
      %3807 = vst [vmem:[#allocation3 + $0x50] sm:$0xff] %v3775
      %3808 = vst [vmem:[#allocation3 + $0x58] sm:$0xff] %v3776
      %3809 = vst [vmem:[#allocation3 + $0x60] sm:$0xff] %v3777
      %3810 = vst [vmem:[#allocation3 + $0x68] sm:$0xff] %v3778
      %3811 = vst [vmem:[#allocation3 + $0x70] sm:$0xff] %v3779
      %3812 = vst [vmem:[#allocation3 + $0x78] sm:$0xff] %v3780
      %3813 = vst [vmem:[#allocation3 + $0x80] sm:$0xff] %v3781
      %3814 = vst [vmem:[#allocation3 + $0x88] sm:$0xff] %v3782
      %3815 = vst [vmem:[#allocation3 + $0x90] sm:$0xff] %v3783
      %3816 = vst [vmem:[#allocation3 + $0x98] sm:$0xff] %v3784
      %3817 = vst [vmem:[#allocation3 + $0xa0] sm:$0xff] %v3785
      %3818 = vst [vmem:[#allocation3 + $0xa8] sm:$0xff] %v3786
      %3819 = vst [vmem:[#allocation3 + $0xb0] sm:$0xff] %v3787
      %3820 = vst [vmem:[#allocation3 + $0xb8] sm:$0xff] %v3788
      %3821 = vst [vmem:[#allocation3 + $0xc0] sm:$0xff] %v3789
      %3822 = vst [vmem:[#allocation3 + $0xc8] sm:$0xff] %v3790
      %3823 = vst [vmem:[#allocation3 + $0xd0] sm:$0xff] %v3791
      %3824 = vst [vmem:[#allocation3 + $0xd8] sm:$0xff] %v3792
      %3825 = vst [vmem:[#allocation3 + $0xe0] sm:$0xff] %v3793
      %3826 = vst [vmem:[#allocation3 + $0xe8] sm:$0xff] %v3794
      %3827 = vst [vmem:[#allocation3 + $0xf0] sm:$0xff] %v3795
      %3828 = vst [vmem:[#allocation3 + $0xf8] sm:$0xff] %v3796
      %v3829 = vld [vmem:[#allocation3] sm:$0xff]
      %v3830 = vld [vmem:[#allocation3 + $0x8] sm:$0xff]
      %v3831 = vld [vmem:[#allocation3 + $0x10] sm:$0xff]
      %v3832 = vld [vmem:[#allocation3 + $0x18] sm:$0xff]
      %v3833 = vld [vmem:[#allocation3 + $0x20] sm:$0xff]
      %v3834 = vld [vmem:[#allocation3 + $0x28] sm:$0xff]
      %v3835 = vld [vmem:[#allocation3 + $0x30] sm:$0xff]
      %v3836 = vld [vmem:[#allocation3 + $0x38] sm:$0xff]
      %v3837 = vld [vmem:[#allocation3 + $0x40] sm:$0xff]
      %v3838 = vld [vmem:[#allocation3 + $0x48] sm:$0xff]
      %v3839 = vld [vmem:[#allocation3 + $0x50] sm:$0xff]
      %v3840 = vld [vmem:[#allocation3 + $0x58] sm:$0xff]
      %v3841 = vld [vmem:[#allocation3 + $0x60] sm:$0xff]
      %v3842 = vld [vmem:[#allocation3 + $0x68] sm:$0xff]
      %v3843 = vld [vmem:[#allocation3 + $0x70] sm:$0xff]
      %v3844 = vld [vmem:[#allocation3 + $0x78] sm:$0xff]
      %v3845 = vld [vmem:[#allocation3 + $0x80] sm:$0xff]
      %v3846 = vld [vmem:[#allocation3 + $0x88] sm:$0xff]
      %v3847 = vld [vmem:[#allocation3 + $0x90] sm:$0xff]
      %v3848 = vld [vmem:[#allocation3 + $0x98] sm:$0xff]
      %v3849 = vld [vmem:[#allocation3 + $0xa0] sm:$0xff]
      %v3850 = vld [vmem:[#allocation3 + $0xa8] sm:$0xff]
      %v3851 = vld [vmem:[#allocation3 + $0xb0] sm:$0xff]
      %v3852 = vld [vmem:[#allocation3 + $0xb8] sm:$0xff]
      %v3853 = vld [vmem:[#allocation3 + $0xc0] sm:$0xff]
      %v3854 = vld [vmem:[#allocation3 + $0xc8] sm:$0xff]
      %v3855 = vld [vmem:[#allocation3 + $0xd0] sm:$0xff]
      %v3856 = vld [vmem:[#allocation3 + $0xd8] sm:$0xff]
      %v3857 = vld [vmem:[#allocation3 + $0xe0] sm:$0xff]
      %v3858 = vld [vmem:[#allocation3 + $0xe8] sm:$0xff]
      %v3859 = vld [vmem:[#allocation3 + $0xf0] sm:$0xff]
      %v3860 = vld [vmem:[#allocation3 + $0xf8] sm:$0xff]
      %vm3861 = vcmp.ge.f32.partialorder %v3829, 0.0
      %vm3862 = vcmp.ge.f32.partialorder %v3830, 0.0
      %vm3863 = vcmp.ge.f32.partialorder %v3831, 0.0
      %vm3864 = vcmp.ge.f32.partialorder %v3832, 0.0
      %vm3865 = vcmp.ge.f32.partialorder %v3833, 0.0
      %vm3866 = vcmp.ge.f32.partialorder %v3834, 0.0
      %vm3867 = vcmp.ge.f32.partialorder %v3835, 0.0
      %vm3868 = vcmp.ge.f32.partialorder %v3836, 0.0
      %vm3869 = vcmp.ge.f32.partialorder %v3837, 0.0
      %vm3870 = vcmp.ge.f32.partialorder %v3838, 0.0
      %vm3871 = vcmp.ge.f32.partialorder %v3839, 0.0
      %vm3872 = vcmp.ge.f32.partialorder %v3840, 0.0
      %vm3873 = vcmp.ge.f32.partialorder %v3841, 0.0
      %vm3874 = vcmp.ge.f32.partialorder %v3842, 0.0
      %vm3875 = vcmp.ge.f32.partialorder %v3843, 0.0
      %vm3876 = vcmp.ge.f32.partialorder %v3844, 0.0
      %vm3877 = vcmp.ge.f32.partialorder %v3845, 0.0
      %vm3878 = vcmp.ge.f32.partialorder %v3846, 0.0
      %vm3879 = vcmp.ge.f32.partialorder %v3847, 0.0
      %vm3880 = vcmp.ge.f32.partialorder %v3848, 0.0
      %vm3881 = vcmp.ge.f32.partialorder %v3849, 0.0
      %vm3882 = vcmp.ge.f32.partialorder %v3850, 0.0
      %vm3883 = vcmp.ge.f32.partialorder %v3851, 0.0
      %vm3884 = vcmp.ge.f32.partialorder %v3852, 0.0
      %vm3885 = vcmp.ge.f32.partialorder %v3853, 0.0
      %vm3886 = vcmp.ge.f32.partialorder %v3854, 0.0
      %vm3887 = vcmp.ge.f32.partialorder %v3855, 0.0
      %vm3888 = vcmp.ge.f32.partialorder %v3856, 0.0
      %vm3889 = vcmp.ge.f32.partialorder %v3857, 0.0
      %vm3890 = vcmp.ge.f32.partialorder %v3858, 0.0
      %vm3891 = vcmp.ge.f32.partialorder %v3859, 0.0
      %vm3892 = vcmp.ge.f32.partialorder %v3860, 0.0
      %v3893 = vmul.f32 %v3829, 0.1
      %v3894 = vmul.f32 %v3830, 0.1
      %v3895 = vmul.f32 %v3831, 0.1
      %v3896 = vmul.f32 %v3832, 0.1
      %v3897 = vmul.f32 %v3833, 0.1
      %v3898 = vmul.f32 %v3834, 0.1
      %v3899 = vmul.f32 %v3835, 0.1
      %v3900 = vmul.f32 %v3836, 0.1
      %v3901 = vmul.f32 %v3837, 0.1
      %v3902 = vmul.f32 %v3838, 0.1
      %v3903 = vmul.f32 %v3839, 0.1
      %v3904 = vmul.f32 %v3840, 0.1
      %v3905 = vmul.f32 %v3841, 0.1
      %v3906 = vmul.f32 %v3842, 0.1
      %v3907 = vmul.f32 %v3843, 0.1
      %v3908 = vmul.f32 %v3844, 0.1
      %v3909 = vmul.f32 %v3845, 0.1
      %v3910 = vmul.f32 %v3846, 0.1
      %v3911 = vmul.f32 %v3847, 0.1
      %v3912 = vmul.f32 %v3848, 0.1
      %v3913 = vmul.f32 %v3849, 0.1
      %v3914 = vmul.f32 %v3850, 0.1
      %v3915 = vmul.f32 %v3851, 0.1
      %v3916 = vmul.f32 %v3852, 0.1
      %v3917 = vmul.f32 %v3853, 0.1
      %v3918 = vmul.f32 %v3854, 0.1
      %v3919 = vmul.f32 %v3855, 0.1
      %v3920 = vmul.f32 %v3856, 0.1
      %v3921 = vmul.f32 %v3857, 0.1
      %v3922 = vmul.f32 %v3858, 0.1
      %v3923 = vmul.f32 %v3859, 0.1
      %v3924 = vmul.f32 %v3860, 0.1
      %v3925 = vsel %vm3861, %v3829, %v3893
      %v3926 = vsel %vm3862, %v3830, %v3894
      %v3927 = vsel %vm3863, %v3831, %v3895
      %v3928 = vsel %vm3864, %v3832, %v3896
      %v3929 = vsel %vm3865, %v3833, %v3897
      %v3930 = vsel %vm3866, %v3834, %v3898
      %v3931 = vsel %vm3867, %v3835, %v3899
      %v3932 = vsel %vm3868, %v3836, %v3900
      %v3933 = vsel %vm3869, %v3837, %v3901
      %v3934 = vsel %vm3870, %v3838, %v3902
      %v3935 = vsel %vm3871, %v3839, %v3903
      %v3936 = vsel %vm3872, %v3840, %v3904
      %v3937 = vsel %vm3873, %v3841, %v3905
      %v3938 = vsel %vm3874, %v3842, %v3906
      %v3939 = vsel %vm3875, %v3843, %v3907
      %v3940 = vsel %vm3876, %v3844, %v3908
      %v3941 = vsel %vm3877, %v3845, %v3909
      %v3942 = vsel %vm3878, %v3846, %v3910
      %v3943 = vsel %vm3879, %v3847, %v3911
      %v3944 = vsel %vm3880, %v3848, %v3912
      %v3945 = vsel %vm3881, %v3849, %v3913
      %v3946 = vsel %vm3882, %v3850, %v3914
      %v3947 = vsel %vm3883, %v3851, %v3915
      %v3948 = vsel %vm3884, %v3852, %v3916
      %v3949 = vsel %vm3885, %v3853, %v3917
      %v3950 = vsel %vm3886, %v3854, %v3918
      %v3951 = vsel %vm3887, %v3855, %v3919
      %v3952 = vsel %vm3888, %v3856, %v3920
      %v3953 = vsel %vm3889, %v3857, %v3921
      %v3954 = vsel %vm3890, %v3858, %v3922
      %v3955 = vsel %vm3891, %v3859, %v3923
      %v3956 = vsel %vm3892, %v3860, %v3924
      %v3957 = vpack.c.bf16 %v3925, %v3925
      %v3958 = vpack.c.bf16 %v3926, %v3926
      %v3959 = vpack.c.bf16 %v3927, %v3927
      %v3960 = vpack.c.bf16 %v3928, %v3928
      %v3961 = vpack.c.bf16 %v3929, %v3929
      %v3962 = vpack.c.bf16 %v3930, %v3930
      %v3963 = vpack.c.bf16 %v3931, %v3931
      %v3964 = vpack.c.bf16 %v3932, %v3932
      %v3965 = vpack.c.bf16 %v3933, %v3933
      %v3966 = vpack.c.bf16 %v3934, %v3934
      %v3967 = vpack.c.bf16 %v3935, %v3935
      %v3968 = vpack.c.bf16 %v3936, %v3936
      %v3969 = vpack.c.bf16 %v3937, %v3937
      %v3970 = vpack.c.bf16 %v3938, %v3938
      %v3971 = vpack.c.bf16 %v3939, %v3939
      %v3972 = vpack.c.bf16 %v3940, %v3940
      %v3973 = vpack.c.bf16 %v3941, %v3941
      %v3974 = vpack.c.bf16 %v3942, %v3942
      %v3975 = vpack.c.bf16 %v3943, %v3943
      %v3976 = vpack.c.bf16 %v3944, %v3944
      %v3977 = vpack.c.bf16 %v3945, %v3945
      %v3978 = vpack.c.bf16 %v3946, %v3946
      %v3979 = vpack.c.bf16 %v3947, %v3947
      %v3980 = vpack.c.bf16 %v3948, %v3948
      %v3981 = vpack.c.bf16 %v3949, %v3949
      %v3982 = vpack.c.bf16 %v3950, %v3950
      %v3983 = vpack.c.bf16 %v3951, %v3951
      %v3984 = vpack.c.bf16 %v3952, %v3952
      %v3985 = vpack.c.bf16 %v3953, %v3953
      %v3986 = vpack.c.bf16 %v3954, %v3954
      %v3987 = vpack.c.bf16 %v3955, %v3955
      %v3988 = vpack.c.bf16 %v3956, %v3956
      %3989 = vst [vmem:[%s221] sm:$0xf] %v3957
      %3990 = vst [vmem:[%s221 + $0x4] sm:$0xf] %v3958
      %3991 = vst [vmem:[%s221 + $0x8] sm:$0xf] %v3959
      %3992 = vst [vmem:[%s221 + $0xc] sm:$0xf] %v3960
      %3993 = vst [vmem:[%s221 + $0x10] sm:$0xf] %v3961
      %3994 = vst [vmem:[%s221 + $0x14] sm:$0xf] %v3962
      %3995 = vst [vmem:[%s221 + $0x18] sm:$0xf] %v3963
      %3996 = vst [vmem:[%s221 + $0x1c] sm:$0xf] %v3964
      %3997 = vst [vmem:[%s221 + $0x20] sm:$0xf] %v3965
      %3998 = vst [vmem:[%s221 + $0x24] sm:$0xf] %v3966
      %3999 = vst [vmem:[%s221 + $0x28] sm:$0xf] %v3967
      %4000 = vst [vmem:[%s221 + $0x2c] sm:$0xf] %v3968
      %4001 = vst [vmem:[%s221 + $0x30] sm:$0xf] %v3969
      %4002 = vst [vmem:[%s221 + $0x34] sm:$0xf] %v3970
      %4003 = vst [vmem:[%s221 + $0x38] sm:$0xf] %v3971
      %4004 = vst [vmem:[%s221 + $0x3c] sm:$0xf] %v3972
      %4005 = vst [vmem:[%s221 + $0x40] sm:$0xf] %v3973
      %4006 = vst [vmem:[%s221 + $0x44] sm:$0xf] %v3974
      %4007 = vst [vmem:[%s221 + $0x48] sm:$0xf] %v3975
      %4008 = vst [vmem:[%s221 + $0x4c] sm:$0xf] %v3976
      %4009 = vst [vmem:[%s221 + $0x50] sm:$0xf] %v3977
      %4010 = vst [vmem:[%s221 + $0x54] sm:$0xf] %v3978
      %4011 = vst [vmem:[%s221 + $0x58] sm:$0xf] %v3979
      %4012 = vst [vmem:[%s221 + $0x5c] sm:$0xf] %v3980
      %4013 = vst [vmem:[%s221 + $0x60] sm:$0xf] %v3981
      %4014 = vst [vmem:[%s221 + $0x64] sm:$0xf] %v3982
      %4015 = vst [vmem:[%s221 + $0x68] sm:$0xf] %v3983
      %4016 = vst [vmem:[%s221 + $0x6c] sm:$0xf] %v3984
      %4017 = vst [vmem:[%s221 + $0x70] sm:$0xf] %v3985
      %4018 = vst [vmem:[%s221 + $0x74] sm:$0xf] %v3986
      %4019 = vst [vmem:[%s221 + $0x78] sm:$0xf] %v3987
      %4020 = vst [vmem:[%s221 + $0x7c] sm:$0xf] %v3988
      %p4021 = scmp.lt.s32.totalorder %s19, 1
      %s4022 = scalar_select %p4021, %s19, 1
      %p4023 = scmp.lt.s32.totalorder %s18, 0
      %s4024 = scalar_select %p4023, %s18, 0
      %s4025 = smul.addr %s4022, 32
      %s4026 = sadd.s32 %s4024, %s4025
      %s4027 = smul.addr %s4026, 4
      %s4028 = scalar_lea.vmem %s3, %s4027
      // Predicated region
      $region33: #{convolutional_set_forward.6} parent=31 // pred_check
        %p4029 = pneg %p124
      $region34: #{convolutional_set_forward.6} parent=31 // pred_check_branch
        %4031 = sbr.rel (%p4029) target = $region36
      $region35: #{convolutional_set_forward.6} parent=31 // pred_region
        _
      $region36: #{convolutional_set_forward.6} parent=31 // pred_fallthru
        _
    $region32: #{convolutional_set_forward.6} parent=5 // pred_fallthru
      _
    %p4032 = scmp.le.s32.totalorder 2, %s9
    // Predicated region
    $region37: #{convolutional_set_forward.6} parent=5 // pred_check
      %p4033 = pneg %p4032
    $region38: #{convolutional_set_forward.6} parent=5 // pred_check_branch
      %4035 = sbr.rel (%p4033) target = $region40
    $region39: #{convolutional_set_forward.6} parent=5 // pred_region
      %s4036 = ssub.s32 %s9, 2
      // Predicated region
      $region41: #{convolutional_set_forward.6} parent=39 // pred_check
        %p4037 = pneg %p130
      $region42: #{convolutional_set_forward.6} parent=39 // pred_check_branch
        %4039 = sbr.rel (%p4037) target = $region44
      $region43: #{convolutional_set_forward.6} parent=39 // pred_region
        %p4040 = scmp.lt.s32.totalorder %s21, 1
        %s4041 = scalar_select %p4040, %s21, 1
        %p4042 = scmp.lt.s32.totalorder %s20, 0
        %s4043 = scalar_select %p4042, %s20, 0
        %s4044 = smul.addr %s4041, 32
        %s4045 = sadd.s32 %s4043, %s4044
        %s4046 = smul.addr %s4045, 4
        %s4047 = scalar_lea.vmem %s3, %s4046
      $region44: #{convolutional_set_forward.6} parent=39 // pred_fallthru
        _
    $region40: #{convolutional_set_forward.6} parent=5 // pred_fallthru
      _
  $region6: #{convolutional_set_forward.6} parent=0 // loop_footer
    %s13 = sadd.s32 1, %s9
  $region7: #{convolutional_set_forward.6} parent=0 // loop_footer_branch
    %8 = sbr.rel target = $region3
  $region8: #{convolutional_set_forward.6} parent=0 // loop_exit
    _

</llo_original>
